<compile_context>
chip_gen: v7x
topology: tpu7x:2x2x1
jax: 0.10.0
libtpu: 0.0.40
codegen_flags: <defaults>
</compile_context>

<pallas_src>
import jax
import jax.numpy as jnp
from jax import lax
from jax.experimental import pallas as pl
from jax.experimental.pallas import tpu as pltpu


def _round_up(x, m):
    return ((x + m - 1) // m) * m


def _out_hw(h):
    # 5x5 conv, stride 2, pad 2
    return (h - 1) // 2 + 1


# ---------------------------------------------------------------------------
# Pallas kernel 1: channel-major conv matmul   out = relu(W_r @ A^T + b)
#   a_ref : (K, tm)    bf16   transposed im2col patches (lanes = spatial)
#   w_ref : (Cout, K)  bf16
#   b_ref : (Cout, 1)  f32
#   o_ref : (Cout, tm) bf16   lane-dense store, directly channel-major
# ---------------------------------------------------------------------------
def _conv_mm_kernel(a_ref, w_ref, b_ref, o_ref):
    acc = jnp.dot(w_ref[...], a_ref[...], preferred_element_type=jnp.float32)
    acc = jnp.maximum(acc + b_ref[...], 0.0)
    o_ref[...] = acc.astype(o_ref.dtype)


def conv_matmul(a_t, w_r, bias, *, tm=1024):
    """a_t: (B, K, M) bf16, w_r: (Cout, K) bf16, bias: (Cout,) f32.

    Returns (B, Cout, M) bf16 == relu(conv) in NCDHW channel-major order, so
    the module's Flatten/Unflatten steps become pure reshapes (no transposes).
    """
    B, K, M = a_t.shape
    Cout = w_r.shape[0]
    tm_eff = min(tm, _round_up(M, 128))
    Mp = _round_up(M, tm_eff)
    if Mp != M:
        a_t = jnp.pad(a_t, ((0, 0), (0, 0), (0, Mp - M)))
    b2 = bias.reshape(Cout, 1).astype(jnp.float32)
    out = pl.pallas_call(
        _conv_mm_kernel,
        out_shape=jax.ShapeDtypeStruct((B, Cout, Mp), jnp.bfloat16),
        grid=(B, Mp // tm_eff),
        in_specs=[
            pl.BlockSpec((None, K, tm_eff), lambda b, m: (b, 0, m)),
            pl.BlockSpec((Cout, K), lambda b, m: (0, 0)),
            pl.BlockSpec((Cout, 1), lambda b, m: (0, 0)),
        ],
        out_specs=pl.BlockSpec((None, Cout, tm_eff), lambda b, m: (b, 0, m)),
        compiler_params=pltpu.CompilerParams(
            dimension_semantics=("parallel", "parallel"),
            vmem_limit_bytes=32 * 1024 * 1024),
    )(a_t, w_r, b2)
    if Mp != M:
        out = out[:, :, :M]
    return out


# ---------------------------------------------------------------------------
# Pallas kernel 2: fused FC head (K-tiled, f32 VMEM accumulator)
#   log_softmax( relu(x @ W1 + b1) @ W2 + b2 )
# Padded FC2 columns carry bias -1e30 so the 128-lane log_softmax ignores them.
# ---------------------------------------------------------------------------
def _fc_head_kernel(x_ref, w1_ref, b1_ref, w2_ref, b2_ref, o_ref, acc_ref):
    k = pl.program_id(0)

    @pl.when(k == 0)
    def _():
        acc_ref[...] = jnp.zeros_like(acc_ref)

    acc_ref[...] += jnp.dot(x_ref[...], w1_ref[...],
                            preferred_element_type=jnp.float32)

    @pl.when(k == pl.num_programs(0) - 1)
    def _():
        h = jnp.maximum(acc_ref[...] + b1_ref[...], 0.0)          # (Bp, 512) f32
        logits = jnp.dot(h, w2_ref[...],
                         preferred_element_type=jnp.float32) + b2_ref[...]
        m = jnp.max(logits, axis=-1, keepdims=True)
        lse = m + jnp.log(jnp.sum(jnp.exp(logits - m), axis=-1, keepdims=True))
        o_ref[...] = (logits - lse).astype(o_ref.dtype)


def fc_head(x, w1t, b1p, w2p, b2p, *, tk=512):
    """x: (N, K) -> (N, 4) log-probs. w1t: (Kp, 512) bf16 pre-transposed/padded."""
    N, K = x.shape
    Kp = w1t.shape[0]
    Bp = _round_up(max(N, 1), 8)
    xp = jnp.pad(x.astype(jnp.bfloat16), ((0, Bp - N), (0, Kp - K)))
    out = pl.pallas_call(
        _fc_head_kernel,
        out_shape=jax.ShapeDtypeStruct((Bp, 128), jnp.float32),
        grid=(Kp // tk,),
        in_specs=[
            pl.BlockSpec((Bp, tk), lambda k: (0, k)),
            pl.BlockSpec((tk, 512), lambda k: (k, 0)),
            pl.BlockSpec((1, 512), lambda k: (0, 0)),
            pl.BlockSpec((512, 128), lambda k: (0, 0)),
            pl.BlockSpec((1, 128), lambda k: (0, 0)),
        ],
        out_specs=pl.BlockSpec((Bp, 128), lambda k: (0, 0)),
        scratch_shapes=[pltpu.VMEM((Bp, 512), jnp.float32)],
        compiler_params=pltpu.CompilerParams(
            dimension_semantics=("arbitrary",),
            vmem_limit_bytes=32 * 1024 * 1024),
    )(xp, w1t, b1p, w2p, b2p)
    return out[:N, :4]


# ---------------------------------------------------------------------------
# im2col glue (XLA slices) — emits the TRANSPOSED patch matrix (B, K, M) bf16
# so the Pallas matmul writes channel-major output directly (K order matches
# the PyTorch weight.reshape(Cout, -1) flattening order).
# ---------------------------------------------------------------------------
def im2col_hw_s2p2k5_T(x, H_out, W_out):
    """x:(B,C,D,H,W); 5x5 conv over (H,W), stride 2, pad 2 -> (B, C*25, D*Ho*Wo)."""
    B, C, D = x.shape[0], x.shape[1], x.shape[2]
    xp = jnp.pad(x, ((0, 0), (0, 0), (0, 0), (2, 2), (2, 2)))
    cols = []
    for kh in range(5):
        for kw in range(5):
            cols.append(xp[:, :, :,
                           kh:kh + 2 * (H_out - 1) + 1:2,
                           kw:kw + 2 * (W_out - 1) + 1:2])
    pats = jnp.stack(cols, axis=2)           # (B, C, 25, D, Ho, Wo), K=(C,kh,kw)
    return pats.reshape(B, C * 25, D * H_out * W_out).astype(jnp.bfloat16)


def im2col_dd_valid_T(x, k1, k2, Ko1, Ko2):
    """x:(B,C,D1,D2,L); (k1,k2,1) valid conv over (D1,D2) -> (B, C*k1*k2, Ko1*Ko2*L)."""
    B, C = x.shape[0], x.shape[1]
    L = x.shape[4]
    cols = []
    for di in range(k1):
        for dj in range(k2):
            cols.append(x[:, :, di:di + Ko1, dj:dj + Ko2, :])
    pats = jnp.stack(cols, axis=2)           # (B, C, k1*k2, Ko1, Ko2, L)
    return pats.reshape(B, C * k1 * k2, Ko1 * Ko2 * L).astype(jnp.bfloat16)


# ---------------------------------------------------------------------------
# One-time parameter preparation (PyTorch layout -> kernel-friendly layout)
# ---------------------------------------------------------------------------
def prepare_params(p, H0, W0):
    H1, W1 = _out_hw(H0), _out_hw(W0)
    H2, W2 = _out_hw(H1), _out_hw(W1)
    K_fc = 32 * H2 * W2
    Kp = _round_up(K_fc, 512)
    prep = {
        'w1': p['w1'].reshape(16, -1).astype(jnp.bfloat16),   # (16, 75)
        'b1': p['b1'].astype(jnp.float32),
        'w2': p['w2'].reshape(32, -1).astype(jnp.bfloat16),   # (32, 400)
        'b2': p['b2'].astype(jnp.float32),
        'w3': p['w3'].reshape(32, -1).astype(jnp.bfloat16),   # (32, 800)
        'b3': p['b3'].astype(jnp.float32),
        'w4': p['w4'].reshape(32, -1).astype(jnp.bfloat16),   # (32, 512)
        'b4': p['b4'].astype(jnp.float32),
    }
    # FC1: (500, K_fc) -> (Kp, 512) bf16, zero-padded (K tiled in the kernel).
    wf1t = jnp.zeros((Kp, 512), jnp.float32).at[:K_fc, :500].set(p['wf1'].T)
    prep['wf1t'] = wf1t.astype(jnp.bfloat16)
    prep['bf1p'] = jnp.zeros((1, 512), jnp.float32).at[0, :500].set(p['bf1'])
    # FC2: (4, 500) -> (512, 128) f32; padded logit lanes get bias -1e30 so the
    # fused log_softmax over 128 lanes ignores them.
    prep['wf2p'] = jnp.zeros((512, 128), jnp.float32).at[:500, :4].set(p['wf2'].T)
    prep['bf2p'] = jnp.full((1, 128), -1e30, jnp.float32).at[0, :4].set(p['bf2'])
    return prep


# ---------------------------------------------------------------------------
# Forward pass (Pallas path) — mirrors the nn.Sequential exactly
# ---------------------------------------------------------------------------
def lfi_forward(x, prep, H0, W0):
    N = x.shape[0]
    H1, W1 = _out_hw(H0), _out_hw(W0)
    H2, W2 = _out_hw(H1), _out_hw(W1)
    L1, L2 = H1 * W1, H2 * W2

    # Flatten -> Unflatten(1, [3, 8*8, H0, W0])
    y = x.reshape(N, 3, 64, H0, W0)

    # Conv3d(3->16, k=(1,5,5), pad=(0,2,2), stride=(1,2,2)) + ReLU
    a = im2col_hw_s2p2k5_T(y, H1, W1)                     # (N, 75, 64*L1)
    y = conv_matmul(a, prep['w1'], prep['b1'])            # (N, 16, 64*L1)
    # Flatten -> Unflatten(1, [16, 8, 8, H1*W1])   (pure reshape)
    y = y.reshape(N, 16, 8, 8, L1)

    # Conv3d(16->32, k=(5,5,1)) + ReLU
    a = im2col_dd_valid_T(y, 5, 5, 4, 4)                  # (N, 400, 16*L1)
    y = conv_matmul(a, prep['w2'], prep['b2'])            # (N, 32, 16*L1)
    # Flatten -> Unflatten(1, [32, 4*4, H1, W1])
    y = y.reshape(N, 32, 16, H1, W1)

    # Conv3d(32->32, k=(1,5,5), pad=(0,2,2), stride=(1,2,2)) + ReLU
    a = im2col_hw_s2p2k5_T(y, H2, W2)                     # (N, 800, 16*L2)
    y = conv_matmul(a, prep['w3'], prep['b3'])            # (N, 32, 16*L2)
    # Flatten -> Unflatten(1, [32, 4, 4, H2*W2])
    y = y.reshape(N, 32, 4, 4, L2)

    # Conv3d(32->32, k=(4,4,1)) + ReLU
    a = im2col_dd_valid_T(y, 4, 4, 1, 1)                  # (N, 512, L2)
    y = conv_matmul(a, prep['w4'], prep['b4'])            # (N, 32, L2)

    # Flatten -> Linear(32*L2 -> 500) -> ReLU -> Linear(500 -> 4) -> LogSoftmax
    return fc_head(y.reshape(N, 32 * L2), prep['wf1t'], prep['bf1p'],
                   prep['wf2p'], prep['bf2p'])


# ---------------------------------------------------------------------------
# Pure-JAX reference (lax.conv, f32) used only as a correctness check
# ---------------------------------------------------------------------------
def lfi_forward_ref(x, p, H0, W0):
    N = x.shape[0]
    H1, W1 = _out_hw(H0), _out_hw(W0)
    H2, W2 = _out_hw(H1), _out_hw(W1)

    def conv3d(v, w, b, stride, pad):
        out = lax.conv_general_dilated(
            v, w, window_strides=stride,
            padding=[(q, q) for q in pad],
            dimension_numbers=('NCDHW', 'OIDHW', 'NCDHW'))
        return out + b.reshape(1, -1, 1, 1, 1)

    y = x.reshape(N, 3, 64, H0, W0)
    y = jax.nn.relu(conv3d(y, p['w1'], p['b1'], (1, 2, 2), (0, 2, 2)))
    y = y.reshape(N, 16, 8, 8, H1 * W1)
    y = jax.nn.relu(conv3d(y, p['w2'], p['b2'], (1, 1, 1), (0, 0, 0)))
    y = y.reshape(N, 32, 16, H1, W1)
    y = jax.nn.relu(conv3d(y, p['w3'], p['b3'], (1, 2, 2), (0, 2, 2)))
    y = y.reshape(N, 32, 4, 4, H2 * W2)
    y = jax.nn.relu(conv3d(y, p['w4'], p['b4'], (1, 1, 1), (0, 0, 0)))
    y = y.reshape(N, 32 * H2 * W2)
    y = jax.nn.relu(y @ p['wf1'].T + p['bf1'])
    y = y @ p['wf2'].T + p['bf2']
    return jax.nn.log_softmax(y, axis=1)


def init_params(key, fc_in):
    ks = jax.random.split(key, 12)
    s = 0.05
    p = {}
    p['w1'] = jax.random.normal(ks[0], (16, 3, 1, 5, 5), jnp.float32) * s
    p['b1'] = jax.random.normal(ks[1], (16,), jnp.float32) * s
    p['w2'] = jax.random.normal(ks[2], (32, 16, 5, 5, 1), jnp.float32) * s
    p['b2'] = jax.random.normal(ks[3], (32,), jnp.float32) * s
    p['w3'] = jax.random.normal(ks[4], (32, 32, 1, 5, 5), jnp.float32) * s
    p['b3'] = jax.random.normal(ks[5], (32,), jnp.float32) * s
    p['w4'] = jax.random.normal(ks[6], (32, 32, 4, 4, 1), jnp.float32) * s
    p['b4'] = jax.random.normal(ks[7], (32,), jnp.float32) * s
    p['wf1'] = jax.random.normal(ks[8], (500, fc_in), jnp.float32) * s
    p['bf1'] = jax.random.normal(ks[9], (500,), jnp.float32) * s
    p['wf2'] = jax.random.normal(ks[10], (4, 500), jnp.float32) * s
    p['bf2'] = jax.random.normal(ks[11], (4,), jnp.float32) * s
    return p


if __name__ == "__main__":
    # Small test resolution; the original module uses H0=376, W0=541.
    H0, W0 = 16, 16
    H1, W1 = _out_hw(H0), _out_hw(W0)
    H2, W2 = _out_hw(H1), _out_hw(W1)
    N = 2

    key = jax.random.PRNGKey(0)
    kx, kp = jax.random.split(key)
    params = init_params(kp, 32 * H2 * W2)
    x = jax.random.normal(kx, (N, 3, 64, H0, W0), jnp.float32)

    prep = prepare_params(params, H0, W0)
    fwd = jax.jit(lambda xx, pp: lfi_forward(xx, pp, H0, W0))
    out = jax.block_until_ready(fwd(x, prep))
    assert out.shape == (N, 4)

    ref = jax.block_until_ready(lfi_forward_ref(x, params, H0, W0))
    assert bool(jnp.allclose(out, ref, rtol=5e-2, atol=5e-2)), \
        float(jnp.max(jnp.abs(out - ref)))

    print("KERNEL_OK")
</pallas_src>

<mosaic_0001>
module attributes {stable_mosaic.version = 11 : i64} {
  func.func @_conv_mm_kernel(%arg0: i32, %arg1: i32, %arg2: memref<1x75x1024xbf16, #tpu.memory_space<vmem>>, %arg3: memref<16x75xbf16, #tpu.memory_space<vmem>>, %arg4: memref<16x1xf32, #tpu.memory_space<vmem>>, %arg5: memref<1x16x1024xbf16, #tpu.memory_space<vmem>>) attributes {dimension_semantics = [#tpu.dimension_semantics<parallel>, #tpu.dimension_semantics<parallel>], iteration_bounds = array<i64: 2, 4>, scalar_prefetch = 0 : i64, scratch_operands = 0 : i64, tpu.core_type = #tpu.core_type<tc>, window_params = [{transform_indices = @transform_0, window_bounds = array<i64: 1, 75, 1024>}, {pipeline_mode = #tpu.pipeline_mode<synchronous>, transform_indices = @transform_1, window_bounds = array<i64: 16, 75>}, {pipeline_mode = #tpu.pipeline_mode<synchronous>, transform_indices = @transform_2, window_bounds = array<i64: 16, 1>}, {transform_indices = @transform_3, window_bounds = array<i64: 1, 16, 1024>}]} {
    %c0 = arith.constant 0 : index
    %c0_0 = arith.constant 0 : index
    %0 = vector.load %arg3[%c0, %c0_0] : memref<16x75xbf16, #tpu.memory_space<vmem>>, vector<16x75xbf16>
    %c0_1 = arith.constant 0 : index
    %c0_2 = arith.constant 0 : index
    %c0_3 = arith.constant 0 : index
    %1 = vector.load %arg2[%c0_1, %c0_2, %c0_3] : memref<1x75x1024xbf16, #tpu.memory_space<vmem>>, vector<1x75x1024xbf16>
    %2 = vector.shape_cast %1 : vector<1x75x1024xbf16> to vector<75x1024xbf16>
    %cst = arith.constant dense<0.000000e+00> : vector<16x1024xf32>
    %3 = tpu.matmul %0, %2, %cst {dimension_numbers = #tpu.dot_dimension_numbers<[1], [0], [0], [1], [0, 0, 1, 1], [], []>} : vector<16x75xbf16>, vector<75x1024xbf16>, vector<16x1024xf32> -> vector<16x1024xf32>
    %c0_4 = arith.constant 0 : index
    %c0_5 = arith.constant 0 : index
    %4 = vector.load %arg4[%c0_4, %c0_5] : memref<16x1xf32, #tpu.memory_space<vmem>>, vector<16x1xf32>
    %5 = vector.broadcast %4 : vector<16x1xf32> to vector<16x1024xf32>
    %6 = arith.addf %3, %5 : vector<16x1024xf32>
    %cst_6 = arith.constant 0.000000e+00 : f32
    %7 = vector.broadcast %cst_6 : f32 to vector<16x1024xf32>
    %8 = arith.maximumf %6, %7 : vector<16x1024xf32>
    %9 = arith.truncf %8 : vector<16x1024xf32> to vector<16x1024xbf16>
    %c0_7 = arith.constant 0 : index
    %c0_8 = arith.constant 0 : index
    %c0_9 = arith.constant 0 : index
    %10 = vector.load %arg5[%c0_7, %c0_8, %c0_9] : memref<1x16x1024xbf16, #tpu.memory_space<vmem>>, vector<1x16x1024xbf16>
    %11 = vector.shape_cast %10 : vector<1x16x1024xbf16> to vector<16x1024xbf16>
    %12 = vector.shape_cast %9 : vector<16x1024xbf16> to vector<1x16x1024xbf16>
    tpu.vector_store %arg5[%c0_7, %c0_8, %c0_9], %12 {strides = array<i32>} : memref<1x16x1024xbf16, #tpu.memory_space<vmem>>, vector<1x16x1024xbf16>,
    return
  }
  func.func @transform_0(%arg0: i32, %arg1: i32) -> (i32, i32, i32) {
    %c0_i32 = arith.constant 0 : i32
    %c0_i32_0 = arith.constant 0 : i32
    return %arg0, %c0_i32, %arg1 : i32, i32, i32
  }
  func.func @transform_1(%arg0: i32, %arg1: i32) -> (i32, i32) {
    %c0_i32 = arith.constant 0 : i32
    %c0_i32_0 = arith.constant 0 : i32
    %c0_i32_1 = arith.constant 0 : i32
    return %c0_i32, %c0_i32_0 : i32, i32
  }
  func.func @transform_2(%arg0: i32, %arg1: i32) -> (i32, i32) {
    %c0_i32 = arith.constant 0 : i32
    %c0_i32_0 = arith.constant 0 : i32
    %c0_i32_1 = arith.constant 0 : i32
    return %c0_i32, %c0_i32_0 : i32, i32
  }
  func.func @transform_3(%arg0: i32, %arg1: i32) -> (i32, i32, i32) {
    %c0_i32 = arith.constant 0 : i32
    %c0_i32_0 = arith.constant 0 : i32
    return %arg0, %c0_i32, %arg1 : i32, i32, i32
  }
}

module attributes {stable_mosaic.version = 11 : i64} {
  func.func @_conv_mm_kernel(%arg0: i32, %arg1: i32, %arg2: memref<1x400x1024xbf16, #tpu.memory_space<vmem>>, %arg3: memref<32x400xbf16, #tpu.memory_space<vmem>>, %arg4: memref<32x1xf32, #tpu.memory_space<vmem>>, %arg5: memref<1x32x1024xbf16, #tpu.memory_space<vmem>>) attributes {dimension_semantics = [#tpu.dimension_semantics<parallel>, #tpu.dimension_semantics<parallel>], iteration_bounds = array<i64: 2, 1>, scalar_prefetch = 0 : i64, scratch_operands = 0 : i64, tpu.core_type = #tpu.core_type<tc>, window_params = [{transform_indices = @transform_0, window_bounds = array<i64: 1, 400, 1024>}, {pipeline_mode = #tpu.pipeline_mode<synchronous>, transform_indices = @transform_1, window_bounds = array<i64: 32, 400>}, {pipeline_mode = #tpu.pipeline_mode<synchronous>, transform_indices = @transform_2, window_bounds = array<i64: 32, 1>}, {transform_indices = @transform_3, window_bounds = array<i64: 1, 32, 1024>}]} {
    %c0 = arith.constant 0 : index
    %c0_0 = arith.constant 0 : index
    %0 = vector.load %arg3[%c0, %c0_0] : memref<32x400xbf16, #tpu.memory_space<vmem>>, vector<32x400xbf16>
    %c0_1 = arith.constant 0 : index
    %c0_2 = arith.constant 0 : index
    %c0_3 = arith.constant 0 : index
    %1 = vector.load %arg2[%c0_1, %c0_2, %c0_3] : memref<1x400x1024xbf16, #tpu.memory_space<vmem>>, vector<1x400x1024xbf16>
    %2 = vector.shape_cast %1 : vector<1x400x1024xbf16> to vector<400x1024xbf16>
    %cst = arith.constant dense<0.000000e+00> : vector<32x1024xf32>
    %3 = tpu.matmul %0, %2, %cst {dimension_numbers = #tpu.dot_dimension_numbers<[1], [0], [0], [1], [0, 0, 1, 1], [], []>} : vector<32x400xbf16>, vector<400x1024xbf16>, vector<32x1024xf32> -> vector<32x1024xf32>
    %c0_4 = arith.constant 0 : index
    %c0_5 = arith.constant 0 : index
    %4 = vector.load %arg4[%c0_4, %c0_5] : memref<32x1xf32, #tpu.memory_space<vmem>>, vector<32x1xf32>
    %5 = vector.broadcast %4 : vector<32x1xf32> to vector<32x1024xf32>
    %6 = arith.addf %3, %5 : vector<32x1024xf32>
    %cst_6 = arith.constant 0.000000e+00 : f32
    %7 = vector.broadcast %cst_6 : f32 to vector<32x1024xf32>
    %8 = arith.maximumf %6, %7 : vector<32x1024xf32>
    %9 = arith.truncf %8 : vector<32x1024xf32> to vector<32x1024xbf16>
    %c0_7 = arith.constant 0 : index
    %c0_8 = arith.constant 0 : index
    %c0_9 = arith.constant 0 : index
    %10 = vector.load %arg5[%c0_7, %c0_8, %c0_9] : memref<1x32x1024xbf16, #tpu.memory_space<vmem>>, vector<1x32x1024xbf16>
    %11 = vector.shape_cast %10 : vector<1x32x1024xbf16> to vector<32x1024xbf16>
    %12 = vector.shape_cast %9 : vector<32x1024xbf16> to vector<1x32x1024xbf16>
    tpu.vector_store %arg5[%c0_7, %c0_8, %c0_9], %12 {strides = array<i32>} : memref<1x32x1024xbf16, #tpu.memory_space<vmem>>, vector<1x32x1024xbf16>,
    return
  }
  func.func @transform_0(%arg0: i32, %arg1: i32) -> (i32, i32, i32) {
    %c0_i32 = arith.constant 0 : i32
    %c0_i32_0 = arith.constant 0 : i32
    return %arg0, %c0_i32, %arg1 : i32, i32, i32
  }
  func.func @transform_1(%arg0: i32, %arg1: i32) -> (i32, i32) {
    %c0_i32 = arith.constant 0 : i32
    %c0_i32_0 = arith.constant 0 : i32
    %c0_i32_1 = arith.constant 0 : i32
    return %c0_i32, %c0_i32_0 : i32, i32
  }
  func.func @transform_2(%arg0: i32, %arg1: i32) -> (i32, i32) {
    %c0_i32 = arith.constant 0 : i32
    %c0_i32_0 = arith.constant 0 : i32
    %c0_i32_1 = arith.constant 0 : i32
    return %c0_i32, %c0_i32_0 : i32, i32
  }
  func.func @transform_3(%arg0: i32, %arg1: i32) -> (i32, i32, i32) {
    %c0_i32 = arith.constant 0 : i32
    %c0_i32_0 = arith.constant 0 : i32
    return %arg0, %c0_i32, %arg1 : i32, i32, i32
  }
}

module attributes {stable_mosaic.version = 11 : i64} {
  func.func @_conv_mm_kernel(%arg0: i32, %arg1: i32, %arg2: memref<1x800x256xbf16, #tpu.memory_space<vmem>>, %arg3: memref<32x800xbf16, #tpu.memory_space<vmem>>, %arg4: memref<32x1xf32, #tpu.memory_space<vmem>>, %arg5: memref<1x32x256xbf16, #tpu.memory_space<vmem>>) attributes {dimension_semantics = [#tpu.dimension_semantics<parallel>, #tpu.dimension_semantics<parallel>], iteration_bounds = array<i64: 2, 1>, scalar_prefetch = 0 : i64, scratch_operands = 0 : i64, tpu.core_type = #tpu.core_type<tc>, window_params = [{transform_indices = @transform_0, window_bounds = array<i64: 1, 800, 256>}, {pipeline_mode = #tpu.pipeline_mode<synchronous>, transform_indices = @transform_1, window_bounds = array<i64: 32, 800>}, {pipeline_mode = #tpu.pipeline_mode<synchronous>, transform_indices = @transform_2, window_bounds = array<i64: 32, 1>}, {transform_indices = @transform_3, window_bounds = array<i64: 1, 32, 256>}]} {
    %c0 = arith.constant 0 : index
    %c0_0 = arith.constant 0 : index
    %0 = vector.load %arg3[%c0, %c0_0] : memref<32x800xbf16, #tpu.memory_space<vmem>>, vector<32x800xbf16>
    %c0_1 = arith.constant 0 : index
    %c0_2 = arith.constant 0 : index
    %c0_3 = arith.constant 0 : index
    %1 = vector.load %arg2[%c0_1, %c0_2, %c0_3] : memref<1x800x256xbf16, #tpu.memory_space<vmem>>, vector<1x800x256xbf16>
    %2 = vector.shape_cast %1 : vector<1x800x256xbf16> to vector<800x256xbf16>
    %cst = arith.constant dense<0.000000e+00> : vector<32x256xf32>
    %3 = tpu.matmul %0, %2, %cst {dimension_numbers = #tpu.dot_dimension_numbers<[1], [0], [0], [1], [0, 0, 1, 1], [], []>} : vector<32x800xbf16>, vector<800x256xbf16>, vector<32x256xf32> -> vector<32x256xf32>
    %c0_4 = arith.constant 0 : index
    %c0_5 = arith.constant 0 : index
    %4 = vector.load %arg4[%c0_4, %c0_5] : memref<32x1xf32, #tpu.memory_space<vmem>>, vector<32x1xf32>
    %5 = vector.broadcast %4 : vector<32x1xf32> to vector<32x256xf32>
    %6 = arith.addf %3, %5 : vector<32x256xf32>
    %cst_6 = arith.constant 0.000000e+00 : f32
    %7 = vector.broadcast %cst_6 : f32 to vector<32x256xf32>
    %8 = arith.maximumf %6, %7 : vector<32x256xf32>
    %9 = arith.truncf %8 : vector<32x256xf32> to vector<32x256xbf16>
    %c0_7 = arith.constant 0 : index
    %c0_8 = arith.constant 0 : index
    %c0_9 = arith.constant 0 : index
    %10 = vector.load %arg5[%c0_7, %c0_8, %c0_9] : memref<1x32x256xbf16, #tpu.memory_space<vmem>>, vector<1x32x256xbf16>
    %11 = vector.shape_cast %10 : vector<1x32x256xbf16> to vector<32x256xbf16>
    %12 = vector.shape_cast %9 : vector<32x256xbf16> to vector<1x32x256xbf16>
    tpu.vector_store %arg5[%c0_7, %c0_8, %c0_9], %12 {strides = array<i32>} : memref<1x32x256xbf16, #tpu.memory_space<vmem>>, vector<1x32x256xbf16>,
    return
  }
  func.func @transform_0(%arg0: i32, %arg1: i32) -> (i32, i32, i32) {
    %c0_i32 = arith.constant 0 : i32
    %c0_i32_0 = arith.constant 0 : i32
    return %arg0, %c0_i32, %arg1 : i32, i32, i32
  }
  func.func @transform_1(%arg0: i32, %arg1: i32) -> (i32, i32) {
    %c0_i32 = arith.constant 0 : i32
    %c0_i32_0 = arith.constant 0 : i32
    %c0_i32_1 = arith.constant 0 : i32
    return %c0_i32, %c0_i32_0 : i32, i32
  }
  func.func @transform_2(%arg0: i32, %arg1: i32) -> (i32, i32) {
    %c0_i32 = arith.constant 0 : i32
    %c0_i32_0 = arith.constant 0 : i32
    %c0_i32_1 = arith.constant 0 : i32
    return %c0_i32, %c0_i32_0 : i32, i32
  }
  func.func @transform_3(%arg0: i32, %arg1: i32) -> (i32, i32, i32) {
    %c0_i32 = arith.constant 0 : i32
    %c0_i32_0 = arith.constant 0 : i32
    return %arg0, %c0_i32, %arg1 : i32, i32, i32
  }
}

module attributes {stable_mosaic.version = 11 : i64} {
  func.func @_conv_mm_kernel(%arg0: i32, %arg1: i32, %arg2: memref<1x512x128xbf16, #tpu.memory_space<vmem>>, %arg3: memref<32x512xbf16, #tpu.memory_space<vmem>>, %arg4: memref<32x1xf32, #tpu.memory_space<vmem>>, %arg5: memref<1x32x128xbf16, #tpu.memory_space<vmem>>) attributes {dimension_semantics = [#tpu.dimension_semantics<parallel>, #tpu.dimension_semantics<parallel>], iteration_bounds = array<i64: 2, 1>, scalar_prefetch = 0 : i64, scratch_operands = 0 : i64, tpu.core_type = #tpu.core_type<tc>, window_params = [{transform_indices = @transform_0, window_bounds = array<i64: 1, 512, 128>}, {pipeline_mode = #tpu.pipeline_mode<synchronous>, transform_indices = @transform_1, window_bounds = array<i64: 32, 512>}, {pipeline_mode = #tpu.pipeline_mode<synchronous>, transform_indices = @transform_2, window_bounds = array<i64: 32, 1>}, {transform_indices = @transform_3, window_bounds = array<i64: 1, 32, 128>}]} {
    %c0 = arith.constant 0 : index
    %c0_0 = arith.constant 0 : index
    %0 = vector.load %arg3[%c0, %c0_0] : memref<32x512xbf16, #tpu.memory_space<vmem>>, vector<32x512xbf16>
    %c0_1 = arith.constant 0 : index
    %c0_2 = arith.constant 0 : index
    %c0_3 = arith.constant 0 : index
    %1 = vector.load %arg2[%c0_1, %c0_2, %c0_3] : memref<1x512x128xbf16, #tpu.memory_space<vmem>>, vector<1x512x128xbf16>
    %2 = vector.shape_cast %1 : vector<1x512x128xbf16> to vector<512x128xbf16>
    %cst = arith.constant dense<0.000000e+00> : vector<32x128xf32>
    %3 = tpu.matmul %0, %2, %cst {dimension_numbers = #tpu.dot_dimension_numbers<[1], [0], [0], [1], [0, 0, 1, 1], [], []>} : vector<32x512xbf16>, vector<512x128xbf16>, vector<32x128xf32> -> vector<32x128xf32>
    %c0_4 = arith.constant 0 : index
    %c0_5 = arith.constant 0 : index
    %4 = vector.load %arg4[%c0_4, %c0_5] : memref<32x1xf32, #tpu.memory_space<vmem>>, vector<32x1xf32>
    %5 = vector.broadcast %4 : vector<32x1xf32> to vector<32x128xf32>
    %6 = arith.addf %3, %5 : vector<32x128xf32>
    %cst_6 = arith.constant 0.000000e+00 : f32
    %7 = vector.broadcast %cst_6 : f32 to vector<32x128xf32>
    %8 = arith.maximumf %6, %7 : vector<32x128xf32>
    %9 = arith.truncf %8 : vector<32x128xf32> to vector<32x128xbf16>
    %c0_7 = arith.constant 0 : index
    %c0_8 = arith.constant 0 : index
    %c0_9 = arith.constant 0 : index
    %10 = vector.load %arg5[%c0_7, %c0_8, %c0_9] : memref<1x32x128xbf16, #tpu.memory_space<vmem>>, vector<1x32x128xbf16>
    %11 = vector.shape_cast %10 : vector<1x32x128xbf16> to vector<32x128xbf16>
    %12 = vector.shape_cast %9 : vector<32x128xbf16> to vector<1x32x128xbf16>
    tpu.vector_store %arg5[%c0_7, %c0_8, %c0_9], %12 {strides = array<i32>} : memref<1x32x128xbf16, #tpu.memory_space<vmem>>, vector<1x32x128xbf16>,
    return
  }
  func.func @transform_0(%arg0: i32, %arg1: i32) -> (i32, i32, i32) {
    %c0_i32 = arith.constant 0 : i32
    %c0_i32_0 = arith.constant 0 : i32
    return %arg0, %c0_i32, %arg1 : i32, i32, i32
  }
  func.func @transform_1(%arg0: i32, %arg1: i32) -> (i32, i32) {
    %c0_i32 = arith.constant 0 : i32
    %c0_i32_0 = arith.constant 0 : i32
    %c0_i32_1 = arith.constant 0 : i32
    return %c0_i32, %c0_i32_0 : i32, i32
  }
  func.func @transform_2(%arg0: i32, %arg1: i32) -> (i32, i32) {
    %c0_i32 = arith.constant 0 : i32
    %c0_i32_0 = arith.constant 0 : i32
    %c0_i32_1 = arith.constant 0 : i32
    return %c0_i32, %c0_i32_0 : i32, i32
  }
  func.func @transform_3(%arg0: i32, %arg1: i32) -> (i32, i32, i32) {
    %c0_i32 = arith.constant 0 : i32
    %c0_i32_0 = arith.constant 0 : i32
    return %arg0, %c0_i32, %arg1 : i32, i32, i32
  }
}

module attributes {stable_mosaic.version = 11 : i64} {
  func.func @_fc_head_kernel(%arg0: i32, %arg1: memref<8x512xbf16, #tpu.memory_space<vmem>>, %arg2: memref<512x512xbf16, #tpu.memory_space<vmem>>, %arg3: memref<1x512xf32, #tpu.memory_space<vmem>>, %arg4: memref<512x128xf32, #tpu.memory_space<vmem>>, %arg5: memref<1x128xf32, #tpu.memory_space<vmem>>, %arg6: memref<8x128xf32, #tpu.memory_space<vmem>>, %arg7: memref<8x512xf32, #tpu.memory_space<vmem>>) attributes {dimension_semantics = [#tpu.dimension_semantics<arbitrary>], iteration_bounds = array<i64: 1>, scalar_prefetch = 0 : i64, scratch_operands = 1 : i64, tpu.core_type = #tpu.core_type<tc>, window_params = [{transform_indices = @transform_0, window_bounds = array<i64: 8, 512>}, {transform_indices = @transform_1, window_bounds = array<i64: 512, 512>}, {pipeline_mode = #tpu.pipeline_mode<synchronous>, transform_indices = @transform_2, window_bounds = array<i64: 1, 512>}, {pipeline_mode = #tpu.pipeline_mode<synchronous>, transform_indices = @transform_3, window_bounds = array<i64: 512, 128>}, {pipeline_mode = #tpu.pipeline_mode<synchronous>, transform_indices = @transform_4, window_bounds = array<i64: 1, 128>}, {pipeline_mode = #tpu.pipeline_mode<synchronous>, transform_indices = @transform_5, window_bounds = array<i64: 8, 128>}]} {
    %c0_i32 = arith.constant 0 : i32
    %0 = arith.cmpi eq, %arg0, %c0_i32 : i32
    %1 = arith.extui %0 : i1 to i32
    %c0_i32_0 = arith.constant 0 : i32
    %2 = arith.cmpi ne, %1, %c0_i32_0 : i32
    scf.if %2 {
      %cst_10 = arith.constant 0.000000e+00 : f32
      %12 = vector.broadcast %cst_10 : f32 to vector<8x512xf32>
      %c0_11 = arith.constant 0 : index
      %c0_12 = arith.constant 0 : index
      %13 = vector.load %arg7[%c0_11, %c0_12] : memref<8x512xf32, #tpu.memory_space<vmem>>, vector<8x512xf32>
      tpu.vector_store %arg7[%c0_11, %c0_12], %12 {strides = array<i32>} : memref<8x512xf32, #tpu.memory_space<vmem>>, vector<8x512xf32>,
    } else {
    }
    %c0 = arith.constant 0 : index
    %c0_1 = arith.constant 0 : index
    %3 = vector.load %arg7[%c0, %c0_1] : memref<8x512xf32, #tpu.memory_space<vmem>>, vector<8x512xf32>
    %c0_2 = arith.constant 0 : index
    %c0_3 = arith.constant 0 : index
    %4 = vector.load %arg1[%c0_2, %c0_3] : memref<8x512xbf16, #tpu.memory_space<vmem>>, vector<8x512xbf16>
    %c0_4 = arith.constant 0 : index
    %c0_5 = arith.constant 0 : index
    %5 = vector.load %arg2[%c0_4, %c0_5] : memref<512x512xbf16, #tpu.memory_space<vmem>>, vector<512x512xbf16>
    %cst = arith.constant dense<0.000000e+00> : vector<8x512xf32>
    %6 = tpu.matmul %4, %5, %cst {dimension_numbers = #tpu.dot_dimension_numbers<[1], [0], [0], [1], [0, 0, 1, 1], [], []>} : vector<8x512xbf16>, vector<512x512xbf16>, vector<8x512xf32> -> vector<8x512xf32>
    %7 = arith.addf %3, %6 : vector<8x512xf32>
    %c0_6 = arith.constant 0 : index
    %c0_7 = arith.constant 0 : index
    %8 = vector.load %arg7[%c0_6, %c0_7] : memref<8x512xf32, #tpu.memory_space<vmem>>, vector<8x512xf32>
    tpu.vector_store %arg7[%c0_6, %c0_7], %7 {strides = array<i32>} : memref<8x512xf32, #tpu.memory_space<vmem>>, vector<8x512xf32>,
    %c0_i32_8 = arith.constant 0 : i32
    %9 = arith.cmpi eq, %arg0, %c0_i32_8 : i32
    %10 = arith.extui %9 : i1 to i32
    %c0_i32_9 = arith.constant 0 : i32
    %11 = arith.cmpi ne, %10, %c0_i32_9 : i32
    scf.if %11 {
      %c0_10 = arith.constant 0 : index
      %c0_11 = arith.constant 0 : index
      %12 = vector.load %arg7[%c0_10, %c0_11] : memref<8x512xf32, #tpu.memory_space<vmem>>, vector<8x512xf32>
      %c0_12 = arith.constant 0 : index
      %c0_13 = arith.constant 0 : index
      %13 = vector.load %arg3[%c0_12, %c0_13] : memref<1x512xf32, #tpu.memory_space<vmem>>, vector<1x512xf32>
      %14 = vector.broadcast %13 : vector<1x512xf32> to vector<8x512xf32>
      %15 = arith.addf %12, %14 : vector<8x512xf32>
      %cst_14 = arith.constant 0.000000e+00 : f32
      %16 = vector.broadcast %cst_14 : f32 to vector<8x512xf32>
      %17 = arith.maximumf %15, %16 : vector<8x512xf32>
      %c0_15 = arith.constant 0 : index
      %c0_16 = arith.constant 0 : index
      %18 = vector.load %arg4[%c0_15, %c0_16] : memref<512x128xf32, #tpu.memory_space<vmem>>, vector<512x128xf32>
      %cst_17 = arith.constant dense<0.000000e+00> : vector<8x128xf32>
      %19 = tpu.matmul %17, %18, %cst_17 {dimension_numbers = #tpu.dot_dimension_numbers<[1], [0], [0], [1], [0, 0, 1, 1], [], []>} : vector<8x512xf32>, vector<512x128xf32>, vector<8x128xf32> -> vector<8x128xf32>
      %c0_18 = arith.constant 0 : index
      %c0_19 = arith.constant 0 : index
      %20 = vector.load %arg5[%c0_18, %c0_19] : memref<1x128xf32, #tpu.memory_space<vmem>>, vector<1x128xf32>
      %21 = vector.broadcast %20 : vector<1x128xf32> to vector<8x128xf32>
      %22 = arith.addf %19, %21 : vector<8x128xf32>
      %cst_20 = arith.constant dense<0xFF800000> : vector<8xf32>
      %23 = vector.multi_reduction <maximumf>, %22, %cst_20 [1] : vector<8x128xf32> to vector<8xf32>
      %24 = vector.shape_cast %23 : vector<8xf32> to vector<8x1xf32>
      %25 = vector.broadcast %24 : vector<8x1xf32> to vector<8x128xf32>
      %26 = arith.subf %22, %25 : vector<8x128xf32>
      %27 = math.exp %26 : vector<8x128xf32>
      %cst_21 = arith.constant dense<0.000000e+00> : vector<8xf32>
      %28 = vector.multi_reduction <add>, %27, %cst_21 [1] : vector<8x128xf32> to vector<8xf32>
      %29 = vector.shape_cast %28 : vector<8xf32> to vector<8x1xf32>
      %30 = math.log %29 : vector<8x1xf32>
      %31 = arith.addf %24, %30 : vector<8x1xf32>
      %32 = vector.broadcast %31 : vector<8x1xf32> to vector<8x128xf32>
      %33 = arith.subf %22, %32 : vector<8x128xf32>
      %c0_22 = arith.constant 0 : index
      %c0_23 = arith.constant 0 : index
      %34 = vector.load %arg6[%c0_22, %c0_23] : memref<8x128xf32, #tpu.memory_space<vmem>>, vector<8x128xf32>
      tpu.vector_store %arg6[%c0_22, %c0_23], %33 {strides = array<i32>} : memref<8x128xf32, #tpu.memory_space<vmem>>, vector<8x128xf32>,
    } else {
    }
    return
  }
  func.func @transform_0(%arg0: i32) -> (i32, i32) {
    %c0_i32 = arith.constant 0 : i32
    %c0_i32_0 = arith.constant 0 : i32
    return %c0_i32, %arg0 : i32, i32
  }
  func.func @transform_1(%arg0: i32) -> (i32, i32) {
    %c0_i32 = arith.constant 0 : i32
    %c0_i32_0 = arith.constant 0 : i32
    return %arg0, %c0_i32 : i32, i32
  }
  func.func @transform_2(%arg0: i32) -> (i32, i32) {
    %c0_i32 = arith.constant 0 : i32
    %c0_i32_0 = arith.constant 0 : i32
    %c0_i32_1 = arith.constant 0 : i32
    return %c0_i32, %c0_i32_0 : i32, i32
  }
  func.func @transform_3(%arg0: i32) -> (i32, i32) {
    %c0_i32 = arith.constant 0 : i32
    %c0_i32_0 = arith.constant 0 : i32
    %c0_i32_1 = arith.constant 0 : i32
    return %c0_i32, %c0_i32_0 : i32, i32
  }
  func.func @transform_4(%arg0: i32) -> (i32, i32) {
    %c0_i32 = arith.constant 0 : i32
    %c0_i32_0 = arith.constant 0 : i32
    %c0_i32_1 = arith.constant 0 : i32
    return %c0_i32, %c0_i32_0 : i32, i32
  }
  func.func @transform_5(%arg0: i32) -> (i32, i32) {
    %c0_i32 = arith.constant 0 : i32
    %c0_i32_0 = arith.constant 0 : i32
    %c0_i32_1 = arith.constant 0 : i32
    return %c0_i32, %c0_i32_0 : i32, i32
  }
}

</mosaic_0001>

<llo_original>
// kernel: _lambda_.5
$region0: #{_lambda_.5}
  #allocation0 [shape = 'u32[]', space=smem, size = 0x4, offset = 0x4, fixed_abs, tag = 'smem constant byte address 0x4 - core index']
  #allocation1 [shape = 'u32[144,128]{1,0:T(1,128)}', space=vmem, size = 0x12000, scoped, tag = 'internal scratch']
  %s0 = inlined_call_operand.vmem [shape: bf16[2,75,4096], index: 0, kind: input, shape index: {}]
  %s1 = inlined_call_operand.vmem [shape: bf16[16,75], index: 1, kind: input, shape index: {}]
  %s2 = inlined_call_operand.vmem [shape: f32[16,1], index: 2, kind: input, shape index: {}]
  %s3 = inlined_call_operand.vmem [shape: bf16[2,16,4096], index: 3, kind: output, shape index: {}]
  %s4 = sld [smem:[#allocation0]]
  $region87: #{_lambda_.5} parent=0
    _
  %s6 = ssub.s32 1, %s4
  %s7 = scalar_select 0, %s6, %s4
  $region1: #{_lambda_.5} parent=0
    #allocation2 [shape = 'u8[327680]{0}', space=vmem, size = 0x50000, scoped, tag = 'input window, operand 0']
    #allocation3 [shape = 'u8[65536]{0}', space=vmem, size = 0x10000, scoped, tag = 'output window, operand 0']
    loop: start=0, step=1, limit=10
    $region2: #{_lambda_.5} parent=1 // loop_pre_header
      _
    $region3: #{_lambda_.5} parent=1 // loop_header
      %s9 = sphi 0, %s13
      %p10 = scmp.ge.s32.totalorder %s9, 10
      %s16 = sphi 0, %s28
      %s17 = sphi 0, %s24
      %s18 = sphi 0, %s16
      %s19 = sphi 0, %s17
      %s20 = sphi 0, %s18
      %s21 = sphi 0, %s19
      %s33 = sphi 0, %s35
      %s36 = sphi 0, %s33
      %s37 = sphi 0, %s36
      %s53 = sphi 0, %s37
      %s57 = sphi 0, %s57
      %s59 = sphi 0, %s57
      %s60 = sphi 0, %s59
      %s74 = sphi 0, %s60
      %s78 = sphi 0, %s78
      %s80 = sphi 0, %s78
      %s81 = sphi 0, %s80
      %s95 = sphi 0, %s81
      %s103 = sphi 0, %s105
      %s106 = sphi 0, %s103
      %s107 = sphi 0, %s106
      %s123 = sphi 0, %s107
    $region4: #{_lambda_.5} parent=1 // loop_header_branch
      %12 = sbr.rel (%p10) target = $region8
    $region5: #{_lambda_.5} parent=1 // loop_body
      %s14 = ssub.s32 %s9, 1
      %s15 = ssub.s32 %s9, 2
      %s22 = sadd.s32 1, %s17
      %p23 = scmp.ge.s32.totalorder %s22, 4
      %s24 = scalar_select %p23, 0, %s22
      %s25 = sadd.s32 1, %s16
      %s26 = scalar_select %p23, %s25, %s16
      %p27 = scmp.ge.s32.totalorder %s26, 2
      %s28 = scalar_select %p27, 0, %s26
      %s29 = ssub.s32 %s16, %s28
      %s30 = ssub.s32 %s17, %s24
      %s31 = sor.u32 %s29, %s30
      %p32 = scmp.eq.s32.totalorder %s31, 0
      %s34 = sadd.s32 %s33, 1
      %s35 = scalar_select %p32, %s33, %s34
      %p38 = pneg %p32
      %p39 = scmp.eq.s32.totalorder %s9, 7
      %p40 = por %p38, %p39
      %p41 = scmp.ne.s32.totalorder %s33, %s36
      %p42 = scmp.eq.s32.totalorder %s9, 0
      %p43 = por %p41, %p42
      %p44 = scmp.ne.s32.totalorder %s33, %s36
      %p45 = scmp.eq.s32.totalorder %s14, 7
      %p46 = por %p44, %p45
      %p47 = scmp.ne.s32.totalorder %s36, %s37
      %p48 = scmp.eq.s32.totalorder %s14, 0
      %p49 = por %p47, %p48
      %p50 = scmp.ne.s32.totalorder %s36, %s37
      %p51 = scmp.eq.s32.totalorder %s15, 7
      %p52 = por %p50, %p51
      %p54 = scmp.ne.s32.totalorder %s37, %s53
      %p55 = scmp.eq.s32.totalorder %s15, 0
      %p56 = por %p54, %p55
      %s58 = sadd.s32 %s57, 1
      %p61 = scmp.eq.s32.totalorder %s9, 7
      %p62 = scmp.ne.s32.totalorder %s57, %s59
      %p63 = scmp.eq.s32.totalorder %s9, 0
      %p64 = por %p62, %p63
      %p65 = scmp.ne.s32.totalorder %s57, %s59
      %p66 = scmp.eq.s32.totalorder %s14, 7
      %p67 = por %p65, %p66
      %p68 = scmp.ne.s32.totalorder %s59, %s60
      %p69 = scmp.eq.s32.totalorder %s14, 0
      %p70 = por %p68, %p69
      %p71 = scmp.ne.s32.totalorder %s59, %s60
      %p72 = scmp.eq.s32.totalorder %s15, 7
      %p73 = por %p71, %p72
      %p75 = scmp.ne.s32.totalorder %s60, %s74
      %p76 = scmp.eq.s32.totalorder %s15, 0
      %p77 = por %p75, %p76
      %s79 = sadd.s32 %s78, 1
      %p82 = scmp.eq.s32.totalorder %s9, 7
      %p83 = scmp.ne.s32.totalorder %s78, %s80
      %p84 = scmp.eq.s32.totalorder %s9, 0
      %p85 = por %p83, %p84
      %p86 = scmp.ne.s32.totalorder %s78, %s80
      %p87 = scmp.eq.s32.totalorder %s14, 7
      %p88 = por %p86, %p87
      %p89 = scmp.ne.s32.totalorder %s80, %s81
      %p90 = scmp.eq.s32.totalorder %s14, 0
      %p91 = por %p89, %p90
      %p92 = scmp.ne.s32.totalorder %s80, %s81
      %p93 = scmp.eq.s32.totalorder %s15, 7
      %p94 = por %p92, %p93
      %p96 = scmp.ne.s32.totalorder %s81, %s95
      %p97 = scmp.eq.s32.totalorder %s15, 0
      %p98 = por %p96, %p97
      %s99 = ssub.s32 %s16, %s28
      %s100 = ssub.s32 %s17, %s24
      %s101 = sor.u32 %s99, %s100
      %p102 = scmp.eq.s32.totalorder %s101, 0
      %s104 = sadd.s32 %s103, 1
      %s105 = scalar_select %p102, %s103, %s104
      %p108 = pneg %p102
      %p109 = scmp.eq.s32.totalorder %s9, 7
      %p110 = por %p108, %p109
      %p111 = scmp.ne.s32.totalorder %s103, %s106
      %p112 = scmp.eq.s32.totalorder %s9, 0
      %p113 = por %p111, %p112
      %p114 = scmp.ne.s32.totalorder %s103, %s106
      %p115 = scmp.eq.s32.totalorder %s14, 7
      %p116 = por %p114, %p115
      %p117 = scmp.ne.s32.totalorder %s106, %s107
      %p118 = scmp.eq.s32.totalorder %s14, 0
      %p119 = por %p117, %p118
      %p120 = scmp.ne.s32.totalorder %s106, %s107
      %p121 = scmp.eq.s32.totalorder %s15, 7
      %p122 = por %p120, %p121
      %p124 = scmp.ne.s32.totalorder %s107, %s123
      %p125 = scmp.eq.s32.totalorder %s15, 0
      %p126 = por %p124, %p125
      %p127 = scmp.le.s32.totalorder 1, %s9
      %p128 = scmp.lt.s32.totalorder %s9, 9
      %p129 = pnand %p127, %p128
      %p130 = pneg %p129
      // Predicated region
      $region9: #{_lambda_.5} parent=5 // pred_check
        _
      $region10: #{_lambda_.5} parent=5 // pred_check_branch
        %132 = sbr.rel (%p129) target = $region12
      $region11: #{_lambda_.5} parent=5 // pred_region
        %s133 = ssub.s32 %s9, 1
        // Predicated region
        $region13: #{_lambda_.5} parent=11 // pred_check
          %p134 = pneg %p70
        $region14: #{_lambda_.5} parent=11 // pred_check_branch
          %136 = sbr.rel (%p134) target = $region16
        $region15: #{_lambda_.5} parent=11 // pred_region
          _
        $region16: #{_lambda_.5} parent=11 // pred_fallthru
          _
        // Predicated region
        $region17: #{_lambda_.5} parent=11 // pred_check
          %p137 = pneg %p91
        $region18: #{_lambda_.5} parent=11 // pred_check_branch
          %139 = sbr.rel (%p137) target = $region20
        $region19: #{_lambda_.5} parent=11 // pred_region
          _
        $region20: #{_lambda_.5} parent=11 // pred_fallthru
          _
      $region12: #{_lambda_.5} parent=5 // pred_fallthru
        _
      %p140 = scmp.lt.s32.totalorder %s9, 8
      // Predicated region
      $region21: #{_lambda_.5} parent=5 // pred_check
        %p141 = pneg %p140
      $region22: #{_lambda_.5} parent=5 // pred_check_branch
        %143 = sbr.rel (%p141) target = $region24
      $region23: #{_lambda_.5} parent=5 // pred_region
        // Predicated region
        $region25: #{_lambda_.5} parent=23 // pred_check
          %p144 = pneg %p43
        $region26: #{_lambda_.5} parent=23 // pred_check_branch
          %146 = sbr.rel (%p144) target = $region28
        $region27: #{_lambda_.5} parent=23 // pred_region
          %s147 = sand.u32 %s33, 1
          %s148 = sand.u32 %s33, 1
          %s149 = smul.addr %s148, 320
          %s150 = scalar_lea.vmem [#allocation2], %s149
          %s151 = smul.u32 8, %s17
          %s152 = smul.addr %s16, 320
          %s153 = sadd.s32 %s151, %s152
          %s154 = smul.addr %s153, 4
          %s155 = scalar_lea.vmem %s0, %s154
          // Predicated region
          $region29: #{_lambda_.5} parent=27 // pred_check
            _
          $region30: #{_lambda_.5} parent=27 // pred_check_branch
            %157 = sbr.rel (0) target = $region32
          $region31: #{_lambda_.5} parent=27 // pred_region
            // Predicated region
            $region33: #{_lambda_.5} parent=31 // pred_check
              _
            $region34: #{_lambda_.5} parent=31 // pred_check_branch
              %159 = sbr.rel (0) target = $region36
            $region35: #{_lambda_.5} parent=31 // pred_region
              loop: start=0, step=1, limit=1
              $region37: #{_lambda_.5} parent=35 // loop_pre_header
                _
              $region38: #{_lambda_.5} parent=35 // loop_header
                %s161 = sphi 0, %s165
                %p162 = scmp.ge.s32.totalorder %s161, 1
                %s166 = sphi %s155, %s155
                %s167 = sphi %s150, %s150
              $region39: #{_lambda_.5} parent=35 // loop_header_branch
                %164 = sbr.rel (%p162) target = $region43
              $region40: #{_lambda_.5} parent=35 // loop_body
                %v168 = vld [vmem:[%s166] sm:$0xff]
                %169 = vst [vmem:[%s167] sm:$0xff] %v168
                %v170 = vld [vmem:[%s166 + $0x8] sm:$0xff]
                %171 = vst [vmem:[%s167 + $0x8] sm:$0xff] %v170
                %v172 = vld [vmem:[%s166 + $0x10] sm:$0xff]
                %173 = vst [vmem:[%s167 + $0x10] sm:$0xff] %v172
                %v174 = vld [vmem:[%s166 + $0x18] sm:$0xff]
                %175 = vst [vmem:[%s167 + $0x18] sm:$0xff] %v174
                %v176 = vld [vmem:[%s166 + $0x80] sm:$0xff]
                %177 = vst [vmem:[%s167 + $0x20] sm:$0xff] %v176
                %v178 = vld [vmem:[%s166 + $0x88] sm:$0xff]
                %179 = vst [vmem:[%s167 + $0x28] sm:$0xff] %v178
                %v180 = vld [vmem:[%s166 + $0x90] sm:$0xff]
                %181 = vst [vmem:[%s167 + $0x30] sm:$0xff] %v180
                %v182 = vld [vmem:[%s166 + $0x98] sm:$0xff]
                %183 = vst [vmem:[%s167 + $0x38] sm:$0xff] %v182
                %v184 = vld [vmem:[%s166 + $0x100] sm:$0xff]
                %185 = vst [vmem:[%s167 + $0x40] sm:$0xff] %v184
                %v186 = vld [vmem:[%s166 + $0x108] sm:$0xff]
                %187 = vst [vmem:[%s167 + $0x48] sm:$0xff] %v186
                %v188 = vld [vmem:[%s166 + $0x110] sm:$0xff]
                %189 = vst [vmem:[%s167 + $0x50] sm:$0xff] %v188
                %v190 = vld [vmem:[%s166 + $0x118] sm:$0xff]
                %191 = vst [vmem:[%s167 + $0x58] sm:$0xff] %v190
                %v192 = vld [vmem:[%s166 + $0x180] sm:$0xff]
                %193 = vst [vmem:[%s167 + $0x60] sm:$0xff] %v192
                %v194 = vld [vmem:[%s166 + $0x188] sm:$0xff]
                %195 = vst [vmem:[%s167 + $0x68] sm:$0xff] %v194
                %v196 = vld [vmem:[%s166 + $0x190] sm:$0xff]
                %197 = vst [vmem:[%s167 + $0x70] sm:$0xff] %v196
                %v198 = vld [vmem:[%s166 + $0x198] sm:$0xff]
                %199 = vst [vmem:[%s167 + $0x78] sm:$0xff] %v198
                %v200 = vld [vmem:[%s166 + $0x200] sm:$0xff]
                %201 = vst [vmem:[%s167 + $0x80] sm:$0xff] %v200
                %v202 = vld [vmem:[%s166 + $0x208] sm:$0xff]
                %203 = vst [vmem:[%s167 + $0x88] sm:$0xff] %v202
                %v204 = vld [vmem:[%s166 + $0x210] sm:$0xff]
                %205 = vst [vmem:[%s167 + $0x90] sm:$0xff] %v204
                %v206 = vld [vmem:[%s166 + $0x218] sm:$0xff]
                %207 = vst [vmem:[%s167 + $0x98] sm:$0xff] %v206
                %v208 = vld [vmem:[%s166 + $0x280] sm:$0xff]
                %209 = vst [vmem:[%s167 + $0xa0] sm:$0xff] %v208
                %v210 = vld [vmem:[%s166 + $0x288] sm:$0xff]
                %211 = vst [vmem:[%s167 + $0xa8] sm:$0xff] %v210
                %v212 = vld [vmem:[%s166 + $0x290] sm:$0xff]
                %213 = vst [vmem:[%s167 + $0xb0] sm:$0xff] %v212
                %v214 = vld [vmem:[%s166 + $0x298] sm:$0xff]
                %215 = vst [vmem:[%s167 + $0xb8] sm:$0xff] %v214
                %v216 = vld [vmem:[%s166 + $0x300] sm:$0xff]
                %217 = vst [vmem:[%s167 + $0xc0] sm:$0xff] %v216
                %v218 = vld [vmem:[%s166 + $0x308] sm:$0xff]
                %219 = vst [vmem:[%s167 + $0xc8] sm:$0xff] %v218
                %v220 = vld [vmem:[%s166 + $0x310] sm:$0xff]
                %221 = vst [vmem:[%s167 + $0xd0] sm:$0xff] %v220
                %v222 = vld [vmem:[%s166 + $0x318] sm:$0xff]
                %223 = vst [vmem:[%s167 + $0xd8] sm:$0xff] %v222
                %v224 = vld [vmem:[%s166 + $0x380] sm:$0xff]
                %225 = vst [vmem:[%s167 + $0xe0] sm:$0xff] %v224
                %v226 = vld [vmem:[%s166 + $0x388] sm:$0xff]
                %227 = vst [vmem:[%s167 + $0xe8] sm:$0xff] %v226
                %v228 = vld [vmem:[%s166 + $0x390] sm:$0xff]
                %229 = vst [vmem:[%s167 + $0xf0] sm:$0xff] %v228
                %v230 = vld [vmem:[%s166 + $0x398] sm:$0xff]
                %231 = vst [vmem:[%s167 + $0xf8] sm:$0xff] %v230
                %v232 = vld [vmem:[%s166 + $0x400] sm:$0xff]
                %233 = vst [vmem:[%s167 + $0x100] sm:$0xff] %v232
                %v234 = vld [vmem:[%s166 + $0x408] sm:$0xff]
                %235 = vst [vmem:[%s167 + $0x108] sm:$0xff] %v234
                %v236 = vld [vmem:[%s166 + $0x410] sm:$0xff]
                %237 = vst [vmem:[%s167 + $0x110] sm:$0xff] %v236
                %v238 = vld [vmem:[%s166 + $0x418] sm:$0xff]
                %239 = vst [vmem:[%s167 + $0x118] sm:$0xff] %v238
                %v240 = vld [vmem:[%s166 + $0x480] sm:$0xff]
                %241 = vst [vmem:[%s167 + $0x120] sm:$0xff] %v240
                %v242 = vld [vmem:[%s166 + $0x488] sm:$0xff]
                %243 = vst [vmem:[%s167 + $0x128] sm:$0xff] %v242
                %v244 = vld [vmem:[%s166 + $0x490] sm:$0xff]
                %245 = vst [vmem:[%s167 + $0x130] sm:$0xff] %v244
                %v246 = vld [vmem:[%s166 + $0x498] sm:$0xff]
                %247 = vst [vmem:[%s167 + $0x138] sm:$0xff] %v246
              $region41: #{_lambda_.5} parent=35 // loop_footer
                %s165 = sadd.s32 1, %s161
              $region42: #{_lambda_.5} parent=35 // loop_footer_branch
                %160 = sbr.rel target = $region38
              $region43: #{_lambda_.5} parent=35 // loop_exit
                _
            $region36: #{_lambda_.5} parent=31 // pred_fallthru
              _
            // Predicated region
            $region44: #{_lambda_.5} parent=31 // pred_check
              _
            $region45: #{_lambda_.5} parent=31 // pred_check_branch
              %249 = sbr.rel target = $region47
            $region46: #{_lambda_.5} parent=31 // pred_region
              _
            $region47: #{_lambda_.5} parent=31 // pred_fallthru
              _
          $region32: #{_lambda_.5} parent=27 // pred_fallthru
            _
          %250 = vnop
        $region28: #{_lambda_.5} parent=23 // pred_fallthru
          _
      $region24: #{_lambda_.5} parent=5 // pred_fallthru
        _
      %p251 = scmp.le.s32.totalorder 1, %s9
      %p252 = scmp.lt.s32.totalorder %s9, 9
      %p253 = pnand %p251, %p252
      %p254 = pneg %p253
      // Predicated region
      $region48: #{_lambda_.5} parent=5 // pred_check
        _
      $region49: #{_lambda_.5} parent=5 // pred_check_branch
        %256 = sbr.rel (%p253) target = $region51
      $region50: #{_lambda_.5} parent=5 // pred_region
        %s257 = ssub.s32 %s9, 1
        %s258 = sand.u32 %s36, 1
        %s259 = sand.u32 %s36, 1
        %s260 = smul.addr %s259, 320
        %s261 = scalar_lea.vmem [#allocation2], %s260
        // Predicated region
        $region52: #{_lambda_.5} parent=50 // pred_check
          %p262 = pneg %p49
        $region53: #{_lambda_.5} parent=50 // pred_check_branch
          %264 = sbr.rel (%p262) target = $region55
        $region54: #{_lambda_.5} parent=50 // pred_region
          _
        $region55: #{_lambda_.5} parent=50 // pred_fallthru
          _
        %s265 = sand.u32 %s36, 1
        %s266 = sand.u32 %s36, 1
        %s267 = smul.addr %s266, 320
        %s268 = scalar_lea.vmem [#allocation2], %s267
        %p269 = pneg %p49
        %p270 = pneg %p46
        %p271 = pneg %p70
        %p272 = pneg %p67
        %p273 = pneg %p91
        %p274 = pneg %p88
        %p275 = pneg %p119
        %p276 = pneg %p116
        %s277 = sand.u32 %s106, 1
        %s278 = sand.u32 %s106, 1
        %s279 = smul.addr %s278, 64
        %s280 = scalar_lea.vmem [#allocation3], %s279
        %s281 = smul.u32 8, %s19
        %s282 = smul.u32 8, %s19
        %v284 = vld [vmem:[%s1] sm:$0xf]
        %v285 = vld [vmem:[%s1 + $0x4] sm:$0xf]
        %v286 = vld [vmem:[%s261] sm:$0xff]
        %v287 = vld [vmem:[%s261 + $0x8] sm:$0xff]
        %v288 = vld [vmem:[%s261 + $0x10] sm:$0xff]
        %v289 = vld [vmem:[%s261 + $0x18] sm:$0xff]
        %v290 = vld [vmem:[%s261 + $0x20] sm:$0xff]
        %v291 = vld [vmem:[%s261 + $0x28] sm:$0xff]
        %v292 = vld [vmem:[%s261 + $0x30] sm:$0xff]
        %v293 = vld [vmem:[%s261 + $0x38] sm:$0xff]
        %v294 = vld [vmem:[%s261 + $0x40] sm:$0xff]
        %v295 = vld [vmem:[%s261 + $0x48] sm:$0xff]
        %v296 = vld [vmem:[%s261 + $0x50] sm:$0xff]
        %v297 = vld [vmem:[%s261 + $0x58] sm:$0xff]
        %v298 = vld [vmem:[%s261 + $0x60] sm:$0xff]
        %v299 = vld [vmem:[%s261 + $0x68] sm:$0xff]
        %v300 = vld [vmem:[%s261 + $0x70] sm:$0xff]
        %v301 = vld [vmem:[%s261 + $0x78] sm:$0xff]
        %v302 = vld [vmem:[%s261 + $0x80] sm:$0xff]
        %v303 = vld [vmem:[%s261 + $0x88] sm:$0xff]
        %v304 = vld [vmem:[%s261 + $0x90] sm:$0xff]
        %v305 = vld [vmem:[%s261 + $0x98] sm:$0xff]
        %v306 = vld [vmem:[%s261 + $0xa0] sm:$0xff]
        %v307 = vld [vmem:[%s261 + $0xa8] sm:$0xff]
        %v308 = vld [vmem:[%s261 + $0xb0] sm:$0xff]
        %v309 = vld [vmem:[%s261 + $0xb8] sm:$0xff]
        %v310 = vld [vmem:[%s261 + $0xc0] sm:$0xff]
        %v311 = vld [vmem:[%s261 + $0xc8] sm:$0xff]
        %v312 = vld [vmem:[%s261 + $0xd0] sm:$0xff]
        %v313 = vld [vmem:[%s261 + $0xd8] sm:$0xff]
        %v314 = vld [vmem:[%s261 + $0xe0] sm:$0xff]
        %v315 = vld [vmem:[%s261 + $0xe8] sm:$0xff]
        %v316 = vld [vmem:[%s261 + $0xf0] sm:$0xff]
        %v317 = vld [vmem:[%s261 + $0xf8] sm:$0xff]
        %v318 = vld [vmem:[%s261 + $0x100] sm:$0xff]
        %v319 = vld [vmem:[%s261 + $0x108] sm:$0xff]
        %v320 = vld [vmem:[%s261 + $0x110] sm:$0xff]
        %v321 = vld [vmem:[%s261 + $0x118] sm:$0xff]
        %v322 = vld [vmem:[%s261 + $0x120] sm:$0x33]
        %v323 = vld [vmem:[%s261 + $0x128] sm:$0x33]
        %v324 = vld [vmem:[%s261 + $0x130] sm:$0x33]
        %v325 = vld [vmem:[%s261 + $0x138] sm:$0x33]
        %v326 = vld [vmem:[%s2] sm:$0xff]
        %v327 = vld [vmem:[%s2 + $0x8] sm:$0xff]
        %329 = vset.pattern.permute.xlu0 0
        %330 = vperm.xlu0 %329, %v326
        %v331 = vpop.permute.xlu0 %330
        %334 = vset.pattern.permute.xlu0 0
        %335 = vperm.xlu0 %334, %v327
        %v336 = vpop.permute.xlu0 %335
        %v340 = vunpack.c.l.b16 %v284
        %v341 = vunpack.c.l.b16 %v285
        %v342 = vpack.c.b16 %v341, %v340
        %v383 = vunpack.c.l.b16 %v286
        %v384 = vunpack.c.h.b16 %v286
        %v385 = vunpack.c.l.b16 %v287
        %v386 = vunpack.c.h.b16 %v287
        %v387 = vunpack.c.l.b16 %v288
        %v388 = vunpack.c.h.b16 %v288
        %v389 = vunpack.c.l.b16 %v289
        %v390 = vunpack.c.h.b16 %v289
        %v391 = vunpack.c.l.b16 %v290
        %v392 = vunpack.c.h.b16 %v290
        %v393 = vunpack.c.l.b16 %v291
        %v394 = vunpack.c.h.b16 %v291
        %v395 = vunpack.c.l.b16 %v292
        %v396 = vunpack.c.h.b16 %v292
        %v397 = vunpack.c.l.b16 %v293
        %v398 = vunpack.c.h.b16 %v293
        %v399 = vunpack.c.l.b16 %v294
        %v400 = vunpack.c.h.b16 %v294
        %v401 = vunpack.c.l.b16 %v295
        %v402 = vunpack.c.h.b16 %v295
        %v403 = vunpack.c.l.b16 %v296
        %v404 = vunpack.c.h.b16 %v296
        %v405 = vunpack.c.l.b16 %v297
        %v406 = vunpack.c.h.b16 %v297
        %v407 = vunpack.c.l.b16 %v298
        %v408 = vunpack.c.h.b16 %v298
        %v409 = vunpack.c.l.b16 %v299
        %v410 = vunpack.c.h.b16 %v299
        %v411 = vunpack.c.l.b16 %v300
        %v412 = vunpack.c.h.b16 %v300
        %v413 = vunpack.c.l.b16 %v301
        %v414 = vunpack.c.h.b16 %v301
        %v415 = vunpack.c.l.b16 %v302
        %v416 = vunpack.c.h.b16 %v302
        %v417 = vunpack.c.l.b16 %v303
        %v418 = vunpack.c.h.b16 %v303
        %v419 = vunpack.c.l.b16 %v304
        %v420 = vunpack.c.h.b16 %v304
        %v421 = vunpack.c.l.b16 %v305
        %v422 = vunpack.c.h.b16 %v305
        %v423 = vunpack.c.l.b16 %v306
        %v424 = vunpack.c.h.b16 %v306
        %v425 = vunpack.c.l.b16 %v307
        %v426 = vunpack.c.h.b16 %v307
        %v427 = vunpack.c.l.b16 %v308
        %v428 = vunpack.c.h.b16 %v308
        %v429 = vunpack.c.l.b16 %v309
        %v430 = vunpack.c.h.b16 %v309
        %v431 = vunpack.c.l.b16 %v310
        %v432 = vunpack.c.h.b16 %v310
        %v433 = vunpack.c.l.b16 %v311
        %v434 = vunpack.c.h.b16 %v311
        %v435 = vunpack.c.l.b16 %v312
        %v436 = vunpack.c.h.b16 %v312
        %v437 = vunpack.c.l.b16 %v313
        %v438 = vunpack.c.h.b16 %v313
        %v439 = vunpack.c.l.b16 %v314
        %v440 = vunpack.c.h.b16 %v314
        %v441 = vunpack.c.l.b16 %v315
        %v442 = vunpack.c.h.b16 %v315
        %v443 = vunpack.c.l.b16 %v316
        %v444 = vunpack.c.h.b16 %v316
        %v445 = vunpack.c.l.b16 %v317
        %v446 = vunpack.c.h.b16 %v317
        %v447 = vunpack.c.l.b16 %v318
        %v448 = vunpack.c.h.b16 %v318
        %v449 = vunpack.c.l.b16 %v319
        %v450 = vunpack.c.h.b16 %v319
        %v451 = vunpack.c.l.b16 %v320
        %v452 = vunpack.c.h.b16 %v320
        %v453 = vunpack.c.l.b16 %v321
        %v454 = vunpack.c.h.b16 %v321
        %v455 = vunpack.c.l.b16 %v322
        %v456 = vunpack.c.h.b16 %v322
        %v457 = vunpack.c.l.b16 %v323
        %v458 = vunpack.c.h.b16 %v323
        %v459 = vunpack.c.l.b16 %v324
        %v460 = vunpack.c.h.b16 %v324
        %v461 = vunpack.c.l.b16 %v325
        %v462 = vunpack.c.h.b16 %v325
        %v463 = vpack.c.b16 %v391, %v383
        %v464 = vpack.c.b16 %v392, %v384
        %v465 = vpack.c.b16 %v393, %v385
        %v466 = vpack.c.b16 %v394, %v386
        %v467 = vpack.c.b16 %v395, %v387
        %v468 = vpack.c.b16 %v396, %v388
        %v469 = vpack.c.b16 %v397, %v389
        %v470 = vpack.c.b16 %v398, %v390
        %v471 = vpack.c.b16 %v407, %v399
        %v472 = vpack.c.b16 %v408, %v400
        %v473 = vpack.c.b16 %v409, %v401
        %v474 = vpack.c.b16 %v410, %v402
        %v475 = vpack.c.b16 %v411, %v403
        %v476 = vpack.c.b16 %v412, %v404
        %v477 = vpack.c.b16 %v413, %v405
        %v478 = vpack.c.b16 %v414, %v406
        %v479 = vpack.c.b16 %v423, %v415
        %v480 = vpack.c.b16 %v424, %v416
        %v481 = vpack.c.b16 %v425, %v417
        %v482 = vpack.c.b16 %v426, %v418
        %v483 = vpack.c.b16 %v427, %v419
        %v484 = vpack.c.b16 %v428, %v420
        %v485 = vpack.c.b16 %v429, %v421
        %v486 = vpack.c.b16 %v430, %v422
        %v487 = vpack.c.b16 %v439, %v431
        %v488 = vpack.c.b16 %v440, %v432
        %v489 = vpack.c.b16 %v441, %v433
        %v490 = vpack.c.b16 %v442, %v434
        %v491 = vpack.c.b16 %v443, %v435
        %v492 = vpack.c.b16 %v444, %v436
        %v493 = vpack.c.b16 %v445, %v437
        %v494 = vpack.c.b16 %v446, %v438
        %v495 = vpack.c.b16 %v455, %v447
        %v496 = vpack.c.b16 %v456, %v448
        %v497 = vpack.c.b16 %v457, %v449
        %v498 = vpack.c.b16 %v458, %v450
        %v499 = vpack.c.b16 %v459, %v451
        %v500 = vpack.c.b16 %v460, %v452
        %v501 = vpack.c.b16 %v461, %v453
        %v502 = vpack.c.b16 %v462, %v454
        %vm535 = vcmask 613376
        %v537 = vsel %vm535, %v342, 0
        %vm539 = vcmask 1044480
        %vm540 = vcmask 1045504
        %v541 = vsel %vm539, 4294967295, 65535
        %v542 = vsel %vm540, %v541, 0
        %v544 = vand.u32 %v495, %v542
        %v547 = vand.u32 %v496, %v542
        %v550 = vand.u32 %v497, %v542
        %v553 = vand.u32 %v498, %v542
        %v556 = vand.u32 %v499, %v542
        %v559 = vand.u32 %v500, %v542
        %v562 = vand.u32 %v501, %v542
        %v565 = vand.u32 %v502, %v542
        %567 = vmatprep.subr.bf16.mxu0 %v464
        %568 = vmatpush1.bf16.msra.mxu0 %v463
        %569 = vmatprep.subr.bf16.mxu0 %v472
        %570 = vmatpush1.bf16.msra.mxu0 %v471
        %571 = vmatprep.subr.bf16.mxu0 %v480
        %572 = vmatpush1.bf16.msra.mxu0 %v479
        %573 = vmatprep.subr.bf16.mxu0 %v488
        %574 = vmatpush1.bf16.msra.mxu0 %v487
        %575 = vmatprep.subr.bf16.mxu0 %v547
        %576 = vmatpush1.bf16.msra.mxu0 %v544
        %577 = vmatprep.subr.bf16.mxu0 0
        %578 = vmatpush1.bf16.msra.mxu0 0
        %579 = vmatprep.subr.bf16.mxu0 0
        %580 = vmatpush1.bf16.msra.mxu0 0
        %581 = vmatprep.subr.bf16.mxu0 0
        %582 = vmatpush1.bf16.msra.mxu0 0
        %583 = vmatprep.subr.bf16.mxu0 0
        %584 = vmatpush1.bf16.msra.mxu0 0
        %585 = vmatprep.subr.bf16.mxu0 0
        %586 = vmatpush1.bf16.msra.mxu0 0
        %587 = vmatprep.subr.bf16.mxu0 0
        %588 = vmatpush1.bf16.msra.mxu0 0
        %589 = vmatprep.subr.bf16.mxu0 0
        %590 = vmatpush1.bf16.msra.mxu0 0
        %591 = vmatprep.subr.bf16.mxu0 0
        %592 = vmatpush1.bf16.msra.mxu0 0
        %593 = vmatprep.subr.bf16.mxu0 0
        %594 = vmatpush1.bf16.msra.mxu0 0
        %595 = vmatprep.subr.bf16.mxu0 0
        %596 = vmatpush1.bf16.msra.mxu0 0
        %597 = vmatprep.subr.bf16.mxu0 0
        %598 = vmatpush1.bf16.msra.mxu0 0
        %599 = vmatprep.mubr.bf16.mxu0 0
        %600 = vmatmul.mubr.bf16.gmra.mrb[0].mxu0 %v537
        %v601 = vpop.f32.mrb[0].mxu0
        %v602 = vadd.f32 %v331, %v601
        %v603 = vpop.f32.mrb[0].mxu0
        %v604 = vadd.f32 %v331, %v603
        %v605 = vpop.f32.mrb[0].mxu0
        %v606 = vadd.f32 %v336, %v605
        %v607 = vpop.f32.mrb[0].mxu0
        %v608 = vadd.f32 %v336, %v607
        %609 = vdwg.mxu0
        %610 = vmatprep.subr.bf16.mxu0 %v466
        %611 = vmatpush1.bf16.msra.mxu0 %v465
        %612 = vmatprep.subr.bf16.mxu0 %v474
        %613 = vmatpush1.bf16.msra.mxu0 %v473
        %614 = vmatprep.subr.bf16.mxu0 %v482
        %615 = vmatpush1.bf16.msra.mxu0 %v481
        %616 = vmatprep.subr.bf16.mxu0 %v490
        %617 = vmatpush1.bf16.msra.mxu0 %v489
        %618 = vmatprep.subr.bf16.mxu0 %v553
        %619 = vmatpush1.bf16.msra.mxu0 %v550
        %620 = vmatprep.subr.bf16.mxu0 0
        %621 = vmatpush1.bf16.msra.mxu0 0
        %622 = vmatprep.subr.bf16.mxu0 0
        %623 = vmatpush1.bf16.msra.mxu0 0
        %624 = vmatprep.subr.bf16.mxu0 0
        %625 = vmatpush1.bf16.msra.mxu0 0
        %626 = vmatprep.subr.bf16.mxu0 0
        %627 = vmatpush1.bf16.msra.mxu0 0
        %628 = vmatprep.subr.bf16.mxu0 0
        %629 = vmatpush1.bf16.msra.mxu0 0
        %630 = vmatprep.subr.bf16.mxu0 0
        %631 = vmatpush1.bf16.msra.mxu0 0
        %632 = vmatprep.subr.bf16.mxu0 0
        %633 = vmatpush1.bf16.msra.mxu0 0
        %634 = vmatprep.subr.bf16.mxu0 0
        %635 = vmatpush1.bf16.msra.mxu0 0
        %636 = vmatprep.subr.bf16.mxu0 0
        %637 = vmatpush1.bf16.msra.mxu0 0
        %638 = vmatprep.subr.bf16.mxu0 0
        %639 = vmatpush1.bf16.msra.mxu0 0
        %640 = vmatprep.subr.bf16.mxu0 0
        %641 = vmatpush1.bf16.msra.mxu0 0
        %642 = vmatprep.mubr.bf16.mxu0 0
        %643 = vmatmul.mubr.bf16.gmra.mrb[0].mxu0 %v537
        %v644 = vpop.f32.mrb[0].mxu0
        %v645 = vadd.f32 %v331, %v644
        %v646 = vpop.f32.mrb[0].mxu0
        %v647 = vadd.f32 %v331, %v646
        %v648 = vpop.f32.mrb[0].mxu0
        %v649 = vadd.f32 %v336, %v648
        %v650 = vpop.f32.mrb[0].mxu0
        %v651 = vadd.f32 %v336, %v650
        %652 = vdwg.mxu0
        %653 = vmatprep.subr.bf16.mxu0 %v468
        %654 = vmatpush1.bf16.msra.mxu0 %v467
        %655 = vmatprep.subr.bf16.mxu0 %v476
        %656 = vmatpush1.bf16.msra.mxu0 %v475
        %657 = vmatprep.subr.bf16.mxu0 %v484
        %658 = vmatpush1.bf16.msra.mxu0 %v483
        %659 = vmatprep.subr.bf16.mxu0 %v492
        %660 = vmatpush1.bf16.msra.mxu0 %v491
        %661 = vmatprep.subr.bf16.mxu0 %v559
        %662 = vmatpush1.bf16.msra.mxu0 %v556
        %663 = vmatprep.subr.bf16.mxu0 0
        %664 = vmatpush1.bf16.msra.mxu0 0
        %665 = vmatprep.subr.bf16.mxu0 0
        %666 = vmatpush1.bf16.msra.mxu0 0
        %667 = vmatprep.subr.bf16.mxu0 0
        %668 = vmatpush1.bf16.msra.mxu0 0
        %669 = vmatprep.subr.bf16.mxu0 0
        %670 = vmatpush1.bf16.msra.mxu0 0
        %671 = vmatprep.subr.bf16.mxu0 0
        %672 = vmatpush1.bf16.msra.mxu0 0
        %673 = vmatprep.subr.bf16.mxu0 0
        %674 = vmatpush1.bf16.msra.mxu0 0
        %675 = vmatprep.subr.bf16.mxu0 0
        %676 = vmatpush1.bf16.msra.mxu0 0
        %677 = vmatprep.subr.bf16.mxu0 0
        %678 = vmatpush1.bf16.msra.mxu0 0
        %679 = vmatprep.subr.bf16.mxu0 0
        %680 = vmatpush1.bf16.msra.mxu0 0
        %681 = vmatprep.subr.bf16.mxu0 0
        %682 = vmatpush1.bf16.msra.mxu0 0
        %683 = vmatprep.subr.bf16.mxu0 0
        %684 = vmatpush1.bf16.msra.mxu0 0
        %685 = vmatprep.mubr.bf16.mxu0 0
        %686 = vmatmul.mubr.bf16.gmra.mrb[0].mxu0 %v537
        %v687 = vpop.f32.mrb[0].mxu0
        %v688 = vadd.f32 %v331, %v687
        %v689 = vpop.f32.mrb[0].mxu0
        %v690 = vadd.f32 %v331, %v689
        %v691 = vpop.f32.mrb[0].mxu0
        %v692 = vadd.f32 %v336, %v691
        %v693 = vpop.f32.mrb[0].mxu0
        %v694 = vadd.f32 %v336, %v693
        %695 = vdwg.mxu0
        %696 = vmatprep.subr.bf16.mxu0 %v470
        %697 = vmatpush1.bf16.msra.mxu0 %v469
        %698 = vmatprep.subr.bf16.mxu0 %v478
        %699 = vmatpush1.bf16.msra.mxu0 %v477
        %700 = vmatprep.subr.bf16.mxu0 %v486
        %701 = vmatpush1.bf16.msra.mxu0 %v485
        %702 = vmatprep.subr.bf16.mxu0 %v494
        %703 = vmatpush1.bf16.msra.mxu0 %v493
        %704 = vmatprep.subr.bf16.mxu0 %v565
        %705 = vmatpush1.bf16.msra.mxu0 %v562
        %706 = vmatprep.subr.bf16.mxu0 0
        %707 = vmatpush1.bf16.msra.mxu0 0
        %708 = vmatprep.subr.bf16.mxu0 0
        %709 = vmatpush1.bf16.msra.mxu0 0
        %710 = vmatprep.subr.bf16.mxu0 0
        %711 = vmatpush1.bf16.msra.mxu0 0
        %712 = vmatprep.subr.bf16.mxu0 0
        %713 = vmatpush1.bf16.msra.mxu0 0
        %714 = vmatprep.subr.bf16.mxu0 0
        %715 = vmatpush1.bf16.msra.mxu0 0
        %716 = vmatprep.subr.bf16.mxu0 0
        %717 = vmatpush1.bf16.msra.mxu0 0
        %718 = vmatprep.subr.bf16.mxu0 0
        %719 = vmatpush1.bf16.msra.mxu0 0
        %720 = vmatprep.subr.bf16.mxu0 0
        %721 = vmatpush1.bf16.msra.mxu0 0
        %722 = vmatprep.subr.bf16.mxu0 0
        %723 = vmatpush1.bf16.msra.mxu0 0
        %724 = vmatprep.subr.bf16.mxu0 0
        %725 = vmatpush1.bf16.msra.mxu0 0
        %726 = vmatprep.subr.bf16.mxu0 0
        %727 = vmatpush1.bf16.msra.mxu0 0
        %728 = vmatprep.mubr.bf16.mxu0 0
        %729 = vmatmul.mubr.bf16.gmra.mrb[0].mxu0 %v537
        %v730 = vpop.f32.mrb[0].mxu0
        %v731 = vadd.f32 %v331, %v730
        %v732 = vpop.f32.mrb[0].mxu0
        %v733 = vadd.f32 %v331, %v732
        %v734 = vpop.f32.mrb[0].mxu0
        %v735 = vadd.f32 %v336, %v734
        %v736 = vpop.f32.mrb[0].mxu0
        %v737 = vadd.f32 %v336, %v736
        %738 = vdwg.mxu0
        %v739 = vmax.f32 %v602, 0.0
        %v740 = vmax.f32 %v604, 0.0
        %v741 = vmax.f32 %v645, 0.0
        %v742 = vmax.f32 %v647, 0.0
        %v743 = vmax.f32 %v688, 0.0
        %v744 = vmax.f32 %v690, 0.0
        %v745 = vmax.f32 %v731, 0.0
        %v746 = vmax.f32 %v733, 0.0
        %v747 = vmax.f32 %v606, 0.0
        %v748 = vmax.f32 %v608, 0.0
        %v749 = vmax.f32 %v649, 0.0
        %v750 = vmax.f32 %v651, 0.0
        %v751 = vmax.f32 %v692, 0.0
        %v752 = vmax.f32 %v694, 0.0
        %v753 = vmax.f32 %v735, 0.0
        %v754 = vmax.f32 %v737, 0.0
        %v755 = vpack.c.bf16 %v747, %v739
        %v756 = vpack.c.bf16 %v748, %v740
        %v757 = vpack.c.bf16 %v749, %v741
        %v758 = vpack.c.bf16 %v750, %v742
        %v759 = vpack.c.bf16 %v751, %v743
        %v760 = vpack.c.bf16 %v752, %v744
        %v761 = vpack.c.bf16 %v753, %v745
        %v762 = vpack.c.bf16 %v754, %v746
        %v771 = vunpack.c.l.b16 %v755
        %v772 = vunpack.c.l.b16 %v756
        %v773 = vunpack.c.l.b16 %v757
        %v774 = vunpack.c.l.b16 %v758
        %v775 = vunpack.c.l.b16 %v759
        %v776 = vunpack.c.l.b16 %v760
        %v777 = vunpack.c.l.b16 %v761
        %v778 = vunpack.c.l.b16 %v762
        %v779 = vunpack.c.h.b16 %v755
        %v780 = vunpack.c.h.b16 %v756
        %v781 = vunpack.c.h.b16 %v757
        %v782 = vunpack.c.h.b16 %v758
        %v783 = vunpack.c.h.b16 %v759
        %v784 = vunpack.c.h.b16 %v760
        %v785 = vunpack.c.h.b16 %v761
        %v786 = vunpack.c.h.b16 %v762
        %v787 = vpack.c.b16 %v772, %v771
        %v788 = vpack.c.b16 %v774, %v773
        %v789 = vpack.c.b16 %v776, %v775
        %v790 = vpack.c.b16 %v778, %v777
        %v791 = vpack.c.b16 %v780, %v779
        %v792 = vpack.c.b16 %v782, %v781
        %v793 = vpack.c.b16 %v784, %v783
        %v794 = vpack.c.b16 %v786, %v785
        %803 = vst [vmem:[%s280] sm:$0xff] %v787
        %804 = vst [vmem:[%s280 + $0x8] sm:$0xff] %v788
        %805 = vst [vmem:[%s280 + $0x10] sm:$0xff] %v789
        %806 = vst [vmem:[%s280 + $0x18] sm:$0xff] %v790
        %807 = vst [vmem:[%s280 + $0x20] sm:$0xff] %v791
        %808 = vst [vmem:[%s280 + $0x28] sm:$0xff] %v792
        %809 = vst [vmem:[%s280 + $0x30] sm:$0xff] %v793
        %810 = vst [vmem:[%s280 + $0x38] sm:$0xff] %v794
        %s811 = sand.u32 %s106, 1
        %s812 = sand.u32 %s106, 1
        %s813 = smul.addr %s812, 64
        %s814 = scalar_lea.vmem [#allocation3], %s813
        // Predicated region
        $region56: #{_lambda_.5} parent=50 // pred_check
          %p815 = pneg %p116
        $region57: #{_lambda_.5} parent=50 // pred_check_branch
          %817 = sbr.rel (%p815) target = $region59
        $region58: #{_lambda_.5} parent=50 // pred_region
          %s818 = smul.u32 8, %s19
          %s819 = smul.addr %s18, 64
          %s820 = sadd.s32 %s818, %s819
          %s821 = smul.addr %s820, 4
          %s822 = scalar_lea.vmem %s3, %s821
          // Predicated region
          $region60: #{_lambda_.5} parent=58 // pred_check
            _
          $region61: #{_lambda_.5} parent=58 // pred_check_branch
            %824 = sbr.rel (0) target = $region63
          $region62: #{_lambda_.5} parent=58 // pred_region
            // Predicated region
            $region64: #{_lambda_.5} parent=62 // pred_check
              _
            $region65: #{_lambda_.5} parent=62 // pred_check_branch
              %826 = sbr.rel (0) target = $region67
            $region66: #{_lambda_.5} parent=62 // pred_region
              loop: start=0, step=1, limit=1
              $region68: #{_lambda_.5} parent=66 // loop_pre_header
                _
              $region69: #{_lambda_.5} parent=66 // loop_header
                %s828 = sphi 0, %s832
                %p829 = scmp.ge.s32.totalorder %s828, 1
                %s833 = sphi %s814, %s814
                %s834 = sphi %s822, %s822
              $region70: #{_lambda_.5} parent=66 // loop_header_branch
                %831 = sbr.rel (%p829) target = $region74
              $region71: #{_lambda_.5} parent=66 // loop_body
                %v835 = vld [vmem:[%s833] sm:$0xff]
                %836 = vst [vmem:[%s834] sm:$0xff] %v835
                %v837 = vld [vmem:[%s833 + $0x8] sm:$0xff]
                %838 = vst [vmem:[%s834 + $0x8] sm:$0xff] %v837
                %v839 = vld [vmem:[%s833 + $0x10] sm:$0xff]
                %840 = vst [vmem:[%s834 + $0x10] sm:$0xff] %v839
                %v841 = vld [vmem:[%s833 + $0x18] sm:$0xff]
                %842 = vst [vmem:[%s834 + $0x18] sm:$0xff] %v841
                %v843 = vld [vmem:[%s833 + $0x20] sm:$0xff]
                %844 = vst [vmem:[%s834 + $0x80] sm:$0xff] %v843
                %v845 = vld [vmem:[%s833 + $0x28] sm:$0xff]
                %846 = vst [vmem:[%s834 + $0x88] sm:$0xff] %v845
                %v847 = vld [vmem:[%s833 + $0x30] sm:$0xff]
                %848 = vst [vmem:[%s834 + $0x90] sm:$0xff] %v847
                %v849 = vld [vmem:[%s833 + $0x38] sm:$0xff]
                %850 = vst [vmem:[%s834 + $0x98] sm:$0xff] %v849
              $region72: #{_lambda_.5} parent=66 // loop_footer
                %s832 = sadd.s32 1, %s828
              $region73: #{_lambda_.5} parent=66 // loop_footer_branch
                %827 = sbr.rel target = $region69
              $region74: #{_lambda_.5} parent=66 // loop_exit
                _
            $region67: #{_lambda_.5} parent=62 // pred_fallthru
              _
            // Predicated region
            $region75: #{_lambda_.5} parent=62 // pred_check
              _
            $region76: #{_lambda_.5} parent=62 // pred_check_branch
              %852 = sbr.rel target = $region78
            $region77: #{_lambda_.5} parent=62 // pred_region
              _
            $region78: #{_lambda_.5} parent=62 // pred_fallthru
              _
          $region63: #{_lambda_.5} parent=58 // pred_fallthru
            _
          %853 = vnop
        $region59: #{_lambda_.5} parent=50 // pred_fallthru
          _
      $region51: #{_lambda_.5} parent=5 // pred_fallthru
        _
      %p854 = scmp.le.s32.totalorder 2, %s9
      // Predicated region
      $region79: #{_lambda_.5} parent=5 // pred_check
        %p855 = pneg %p854
      $region80: #{_lambda_.5} parent=5 // pred_check_branch
        %857 = sbr.rel (%p855) target = $region82
      $region81: #{_lambda_.5} parent=5 // pred_region
        %s858 = ssub.s32 %s9, 2
        // Predicated region
        $region83: #{_lambda_.5} parent=81 // pred_check
          %p859 = pneg %p122
        $region84: #{_lambda_.5} parent=81 // pred_check_branch
          %861 = sbr.rel (%p859) target = $region86
        $region85: #{_lambda_.5} parent=81 // pred_region
          %s862 = sand.u32 %s107, 1
          %s863 = sand.u32 %s107, 1
          %s864 = smul.addr %s863, 64
          %s865 = scalar_lea.vmem [#allocation3], %s864
        $region86: #{_lambda_.5} parent=81 // pred_fallthru
          _
      $region82: #{_lambda_.5} parent=5 // pred_fallthru
        _
    $region6: #{_lambda_.5} parent=1 // loop_footer
      %s13 = sadd.s32 1, %s9
    $region7: #{_lambda_.5} parent=1 // loop_footer_branch
      %8 = sbr.rel target = $region3
    $region8: #{_lambda_.5} parent=1 // loop_exit
      _

// kernel: _lambda_.6
$region0: #{_lambda_.6}
  #allocation0 [shape = 'u32[]', space=smem, size = 0x4, offset = 0x4, fixed_abs, tag = 'smem constant byte address 0x4 - core index']
  #allocation1 [shape = 'u32[144,128]{1,0:T(1,128)}', space=vmem, size = 0x12000, scoped, tag = 'internal scratch']
  %s0 = inlined_call_operand.vmem [shape: bf16[2,400,1024], index: 0, kind: input, shape index: {}]
  %s1 = inlined_call_operand.vmem [shape: bf16[32,400], index: 1, kind: input, shape index: {}]
  %s2 = inlined_call_operand.vmem [shape: f32[32,1], index: 2, kind: input, shape index: {}]
  %s3 = inlined_call_operand.vmem [shape: bf16[2,32,1024], index: 3, kind: output, shape index: {}]
  %s4 = sld [smem:[#allocation0]]
  $region45: #{_lambda_.6} parent=0
    _
  %s6 = ssub.s32 1, %s4
  %s7 = scalar_select 0, %s6, %s4
  loop: start=0, step=1, limit=4
  $region2: #{_lambda_.6} parent=0 // loop_pre_header
    _
  $region3: #{_lambda_.6} parent=0 // loop_header
    %s9 = sphi 0, %s13
    %p10 = scmp.ge.s32.totalorder %s9, 4
    %s16 = sphi 0, %s28
    %s17 = sphi 0, %s24
    %s18 = sphi 0, %s16
    %s19 = sphi 0, %s17
    %s20 = sphi 0, %s18
    %s21 = sphi 0, %s19
    %s33 = sphi 0, %s35
    %s36 = sphi 0, %s33
    %s37 = sphi 0, %s36
    %s53 = sphi 0, %s37
    %s57 = sphi 0, %s57
    %s59 = sphi 0, %s57
    %s60 = sphi 0, %s59
    %s74 = sphi 0, %s60
    %s78 = sphi 0, %s78
    %s80 = sphi 0, %s78
    %s81 = sphi 0, %s80
    %s95 = sphi 0, %s81
    %s103 = sphi 0, %s105
    %s106 = sphi 0, %s103
    %s107 = sphi 0, %s106
    %s123 = sphi 0, %s107
  $region4: #{_lambda_.6} parent=0 // loop_header_branch
    %12 = sbr.rel (%p10) target = $region8
  $region5: #{_lambda_.6} parent=0 // loop_body
    %s14 = ssub.s32 %s9, 1
    %s15 = ssub.s32 %s9, 2
    %s22 = sadd.s32 1, %s17
    %p23 = scmp.ge.s32.totalorder %s22, 1
    %s24 = scalar_select %p23, 0, %s22
    %s25 = sadd.s32 1, %s16
    %s26 = scalar_select %p23, %s25, %s16
    %p27 = scmp.ge.s32.totalorder %s26, 2
    %s28 = scalar_select %p27, 0, %s26
    %s29 = ssub.s32 %s16, %s28
    %s30 = ssub.s32 %s17, %s24
    %s31 = sor.u32 %s29, %s30
    %p32 = scmp.eq.s32.totalorder %s31, 0
    %s34 = sadd.s32 %s33, 1
    %s35 = scalar_select %p32, %s33, %s34
    %p38 = pneg %p32
    %p39 = scmp.eq.s32.totalorder %s9, 1
    %p40 = por %p38, %p39
    %p41 = scmp.ne.s32.totalorder %s33, %s36
    %p42 = scmp.eq.s32.totalorder %s9, 0
    %p43 = por %p41, %p42
    %p44 = scmp.ne.s32.totalorder %s33, %s36
    %p45 = scmp.eq.s32.totalorder %s14, 1
    %p46 = por %p44, %p45
    %p47 = scmp.ne.s32.totalorder %s36, %s37
    %p48 = scmp.eq.s32.totalorder %s14, 0
    %p49 = por %p47, %p48
    %p50 = scmp.ne.s32.totalorder %s36, %s37
    %p51 = scmp.eq.s32.totalorder %s15, 1
    %p52 = por %p50, %p51
    %p54 = scmp.ne.s32.totalorder %s37, %s53
    %p55 = scmp.eq.s32.totalorder %s15, 0
    %p56 = por %p54, %p55
    %s58 = sadd.s32 %s57, 1
    %p61 = scmp.eq.s32.totalorder %s9, 1
    %p62 = scmp.ne.s32.totalorder %s57, %s59
    %p63 = scmp.eq.s32.totalorder %s9, 0
    %p64 = por %p62, %p63
    %p65 = scmp.ne.s32.totalorder %s57, %s59
    %p66 = scmp.eq.s32.totalorder %s14, 1
    %p67 = por %p65, %p66
    %p68 = scmp.ne.s32.totalorder %s59, %s60
    %p69 = scmp.eq.s32.totalorder %s14, 0
    %p70 = por %p68, %p69
    %p71 = scmp.ne.s32.totalorder %s59, %s60
    %p72 = scmp.eq.s32.totalorder %s15, 1
    %p73 = por %p71, %p72
    %p75 = scmp.ne.s32.totalorder %s60, %s74
    %p76 = scmp.eq.s32.totalorder %s15, 0
    %p77 = por %p75, %p76
    %s79 = sadd.s32 %s78, 1
    %p82 = scmp.eq.s32.totalorder %s9, 1
    %p83 = scmp.ne.s32.totalorder %s78, %s80
    %p84 = scmp.eq.s32.totalorder %s9, 0
    %p85 = por %p83, %p84
    %p86 = scmp.ne.s32.totalorder %s78, %s80
    %p87 = scmp.eq.s32.totalorder %s14, 1
    %p88 = por %p86, %p87
    %p89 = scmp.ne.s32.totalorder %s80, %s81
    %p90 = scmp.eq.s32.totalorder %s14, 0
    %p91 = por %p89, %p90
    %p92 = scmp.ne.s32.totalorder %s80, %s81
    %p93 = scmp.eq.s32.totalorder %s15, 1
    %p94 = por %p92, %p93
    %p96 = scmp.ne.s32.totalorder %s81, %s95
    %p97 = scmp.eq.s32.totalorder %s15, 0
    %p98 = por %p96, %p97
    %s99 = ssub.s32 %s16, %s28
    %s100 = ssub.s32 %s17, %s24
    %s101 = sor.u32 %s99, %s100
    %p102 = scmp.eq.s32.totalorder %s101, 0
    %s104 = sadd.s32 %s103, 1
    %s105 = scalar_select %p102, %s103, %s104
    %p108 = pneg %p102
    %p109 = scmp.eq.s32.totalorder %s9, 1
    %p110 = por %p108, %p109
    %p111 = scmp.ne.s32.totalorder %s103, %s106
    %p112 = scmp.eq.s32.totalorder %s9, 0
    %p113 = por %p111, %p112
    %p114 = scmp.ne.s32.totalorder %s103, %s106
    %p115 = scmp.eq.s32.totalorder %s14, 1
    %p116 = por %p114, %p115
    %p117 = scmp.ne.s32.totalorder %s106, %s107
    %p118 = scmp.eq.s32.totalorder %s14, 0
    %p119 = por %p117, %p118
    %p120 = scmp.ne.s32.totalorder %s106, %s107
    %p121 = scmp.eq.s32.totalorder %s15, 1
    %p122 = por %p120, %p121
    %p124 = scmp.ne.s32.totalorder %s107, %s123
    %p125 = scmp.eq.s32.totalorder %s15, 0
    %p126 = por %p124, %p125
    %p127 = scmp.le.s32.totalorder 1, %s9
    %p128 = scmp.lt.s32.totalorder %s9, 3
    %p129 = pnand %p127, %p128
    %p130 = pneg %p129
    // Predicated region
    $region9: #{_lambda_.6} parent=5 // pred_check
      _
    $region10: #{_lambda_.6} parent=5 // pred_check_branch
      %132 = sbr.rel (%p129) target = $region12
    $region11: #{_lambda_.6} parent=5 // pred_region
      %s133 = ssub.s32 %s9, 1
      // Predicated region
      $region13: #{_lambda_.6} parent=11 // pred_check
        %p134 = pneg %p70
      $region14: #{_lambda_.6} parent=11 // pred_check_branch
        %136 = sbr.rel (%p134) target = $region16
      $region15: #{_lambda_.6} parent=11 // pred_region
        _
      $region16: #{_lambda_.6} parent=11 // pred_fallthru
        _
      // Predicated region
      $region17: #{_lambda_.6} parent=11 // pred_check
        %p137 = pneg %p91
      $region18: #{_lambda_.6} parent=11 // pred_check_branch
        %139 = sbr.rel (%p137) target = $region20
      $region19: #{_lambda_.6} parent=11 // pred_region
        _
      $region20: #{_lambda_.6} parent=11 // pred_fallthru
        _
    $region12: #{_lambda_.6} parent=5 // pred_fallthru
      _
    %p140 = scmp.lt.s32.totalorder %s9, 2
    // Predicated region
    $region21: #{_lambda_.6} parent=5 // pred_check
      %p141 = pneg %p140
    $region22: #{_lambda_.6} parent=5 // pred_check_branch
      %143 = sbr.rel (%p141) target = $region24
    $region23: #{_lambda_.6} parent=5 // pred_region
      // Predicated region
      $region25: #{_lambda_.6} parent=23 // pred_check
        %p144 = pneg %p43
      $region26: #{_lambda_.6} parent=23 // pred_check_branch
        %146 = sbr.rel (%p144) target = $region28
      $region27: #{_lambda_.6} parent=23 // pred_region
        %s147 = smul.u32 8, %s17
        %p148 = scmp.lt.s32.totalorder %s16, 1
        %s149 = scalar_select %p148, %s16, 1
        %p150 = scmp.lt.s32.totalorder %s147, 7
        %s151 = scalar_select %p150, %s147, 7
        %s152 = smul.addr %s149, 400
        %s153 = sadd.s32 %s151, %s152
        %s154 = smul.addr %s153, 4
        %s155 = scalar_lea.vmem %s0, %s154
        %s156 = smul.u32 8, %s17
      $region28: #{_lambda_.6} parent=23 // pred_fallthru
        _
    $region24: #{_lambda_.6} parent=5 // pred_fallthru
      _
    %p157 = scmp.le.s32.totalorder 1, %s9
    %p158 = scmp.lt.s32.totalorder %s9, 3
    %p159 = pnand %p157, %p158
    %p160 = pneg %p159
    // Predicated region
    $region29: #{_lambda_.6} parent=5 // pred_check
      _
    $region30: #{_lambda_.6} parent=5 // pred_check_branch
      %162 = sbr.rel (%p159) target = $region32
    $region31: #{_lambda_.6} parent=5 // pred_region
      %s163 = ssub.s32 %s9, 1
      %s164 = smul.u32 8, %s19
      %p165 = scmp.lt.s32.totalorder %s18, 1
      %s166 = scalar_select %p165, %s18, 1
      %p167 = scmp.lt.s32.totalorder %s164, 7
      %s168 = scalar_select %p167, %s164, 7
      %s169 = smul.addr %s166, 400
      %s170 = sadd.s32 %s168, %s169
      %s171 = smul.addr %s170, 4
      %s172 = scalar_lea.vmem %s0, %s171
      %p173 = pneg %p49
      %p174 = pneg %p46
      %p175 = pneg %p70
      %p176 = pneg %p67
      %p177 = pneg %p91
      %p178 = pneg %p88
      %p179 = pneg %p119
      %p180 = pneg %p116
      %s181 = smul.u32 8, %s19
      %p182 = scmp.lt.s32.totalorder %s18, 1
      %s183 = scalar_select %p182, %s18, 1
      %p184 = scmp.lt.s32.totalorder %s181, 7
      %s185 = scalar_select %p184, %s181, 7
      %s186 = smul.addr %s183, 32
      %s187 = sadd.s32 %s185, %s186
      %s188 = smul.addr %s187, 4
      %s189 = scalar_lea.vmem %s3, %s188
      %s190 = smul.u32 8, %s19
      %p191 = scmp.lt.s32.totalorder %s18, 1
      %s192 = scalar_select %p191, %s18, 1
      %p193 = scmp.lt.s32.totalorder %s190, 7
      %s194 = scalar_select %p193, %s190, 7
      %s195 = smul.addr %s192, 400
      %s196 = sadd.s32 %s194, %s195
      %s197 = smul.addr %s196, 4
      %s198 = scalar_lea.vmem %s0, %s197
      %s199 = smul.u32 8, %s19
      %s200 = smul.u32 8, %s19
      %p201 = scmp.lt.s32.totalorder %s18, 1
      %s202 = scalar_select %p201, %s18, 1
      %p203 = scmp.lt.s32.totalorder %s200, 7
      %s204 = scalar_select %p203, %s200, 7
      %s205 = smul.addr %s202, 32
      %s206 = sadd.s32 %s204, %s205
      %s207 = smul.addr %s206, 4
      %s208 = scalar_lea.vmem %s3, %s207
      %s209 = smul.u32 8, %s19
      %v211 = vld [vmem:[%s1] sm:$0xff]
      %v212 = vld [vmem:[%s1 + $0x8] sm:$0xff]
      %v213 = vld [vmem:[%s1 + $0x10] sm:$0xff]
      %v214 = vld [vmem:[%s1 + $0x18] sm:$0xff]
      %v215 = vld [vmem:[%s1 + $0x20] sm:$0xff]
      %v216 = vld [vmem:[%s1 + $0x28] sm:$0xff]
      %v217 = vld [vmem:[%s1 + $0x30] sm:$0xff]
      %v218 = vld [vmem:[%s1 + $0x38] sm:$0xff]
      %v219 = vld [vmem:[%s198] sm:$0xff]
      %v220 = vld [vmem:[%s198 + $0x8] sm:$0xff]
      %v221 = vld [vmem:[%s198 + $0x10] sm:$0xff]
      %v222 = vld [vmem:[%s198 + $0x18] sm:$0xff]
      %v223 = vld [vmem:[%s198 + $0x20] sm:$0xff]
      %v224 = vld [vmem:[%s198 + $0x28] sm:$0xff]
      %v225 = vld [vmem:[%s198 + $0x30] sm:$0xff]
      %v226 = vld [vmem:[%s198 + $0x38] sm:$0xff]
      %v227 = vld [vmem:[%s198 + $0x40] sm:$0xff]
      %v228 = vld [vmem:[%s198 + $0x48] sm:$0xff]
      %v229 = vld [vmem:[%s198 + $0x50] sm:$0xff]
      %v230 = vld [vmem:[%s198 + $0x58] sm:$0xff]
      %v231 = vld [vmem:[%s198 + $0x60] sm:$0xff]
      %v232 = vld [vmem:[%s198 + $0x68] sm:$0xff]
      %v233 = vld [vmem:[%s198 + $0x70] sm:$0xff]
      %v234 = vld [vmem:[%s198 + $0x78] sm:$0xff]
      %v235 = vld [vmem:[%s198 + $0x80] sm:$0xff]
      %v236 = vld [vmem:[%s198 + $0x88] sm:$0xff]
      %v237 = vld [vmem:[%s198 + $0x90] sm:$0xff]
      %v238 = vld [vmem:[%s198 + $0x98] sm:$0xff]
      %v239 = vld [vmem:[%s198 + $0xa0] sm:$0xff]
      %v240 = vld [vmem:[%s198 + $0xa8] sm:$0xff]
      %v241 = vld [vmem:[%s198 + $0xb0] sm:$0xff]
      %v242 = vld [vmem:[%s198 + $0xb8] sm:$0xff]
      %v243 = vld [vmem:[%s198 + $0xc0] sm:$0xff]
      %v244 = vld [vmem:[%s198 + $0xc8] sm:$0xff]
      %v245 = vld [vmem:[%s198 + $0xd0] sm:$0xff]
      %v246 = vld [vmem:[%s198 + $0xd8] sm:$0xff]
      %v247 = vld [vmem:[%s198 + $0xe0] sm:$0xff]
      %v248 = vld [vmem:[%s198 + $0xe8] sm:$0xff]
      %v249 = vld [vmem:[%s198 + $0xf0] sm:$0xff]
      %v250 = vld [vmem:[%s198 + $0xf8] sm:$0xff]
      %v251 = vld [vmem:[%s198 + $0x100] sm:$0xff]
      %v252 = vld [vmem:[%s198 + $0x108] sm:$0xff]
      %v253 = vld [vmem:[%s198 + $0x110] sm:$0xff]
      %v254 = vld [vmem:[%s198 + $0x118] sm:$0xff]
      %v255 = vld [vmem:[%s198 + $0x120] sm:$0xff]
      %v256 = vld [vmem:[%s198 + $0x128] sm:$0xff]
      %v257 = vld [vmem:[%s198 + $0x130] sm:$0xff]
      %v258 = vld [vmem:[%s198 + $0x138] sm:$0xff]
      %v259 = vld [vmem:[%s198 + $0x140] sm:$0xff]
      %v260 = vld [vmem:[%s198 + $0x148] sm:$0xff]
      %v261 = vld [vmem:[%s198 + $0x150] sm:$0xff]
      %v262 = vld [vmem:[%s198 + $0x158] sm:$0xff]
      %v263 = vld [vmem:[%s198 + $0x160] sm:$0xff]
      %v264 = vld [vmem:[%s198 + $0x168] sm:$0xff]
      %v265 = vld [vmem:[%s198 + $0x170] sm:$0xff]
      %v266 = vld [vmem:[%s198 + $0x178] sm:$0xff]
      %v267 = vld [vmem:[%s198 + $0x180] sm:$0xff]
      %v268 = vld [vmem:[%s198 + $0x188] sm:$0xff]
      %v269 = vld [vmem:[%s198 + $0x190] sm:$0xff]
      %v270 = vld [vmem:[%s198 + $0x198] sm:$0xff]
      %v271 = vld [vmem:[%s198 + $0x1a0] sm:$0xff]
      %v272 = vld [vmem:[%s198 + $0x1a8] sm:$0xff]
      %v273 = vld [vmem:[%s198 + $0x1b0] sm:$0xff]
      %v274 = vld [vmem:[%s198 + $0x1b8] sm:$0xff]
      %v275 = vld [vmem:[%s198 + $0x1c0] sm:$0xff]
      %v276 = vld [vmem:[%s198 + $0x1c8] sm:$0xff]
      %v277 = vld [vmem:[%s198 + $0x1d0] sm:$0xff]
      %v278 = vld [vmem:[%s198 + $0x1d8] sm:$0xff]
      %v279 = vld [vmem:[%s198 + $0x1e0] sm:$0xff]
      %v280 = vld [vmem:[%s198 + $0x1e8] sm:$0xff]
      %v281 = vld [vmem:[%s198 + $0x1f0] sm:$0xff]
      %v282 = vld [vmem:[%s198 + $0x1f8] sm:$0xff]
      %v283 = vld [vmem:[%s198 + $0x200] sm:$0xff]
      %v284 = vld [vmem:[%s198 + $0x208] sm:$0xff]
      %v285 = vld [vmem:[%s198 + $0x210] sm:$0xff]
      %v286 = vld [vmem:[%s198 + $0x218] sm:$0xff]
      %v287 = vld [vmem:[%s198 + $0x220] sm:$0xff]
      %v288 = vld [vmem:[%s198 + $0x228] sm:$0xff]
      %v289 = vld [vmem:[%s198 + $0x230] sm:$0xff]
      %v290 = vld [vmem:[%s198 + $0x238] sm:$0xff]
      %v291 = vld [vmem:[%s198 + $0x240] sm:$0xff]
      %v292 = vld [vmem:[%s198 + $0x248] sm:$0xff]
      %v293 = vld [vmem:[%s198 + $0x250] sm:$0xff]
      %v294 = vld [vmem:[%s198 + $0x258] sm:$0xff]
      %v295 = vld [vmem:[%s198 + $0x260] sm:$0xff]
      %v296 = vld [vmem:[%s198 + $0x268] sm:$0xff]
      %v297 = vld [vmem:[%s198 + $0x270] sm:$0xff]
      %v298 = vld [vmem:[%s198 + $0x278] sm:$0xff]
      %v299 = vld [vmem:[%s198 + $0x280] sm:$0xff]
      %v300 = vld [vmem:[%s198 + $0x288] sm:$0xff]
      %v301 = vld [vmem:[%s198 + $0x290] sm:$0xff]
      %v302 = vld [vmem:[%s198 + $0x298] sm:$0xff]
      %v303 = vld [vmem:[%s198 + $0x2a0] sm:$0xff]
      %v304 = vld [vmem:[%s198 + $0x2a8] sm:$0xff]
      %v305 = vld [vmem:[%s198 + $0x2b0] sm:$0xff]
      %v306 = vld [vmem:[%s198 + $0x2b8] sm:$0xff]
      %v307 = vld [vmem:[%s198 + $0x2c0] sm:$0xff]
      %v308 = vld [vmem:[%s198 + $0x2c8] sm:$0xff]
      %v309 = vld [vmem:[%s198 + $0x2d0] sm:$0xff]
      %v310 = vld [vmem:[%s198 + $0x2d8] sm:$0xff]
      %v311 = vld [vmem:[%s198 + $0x2e0] sm:$0xff]
      %v312 = vld [vmem:[%s198 + $0x2e8] sm:$0xff]
      %v313 = vld [vmem:[%s198 + $0x2f0] sm:$0xff]
      %v314 = vld [vmem:[%s198 + $0x2f8] sm:$0xff]
      %v315 = vld [vmem:[%s198 + $0x300] sm:$0xff]
      %v316 = vld [vmem:[%s198 + $0x308] sm:$0xff]
      %v317 = vld [vmem:[%s198 + $0x310] sm:$0xff]
      %v318 = vld [vmem:[%s198 + $0x318] sm:$0xff]
      %v319 = vld [vmem:[%s198 + $0x320] sm:$0xff]
      %v320 = vld [vmem:[%s198 + $0x328] sm:$0xff]
      %v321 = vld [vmem:[%s198 + $0x330] sm:$0xff]
      %v322 = vld [vmem:[%s198 + $0x338] sm:$0xff]
      %v323 = vld [vmem:[%s198 + $0x340] sm:$0xff]
      %v324 = vld [vmem:[%s198 + $0x348] sm:$0xff]
      %v325 = vld [vmem:[%s198 + $0x350] sm:$0xff]
      %v326 = vld [vmem:[%s198 + $0x358] sm:$0xff]
      %v327 = vld [vmem:[%s198 + $0x360] sm:$0xff]
      %v328 = vld [vmem:[%s198 + $0x368] sm:$0xff]
      %v329 = vld [vmem:[%s198 + $0x370] sm:$0xff]
      %v330 = vld [vmem:[%s198 + $0x378] sm:$0xff]
      %v331 = vld [vmem:[%s198 + $0x380] sm:$0xff]
      %v332 = vld [vmem:[%s198 + $0x388] sm:$0xff]
      %v333 = vld [vmem:[%s198 + $0x390] sm:$0xff]
      %v334 = vld [vmem:[%s198 + $0x398] sm:$0xff]
      %v335 = vld [vmem:[%s198 + $0x3a0] sm:$0xff]
      %v336 = vld [vmem:[%s198 + $0x3a8] sm:$0xff]
      %v337 = vld [vmem:[%s198 + $0x3b0] sm:$0xff]
      %v338 = vld [vmem:[%s198 + $0x3b8] sm:$0xff]
      %v339 = vld [vmem:[%s198 + $0x3c0] sm:$0xff]
      %v340 = vld [vmem:[%s198 + $0x3c8] sm:$0xff]
      %v341 = vld [vmem:[%s198 + $0x3d0] sm:$0xff]
      %v342 = vld [vmem:[%s198 + $0x3d8] sm:$0xff]
      %v343 = vld [vmem:[%s198 + $0x3e0] sm:$0xff]
      %v344 = vld [vmem:[%s198 + $0x3e8] sm:$0xff]
      %v345 = vld [vmem:[%s198 + $0x3f0] sm:$0xff]
      %v346 = vld [vmem:[%s198 + $0x3f8] sm:$0xff]
      %v347 = vld [vmem:[%s198 + $0x400] sm:$0xff]
      %v348 = vld [vmem:[%s198 + $0x408] sm:$0xff]
      %v349 = vld [vmem:[%s198 + $0x410] sm:$0xff]
      %v350 = vld [vmem:[%s198 + $0x418] sm:$0xff]
      %v351 = vld [vmem:[%s198 + $0x420] sm:$0xff]
      %v352 = vld [vmem:[%s198 + $0x428] sm:$0xff]
      %v353 = vld [vmem:[%s198 + $0x430] sm:$0xff]
      %v354 = vld [vmem:[%s198 + $0x438] sm:$0xff]
      %v355 = vld [vmem:[%s198 + $0x440] sm:$0xff]
      %v356 = vld [vmem:[%s198 + $0x448] sm:$0xff]
      %v357 = vld [vmem:[%s198 + $0x450] sm:$0xff]
      %v358 = vld [vmem:[%s198 + $0x458] sm:$0xff]
      %v359 = vld [vmem:[%s198 + $0x460] sm:$0xff]
      %v360 = vld [vmem:[%s198 + $0x468] sm:$0xff]
      %v361 = vld [vmem:[%s198 + $0x470] sm:$0xff]
      %v362 = vld [vmem:[%s198 + $0x478] sm:$0xff]
      %v363 = vld [vmem:[%s198 + $0x480] sm:$0xff]
      %v364 = vld [vmem:[%s198 + $0x488] sm:$0xff]
      %v365 = vld [vmem:[%s198 + $0x490] sm:$0xff]
      %v366 = vld [vmem:[%s198 + $0x498] sm:$0xff]
      %v367 = vld [vmem:[%s198 + $0x4a0] sm:$0xff]
      %v368 = vld [vmem:[%s198 + $0x4a8] sm:$0xff]
      %v369 = vld [vmem:[%s198 + $0x4b0] sm:$0xff]
      %v370 = vld [vmem:[%s198 + $0x4b8] sm:$0xff]
      %v371 = vld [vmem:[%s198 + $0x4c0] sm:$0xff]
      %v372 = vld [vmem:[%s198 + $0x4c8] sm:$0xff]
      %v373 = vld [vmem:[%s198 + $0x4d0] sm:$0xff]
      %v374 = vld [vmem:[%s198 + $0x4d8] sm:$0xff]
      %v375 = vld [vmem:[%s198 + $0x4e0] sm:$0xff]
      %v376 = vld [vmem:[%s198 + $0x4e8] sm:$0xff]
      %v377 = vld [vmem:[%s198 + $0x4f0] sm:$0xff]
      %v378 = vld [vmem:[%s198 + $0x4f8] sm:$0xff]
      %v379 = vld [vmem:[%s198 + $0x500] sm:$0xff]
      %v380 = vld [vmem:[%s198 + $0x508] sm:$0xff]
      %v381 = vld [vmem:[%s198 + $0x510] sm:$0xff]
      %v382 = vld [vmem:[%s198 + $0x518] sm:$0xff]
      %v383 = vld [vmem:[%s198 + $0x520] sm:$0xff]
      %v384 = vld [vmem:[%s198 + $0x528] sm:$0xff]
      %v385 = vld [vmem:[%s198 + $0x530] sm:$0xff]
      %v386 = vld [vmem:[%s198 + $0x538] sm:$0xff]
      %v387 = vld [vmem:[%s198 + $0x540] sm:$0xff]
      %v388 = vld [vmem:[%s198 + $0x548] sm:$0xff]
      %v389 = vld [vmem:[%s198 + $0x550] sm:$0xff]
      %v390 = vld [vmem:[%s198 + $0x558] sm:$0xff]
      %v391 = vld [vmem:[%s198 + $0x560] sm:$0xff]
      %v392 = vld [vmem:[%s198 + $0x568] sm:$0xff]
      %v393 = vld [vmem:[%s198 + $0x570] sm:$0xff]
      %v394 = vld [vmem:[%s198 + $0x578] sm:$0xff]
      %v395 = vld [vmem:[%s198 + $0x580] sm:$0xff]
      %v396 = vld [vmem:[%s198 + $0x588] sm:$0xff]
      %v397 = vld [vmem:[%s198 + $0x590] sm:$0xff]
      %v398 = vld [vmem:[%s198 + $0x598] sm:$0xff]
      %v399 = vld [vmem:[%s198 + $0x5a0] sm:$0xff]
      %v400 = vld [vmem:[%s198 + $0x5a8] sm:$0xff]
      %v401 = vld [vmem:[%s198 + $0x5b0] sm:$0xff]
      %v402 = vld [vmem:[%s198 + $0x5b8] sm:$0xff]
      %v403 = vld [vmem:[%s198 + $0x5c0] sm:$0xff]
      %v404 = vld [vmem:[%s198 + $0x5c8] sm:$0xff]
      %v405 = vld [vmem:[%s198 + $0x5d0] sm:$0xff]
      %v406 = vld [vmem:[%s198 + $0x5d8] sm:$0xff]
      %v407 = vld [vmem:[%s198 + $0x5e0] sm:$0xff]
      %v408 = vld [vmem:[%s198 + $0x5e8] sm:$0xff]
      %v409 = vld [vmem:[%s198 + $0x5f0] sm:$0xff]
      %v410 = vld [vmem:[%s198 + $0x5f8] sm:$0xff]
      %v411 = vld [vmem:[%s198 + $0x600] sm:$0xff]
      %v412 = vld [vmem:[%s198 + $0x608] sm:$0xff]
      %v413 = vld [vmem:[%s198 + $0x610] sm:$0xff]
      %v414 = vld [vmem:[%s198 + $0x618] sm:$0xff]
      %v415 = vld [vmem:[%s198 + $0x620] sm:$0xff]
      %v416 = vld [vmem:[%s198 + $0x628] sm:$0xff]
      %v417 = vld [vmem:[%s198 + $0x630] sm:$0xff]
      %v418 = vld [vmem:[%s198 + $0x638] sm:$0xff]
      %v419 = vld [vmem:[%s2] sm:$0xff]
      %v420 = vld [vmem:[%s2 + $0x8] sm:$0xff]
      %v421 = vld [vmem:[%s2 + $0x10] sm:$0xff]
      %v422 = vld [vmem:[%s2 + $0x18] sm:$0xff]
      %424 = vset.pattern.permute.xlu0 0
      %425 = vperm.xlu0 %424, %v419
      %v426 = vpop.permute.xlu0 %425
      %429 = vset.pattern.permute.xlu0 0
      %430 = vperm.xlu0 %429, %v420
      %v431 = vpop.permute.xlu0 %430
      %434 = vset.pattern.permute.xlu0 0
      %435 = vperm.xlu0 %434, %v421
      %v436 = vpop.permute.xlu0 %435
      %439 = vset.pattern.permute.xlu0 0
      %440 = vperm.xlu0 %439, %v422
      %v441 = vpop.permute.xlu0 %440
      %v451 = vunpack.c.l.b16 %v211
      %v452 = vunpack.c.h.b16 %v211
      %v453 = vunpack.c.l.b16 %v212
      %v454 = vunpack.c.h.b16 %v212
      %v455 = vunpack.c.l.b16 %v213
      %v456 = vunpack.c.h.b16 %v213
      %v457 = vunpack.c.l.b16 %v214
      %v458 = vunpack.c.h.b16 %v214
      %v459 = vunpack.c.l.b16 %v215
      %v460 = vunpack.c.h.b16 %v215
      %v461 = vunpack.c.l.b16 %v216
      %v462 = vunpack.c.h.b16 %v216
      %v463 = vunpack.c.l.b16 %v217
      %v464 = vunpack.c.h.b16 %v217
      %v465 = vunpack.c.l.b16 %v218
      %v466 = vunpack.c.h.b16 %v218
      %v467 = vpack.c.b16 %v455, %v451
      %v468 = vpack.c.b16 %v456, %v452
      %v469 = vpack.c.b16 %v457, %v453
      %v470 = vpack.c.b16 %v458, %v454
      %v471 = vpack.c.b16 %v463, %v459
      %v472 = vpack.c.b16 %v464, %v460
      %v473 = vpack.c.b16 %v465, %v461
      %v474 = vpack.c.b16 %v466, %v462
      %v681 = vunpack.c.l.b16 %v219
      %v682 = vunpack.c.h.b16 %v219
      %v683 = vunpack.c.l.b16 %v220
      %v684 = vunpack.c.h.b16 %v220
      %v685 = vunpack.c.l.b16 %v221
      %v686 = vunpack.c.h.b16 %v221
      %v687 = vunpack.c.l.b16 %v222
      %v688 = vunpack.c.h.b16 %v222
      %v689 = vunpack.c.l.b16 %v223
      %v690 = vunpack.c.h.b16 %v223
      %v691 = vunpack.c.l.b16 %v224
      %v692 = vunpack.c.h.b16 %v224
      %v693 = vunpack.c.l.b16 %v225
      %v694 = vunpack.c.h.b16 %v225
      %v695 = vunpack.c.l.b16 %v226
      %v696 = vunpack.c.h.b16 %v226
      %v697 = vunpack.c.l.b16 %v227
      %v698 = vunpack.c.h.b16 %v227
      %v699 = vunpack.c.l.b16 %v228
      %v700 = vunpack.c.h.b16 %v228
      %v701 = vunpack.c.l.b16 %v229
      %v702 = vunpack.c.h.b16 %v229
      %v703 = vunpack.c.l.b16 %v230
      %v704 = vunpack.c.h.b16 %v230
      %v705 = vunpack.c.l.b16 %v231
      %v706 = vunpack.c.h.b16 %v231
      %v707 = vunpack.c.l.b16 %v232
      %v708 = vunpack.c.h.b16 %v232
      %v709 = vunpack.c.l.b16 %v233
      %v710 = vunpack.c.h.b16 %v233
      %v711 = vunpack.c.l.b16 %v234
      %v712 = vunpack.c.h.b16 %v234
      %v713 = vunpack.c.l.b16 %v235
      %v714 = vunpack.c.h.b16 %v235
      %v715 = vunpack.c.l.b16 %v236
      %v716 = vunpack.c.h.b16 %v236
      %v717 = vunpack.c.l.b16 %v237
      %v718 = vunpack.c.h.b16 %v237
      %v719 = vunpack.c.l.b16 %v238
      %v720 = vunpack.c.h.b16 %v238
      %v721 = vunpack.c.l.b16 %v239
      %v722 = vunpack.c.h.b16 %v239
      %v723 = vunpack.c.l.b16 %v240
      %v724 = vunpack.c.h.b16 %v240
      %v725 = vunpack.c.l.b16 %v241
      %v726 = vunpack.c.h.b16 %v241
      %v727 = vunpack.c.l.b16 %v242
      %v728 = vunpack.c.h.b16 %v242
      %v729 = vunpack.c.l.b16 %v243
      %v730 = vunpack.c.h.b16 %v243
      %v731 = vunpack.c.l.b16 %v244
      %v732 = vunpack.c.h.b16 %v244
      %v733 = vunpack.c.l.b16 %v245
      %v734 = vunpack.c.h.b16 %v245
      %v735 = vunpack.c.l.b16 %v246
      %v736 = vunpack.c.h.b16 %v246
      %v737 = vunpack.c.l.b16 %v247
      %v738 = vunpack.c.h.b16 %v247
      %v739 = vunpack.c.l.b16 %v248
      %v740 = vunpack.c.h.b16 %v248
      %v741 = vunpack.c.l.b16 %v249
      %v742 = vunpack.c.h.b16 %v249
      %v743 = vunpack.c.l.b16 %v250
      %v744 = vunpack.c.h.b16 %v250
      %v745 = vunpack.c.l.b16 %v251
      %v746 = vunpack.c.h.b16 %v251
      %v747 = vunpack.c.l.b16 %v252
      %v748 = vunpack.c.h.b16 %v252
      %v749 = vunpack.c.l.b16 %v253
      %v750 = vunpack.c.h.b16 %v253
      %v751 = vunpack.c.l.b16 %v254
      %v752 = vunpack.c.h.b16 %v254
      %v753 = vunpack.c.l.b16 %v255
      %v754 = vunpack.c.h.b16 %v255
      %v755 = vunpack.c.l.b16 %v256
      %v756 = vunpack.c.h.b16 %v256
      %v757 = vunpack.c.l.b16 %v257
      %v758 = vunpack.c.h.b16 %v257
      %v759 = vunpack.c.l.b16 %v258
      %v760 = vunpack.c.h.b16 %v258
      %v761 = vunpack.c.l.b16 %v259
      %v762 = vunpack.c.h.b16 %v259
      %v763 = vunpack.c.l.b16 %v260
      %v764 = vunpack.c.h.b16 %v260
      %v765 = vunpack.c.l.b16 %v261
      %v766 = vunpack.c.h.b16 %v261
      %v767 = vunpack.c.l.b16 %v262
      %v768 = vunpack.c.h.b16 %v262
      %v769 = vunpack.c.l.b16 %v263
      %v770 = vunpack.c.h.b16 %v263
      %v771 = vunpack.c.l.b16 %v264
      %v772 = vunpack.c.h.b16 %v264
      %v773 = vunpack.c.l.b16 %v265
      %v774 = vunpack.c.h.b16 %v265
      %v775 = vunpack.c.l.b16 %v266
      %v776 = vunpack.c.h.b16 %v266
      %v777 = vunpack.c.l.b16 %v267
      %v778 = vunpack.c.h.b16 %v267
      %v779 = vunpack.c.l.b16 %v268
      %v780 = vunpack.c.h.b16 %v268
      %v781 = vunpack.c.l.b16 %v269
      %v782 = vunpack.c.h.b16 %v269
      %v783 = vunpack.c.l.b16 %v270
      %v784 = vunpack.c.h.b16 %v270
      %v785 = vunpack.c.l.b16 %v271
      %v786 = vunpack.c.h.b16 %v271
      %v787 = vunpack.c.l.b16 %v272
      %v788 = vunpack.c.h.b16 %v272
      %v789 = vunpack.c.l.b16 %v273
      %v790 = vunpack.c.h.b16 %v273
      %v791 = vunpack.c.l.b16 %v274
      %v792 = vunpack.c.h.b16 %v274
      %v793 = vunpack.c.l.b16 %v275
      %v794 = vunpack.c.h.b16 %v275
      %v795 = vunpack.c.l.b16 %v276
      %v796 = vunpack.c.h.b16 %v276
      %v797 = vunpack.c.l.b16 %v277
      %v798 = vunpack.c.h.b16 %v277
      %v799 = vunpack.c.l.b16 %v278
      %v800 = vunpack.c.h.b16 %v278
      %v801 = vunpack.c.l.b16 %v279
      %v802 = vunpack.c.h.b16 %v279
      %v803 = vunpack.c.l.b16 %v280
      %v804 = vunpack.c.h.b16 %v280
      %v805 = vunpack.c.l.b16 %v281
      %v806 = vunpack.c.h.b16 %v281
      %v807 = vunpack.c.l.b16 %v282
      %v808 = vunpack.c.h.b16 %v282
      %v809 = vunpack.c.l.b16 %v283
      %v810 = vunpack.c.h.b16 %v283
      %v811 = vunpack.c.l.b16 %v284
      %v812 = vunpack.c.h.b16 %v284
      %v813 = vunpack.c.l.b16 %v285
      %v814 = vunpack.c.h.b16 %v285
      %v815 = vunpack.c.l.b16 %v286
      %v816 = vunpack.c.h.b16 %v286
      %v817 = vunpack.c.l.b16 %v287
      %v818 = vunpack.c.h.b16 %v287
      %v819 = vunpack.c.l.b16 %v288
      %v820 = vunpack.c.h.b16 %v288
      %v821 = vunpack.c.l.b16 %v289
      %v822 = vunpack.c.h.b16 %v289
      %v823 = vunpack.c.l.b16 %v290
      %v824 = vunpack.c.h.b16 %v290
      %v825 = vunpack.c.l.b16 %v291
      %v826 = vunpack.c.h.b16 %v291
      %v827 = vunpack.c.l.b16 %v292
      %v828 = vunpack.c.h.b16 %v292
      %v829 = vunpack.c.l.b16 %v293
      %v830 = vunpack.c.h.b16 %v293
      %v831 = vunpack.c.l.b16 %v294
      %v832 = vunpack.c.h.b16 %v294
      %v833 = vunpack.c.l.b16 %v295
      %v834 = vunpack.c.h.b16 %v295
      %v835 = vunpack.c.l.b16 %v296
      %v836 = vunpack.c.h.b16 %v296
      %v837 = vunpack.c.l.b16 %v297
      %v838 = vunpack.c.h.b16 %v297
      %v839 = vunpack.c.l.b16 %v298
      %v840 = vunpack.c.h.b16 %v298
      %v841 = vunpack.c.l.b16 %v299
      %v842 = vunpack.c.h.b16 %v299
      %v843 = vunpack.c.l.b16 %v300
      %v844 = vunpack.c.h.b16 %v300
      %v845 = vunpack.c.l.b16 %v301
      %v846 = vunpack.c.h.b16 %v301
      %v847 = vunpack.c.l.b16 %v302
      %v848 = vunpack.c.h.b16 %v302
      %v849 = vunpack.c.l.b16 %v303
      %v850 = vunpack.c.h.b16 %v303
      %v851 = vunpack.c.l.b16 %v304
      %v852 = vunpack.c.h.b16 %v304
      %v853 = vunpack.c.l.b16 %v305
      %v854 = vunpack.c.h.b16 %v305
      %v855 = vunpack.c.l.b16 %v306
      %v856 = vunpack.c.h.b16 %v306
      %v857 = vunpack.c.l.b16 %v307
      %v858 = vunpack.c.h.b16 %v307
      %v859 = vunpack.c.l.b16 %v308
      %v860 = vunpack.c.h.b16 %v308
      %v861 = vunpack.c.l.b16 %v309
      %v862 = vunpack.c.h.b16 %v309
      %v863 = vunpack.c.l.b16 %v310
      %v864 = vunpack.c.h.b16 %v310
      %v865 = vunpack.c.l.b16 %v311
      %v866 = vunpack.c.h.b16 %v311
      %v867 = vunpack.c.l.b16 %v312
      %v868 = vunpack.c.h.b16 %v312
      %v869 = vunpack.c.l.b16 %v313
      %v870 = vunpack.c.h.b16 %v313
      %v871 = vunpack.c.l.b16 %v314
      %v872 = vunpack.c.h.b16 %v314
      %v873 = vunpack.c.l.b16 %v315
      %v874 = vunpack.c.h.b16 %v315
      %v875 = vunpack.c.l.b16 %v316
      %v876 = vunpack.c.h.b16 %v316
      %v877 = vunpack.c.l.b16 %v317
      %v878 = vunpack.c.h.b16 %v317
      %v879 = vunpack.c.l.b16 %v318
      %v880 = vunpack.c.h.b16 %v318
      %v881 = vunpack.c.l.b16 %v319
      %v882 = vunpack.c.h.b16 %v319
      %v883 = vunpack.c.l.b16 %v320
      %v884 = vunpack.c.h.b16 %v320
      %v885 = vunpack.c.l.b16 %v321
      %v886 = vunpack.c.h.b16 %v321
      %v887 = vunpack.c.l.b16 %v322
      %v888 = vunpack.c.h.b16 %v322
      %v889 = vunpack.c.l.b16 %v323
      %v890 = vunpack.c.h.b16 %v323
      %v891 = vunpack.c.l.b16 %v324
      %v892 = vunpack.c.h.b16 %v324
      %v893 = vunpack.c.l.b16 %v325
      %v894 = vunpack.c.h.b16 %v325
      %v895 = vunpack.c.l.b16 %v326
      %v896 = vunpack.c.h.b16 %v326
      %v897 = vunpack.c.l.b16 %v327
      %v898 = vunpack.c.h.b16 %v327
      %v899 = vunpack.c.l.b16 %v328
      %v900 = vunpack.c.h.b16 %v328
      %v901 = vunpack.c.l.b16 %v329
      %v902 = vunpack.c.h.b16 %v329
      %v903 = vunpack.c.l.b16 %v330
      %v904 = vunpack.c.h.b16 %v330
      %v905 = vunpack.c.l.b16 %v331
      %v906 = vunpack.c.h.b16 %v331
      %v907 = vunpack.c.l.b16 %v332
      %v908 = vunpack.c.h.b16 %v332
      %v909 = vunpack.c.l.b16 %v333
      %v910 = vunpack.c.h.b16 %v333
      %v911 = vunpack.c.l.b16 %v334
      %v912 = vunpack.c.h.b16 %v334
      %v913 = vunpack.c.l.b16 %v335
      %v914 = vunpack.c.h.b16 %v335
      %v915 = vunpack.c.l.b16 %v336
      %v916 = vunpack.c.h.b16 %v336
      %v917 = vunpack.c.l.b16 %v337
      %v918 = vunpack.c.h.b16 %v337
      %v919 = vunpack.c.l.b16 %v338
      %v920 = vunpack.c.h.b16 %v338
      %v921 = vunpack.c.l.b16 %v339
      %v922 = vunpack.c.h.b16 %v339
      %v923 = vunpack.c.l.b16 %v340
      %v924 = vunpack.c.h.b16 %v340
      %v925 = vunpack.c.l.b16 %v341
      %v926 = vunpack.c.h.b16 %v341
      %v927 = vunpack.c.l.b16 %v342
      %v928 = vunpack.c.h.b16 %v342
      %v929 = vunpack.c.l.b16 %v343
      %v930 = vunpack.c.h.b16 %v343
      %v931 = vunpack.c.l.b16 %v344
      %v932 = vunpack.c.h.b16 %v344
      %v933 = vunpack.c.l.b16 %v345
      %v934 = vunpack.c.h.b16 %v345
      %v935 = vunpack.c.l.b16 %v346
      %v936 = vunpack.c.h.b16 %v346
      %v937 = vunpack.c.l.b16 %v347
      %v938 = vunpack.c.h.b16 %v347
      %v939 = vunpack.c.l.b16 %v348
      %v940 = vunpack.c.h.b16 %v348
      %v941 = vunpack.c.l.b16 %v349
      %v942 = vunpack.c.h.b16 %v349
      %v943 = vunpack.c.l.b16 %v350
      %v944 = vunpack.c.h.b16 %v350
      %v945 = vunpack.c.l.b16 %v351
      %v946 = vunpack.c.h.b16 %v351
      %v947 = vunpack.c.l.b16 %v352
      %v948 = vunpack.c.h.b16 %v352
      %v949 = vunpack.c.l.b16 %v353
      %v950 = vunpack.c.h.b16 %v353
      %v951 = vunpack.c.l.b16 %v354
      %v952 = vunpack.c.h.b16 %v354
      %v953 = vunpack.c.l.b16 %v355
      %v954 = vunpack.c.h.b16 %v355
      %v955 = vunpack.c.l.b16 %v356
      %v956 = vunpack.c.h.b16 %v356
      %v957 = vunpack.c.l.b16 %v357
      %v958 = vunpack.c.h.b16 %v357
      %v959 = vunpack.c.l.b16 %v358
      %v960 = vunpack.c.h.b16 %v358
      %v961 = vunpack.c.l.b16 %v359
      %v962 = vunpack.c.h.b16 %v359
      %v963 = vunpack.c.l.b16 %v360
      %v964 = vunpack.c.h.b16 %v360
      %v965 = vunpack.c.l.b16 %v361
      %v966 = vunpack.c.h.b16 %v361
      %v967 = vunpack.c.l.b16 %v362
      %v968 = vunpack.c.h.b16 %v362
      %v969 = vunpack.c.l.b16 %v363
      %v970 = vunpack.c.h.b16 %v363
      %v971 = vunpack.c.l.b16 %v364
      %v972 = vunpack.c.h.b16 %v364
      %v973 = vunpack.c.l.b16 %v365
      %v974 = vunpack.c.h.b16 %v365
      %v975 = vunpack.c.l.b16 %v366
      %v976 = vunpack.c.h.b16 %v366
      %v977 = vunpack.c.l.b16 %v367
      %v978 = vunpack.c.h.b16 %v367
      %v979 = vunpack.c.l.b16 %v368
      %v980 = vunpack.c.h.b16 %v368
      %v981 = vunpack.c.l.b16 %v369
      %v982 = vunpack.c.h.b16 %v369
      %v983 = vunpack.c.l.b16 %v370
      %v984 = vunpack.c.h.b16 %v370
      %v985 = vunpack.c.l.b16 %v371
      %v986 = vunpack.c.h.b16 %v371
      %v987 = vunpack.c.l.b16 %v372
      %v988 = vunpack.c.h.b16 %v372
      %v989 = vunpack.c.l.b16 %v373
      %v990 = vunpack.c.h.b16 %v373
      %v991 = vunpack.c.l.b16 %v374
      %v992 = vunpack.c.h.b16 %v374
      %v993 = vunpack.c.l.b16 %v375
      %v994 = vunpack.c.h.b16 %v375
      %v995 = vunpack.c.l.b16 %v376
      %v996 = vunpack.c.h.b16 %v376
      %v997 = vunpack.c.l.b16 %v377
      %v998 = vunpack.c.h.b16 %v377
      %v999 = vunpack.c.l.b16 %v378
      %v1000 = vunpack.c.h.b16 %v378
      %v1001 = vunpack.c.l.b16 %v379
      %v1002 = vunpack.c.h.b16 %v379
      %v1003 = vunpack.c.l.b16 %v380
      %v1004 = vunpack.c.h.b16 %v380
      %v1005 = vunpack.c.l.b16 %v381
      %v1006 = vunpack.c.h.b16 %v381
      %v1007 = vunpack.c.l.b16 %v382
      %v1008 = vunpack.c.h.b16 %v382
      %v1009 = vunpack.c.l.b16 %v383
      %v1010 = vunpack.c.h.b16 %v383
      %v1011 = vunpack.c.l.b16 %v384
      %v1012 = vunpack.c.h.b16 %v384
      %v1013 = vunpack.c.l.b16 %v385
      %v1014 = vunpack.c.h.b16 %v385
      %v1015 = vunpack.c.l.b16 %v386
      %v1016 = vunpack.c.h.b16 %v386
      %v1017 = vunpack.c.l.b16 %v387
      %v1018 = vunpack.c.h.b16 %v387
      %v1019 = vunpack.c.l.b16 %v388
      %v1020 = vunpack.c.h.b16 %v388
      %v1021 = vunpack.c.l.b16 %v389
      %v1022 = vunpack.c.h.b16 %v389
      %v1023 = vunpack.c.l.b16 %v390
      %v1024 = vunpack.c.h.b16 %v390
      %v1025 = vunpack.c.l.b16 %v391
      %v1026 = vunpack.c.h.b16 %v391
      %v1027 = vunpack.c.l.b16 %v392
      %v1028 = vunpack.c.h.b16 %v392
      %v1029 = vunpack.c.l.b16 %v393
      %v1030 = vunpack.c.h.b16 %v393
      %v1031 = vunpack.c.l.b16 %v394
      %v1032 = vunpack.c.h.b16 %v394
      %v1033 = vunpack.c.l.b16 %v395
      %v1034 = vunpack.c.h.b16 %v395
      %v1035 = vunpack.c.l.b16 %v396
      %v1036 = vunpack.c.h.b16 %v396
      %v1037 = vunpack.c.l.b16 %v397
      %v1038 = vunpack.c.h.b16 %v397
      %v1039 = vunpack.c.l.b16 %v398
      %v1040 = vunpack.c.h.b16 %v398
      %v1041 = vunpack.c.l.b16 %v399
      %v1042 = vunpack.c.h.b16 %v399
      %v1043 = vunpack.c.l.b16 %v400
      %v1044 = vunpack.c.h.b16 %v400
      %v1045 = vunpack.c.l.b16 %v401
      %v1046 = vunpack.c.h.b16 %v401
      %v1047 = vunpack.c.l.b16 %v402
      %v1048 = vunpack.c.h.b16 %v402
      %v1049 = vunpack.c.l.b16 %v403
      %v1050 = vunpack.c.h.b16 %v403
      %v1051 = vunpack.c.l.b16 %v404
      %v1052 = vunpack.c.h.b16 %v404
      %v1053 = vunpack.c.l.b16 %v405
      %v1054 = vunpack.c.h.b16 %v405
      %v1055 = vunpack.c.l.b16 %v406
      %v1056 = vunpack.c.h.b16 %v406
      %v1057 = vunpack.c.l.b16 %v407
      %v1058 = vunpack.c.h.b16 %v407
      %v1059 = vunpack.c.l.b16 %v408
      %v1060 = vunpack.c.h.b16 %v408
      %v1061 = vunpack.c.l.b16 %v409
      %v1062 = vunpack.c.h.b16 %v409
      %v1063 = vunpack.c.l.b16 %v410
      %v1064 = vunpack.c.h.b16 %v410
      %v1065 = vunpack.c.l.b16 %v411
      %v1066 = vunpack.c.h.b16 %v411
      %v1067 = vunpack.c.l.b16 %v412
      %v1068 = vunpack.c.h.b16 %v412
      %v1069 = vunpack.c.l.b16 %v413
      %v1070 = vunpack.c.h.b16 %v413
      %v1071 = vunpack.c.l.b16 %v414
      %v1072 = vunpack.c.h.b16 %v414
      %v1073 = vunpack.c.l.b16 %v415
      %v1074 = vunpack.c.h.b16 %v415
      %v1075 = vunpack.c.l.b16 %v416
      %v1076 = vunpack.c.h.b16 %v416
      %v1077 = vunpack.c.l.b16 %v417
      %v1078 = vunpack.c.h.b16 %v417
      %v1079 = vunpack.c.l.b16 %v418
      %v1080 = vunpack.c.h.b16 %v418
      %v1081 = vpack.c.b16 %v689, %v681
      %v1082 = vpack.c.b16 %v690, %v682
      %v1083 = vpack.c.b16 %v691, %v683
      %v1084 = vpack.c.b16 %v692, %v684
      %v1085 = vpack.c.b16 %v693, %v685
      %v1086 = vpack.c.b16 %v694, %v686
      %v1087 = vpack.c.b16 %v695, %v687
      %v1088 = vpack.c.b16 %v696, %v688
      %v1089 = vpack.c.b16 %v705, %v697
      %v1090 = vpack.c.b16 %v706, %v698
      %v1091 = vpack.c.b16 %v707, %v699
      %v1092 = vpack.c.b16 %v708, %v700
      %v1093 = vpack.c.b16 %v709, %v701
      %v1094 = vpack.c.b16 %v710, %v702
      %v1095 = vpack.c.b16 %v711, %v703
      %v1096 = vpack.c.b16 %v712, %v704
      %v1097 = vpack.c.b16 %v721, %v713
      %v1098 = vpack.c.b16 %v722, %v714
      %v1099 = vpack.c.b16 %v723, %v715
      %v1100 = vpack.c.b16 %v724, %v716
      %v1101 = vpack.c.b16 %v725, %v717
      %v1102 = vpack.c.b16 %v726, %v718
      %v1103 = vpack.c.b16 %v727, %v719
      %v1104 = vpack.c.b16 %v728, %v720
      %v1105 = vpack.c.b16 %v737, %v729
      %v1106 = vpack.c.b16 %v738, %v730
      %v1107 = vpack.c.b16 %v739, %v731
      %v1108 = vpack.c.b16 %v740, %v732
      %v1109 = vpack.c.b16 %v741, %v733
      %v1110 = vpack.c.b16 %v742, %v734
      %v1111 = vpack.c.b16 %v743, %v735
      %v1112 = vpack.c.b16 %v744, %v736
      %v1113 = vpack.c.b16 %v753, %v745
      %v1114 = vpack.c.b16 %v754, %v746
      %v1115 = vpack.c.b16 %v755, %v747
      %v1116 = vpack.c.b16 %v756, %v748
      %v1117 = vpack.c.b16 %v757, %v749
      %v1118 = vpack.c.b16 %v758, %v750
      %v1119 = vpack.c.b16 %v759, %v751
      %v1120 = vpack.c.b16 %v760, %v752
      %v1121 = vpack.c.b16 %v769, %v761
      %v1122 = vpack.c.b16 %v770, %v762
      %v1123 = vpack.c.b16 %v771, %v763
      %v1124 = vpack.c.b16 %v772, %v764
      %v1125 = vpack.c.b16 %v773, %v765
      %v1126 = vpack.c.b16 %v774, %v766
      %v1127 = vpack.c.b16 %v775, %v767
      %v1128 = vpack.c.b16 %v776, %v768
      %v1129 = vpack.c.b16 %v785, %v777
      %v1130 = vpack.c.b16 %v786, %v778
      %v1131 = vpack.c.b16 %v787, %v779
      %v1132 = vpack.c.b16 %v788, %v780
      %v1133 = vpack.c.b16 %v789, %v781
      %v1134 = vpack.c.b16 %v790, %v782
      %v1135 = vpack.c.b16 %v791, %v783
      %v1136 = vpack.c.b16 %v792, %v784
      %v1137 = vpack.c.b16 %v801, %v793
      %v1138 = vpack.c.b16 %v802, %v794
      %v1139 = vpack.c.b16 %v803, %v795
      %v1140 = vpack.c.b16 %v804, %v796
      %v1141 = vpack.c.b16 %v805, %v797
      %v1142 = vpack.c.b16 %v806, %v798
      %v1143 = vpack.c.b16 %v807, %v799
      %v1144 = vpack.c.b16 %v808, %v800
      %v1145 = vpack.c.b16 %v817, %v809
      %v1146 = vpack.c.b16 %v818, %v810
      %v1147 = vpack.c.b16 %v819, %v811
      %v1148 = vpack.c.b16 %v820, %v812
      %v1149 = vpack.c.b16 %v821, %v813
      %v1150 = vpack.c.b16 %v822, %v814
      %v1151 = vpack.c.b16 %v823, %v815
      %v1152 = vpack.c.b16 %v824, %v816
      %v1153 = vpack.c.b16 %v833, %v825
      %v1154 = vpack.c.b16 %v834, %v826
      %v1155 = vpack.c.b16 %v835, %v827
      %v1156 = vpack.c.b16 %v836, %v828
      %v1157 = vpack.c.b16 %v837, %v829
      %v1158 = vpack.c.b16 %v838, %v830
      %v1159 = vpack.c.b16 %v839, %v831
      %v1160 = vpack.c.b16 %v840, %v832
      %v1161 = vpack.c.b16 %v849, %v841
      %v1162 = vpack.c.b16 %v850, %v842
      %v1163 = vpack.c.b16 %v851, %v843
      %v1164 = vpack.c.b16 %v852, %v844
      %v1165 = vpack.c.b16 %v853, %v845
      %v1166 = vpack.c.b16 %v854, %v846
      %v1167 = vpack.c.b16 %v855, %v847
      %v1168 = vpack.c.b16 %v856, %v848
      %v1169 = vpack.c.b16 %v865, %v857
      %v1170 = vpack.c.b16 %v866, %v858
      %v1171 = vpack.c.b16 %v867, %v859
      %v1172 = vpack.c.b16 %v868, %v860
      %v1173 = vpack.c.b16 %v869, %v861
      %v1174 = vpack.c.b16 %v870, %v862
      %v1175 = vpack.c.b16 %v871, %v863
      %v1176 = vpack.c.b16 %v872, %v864
      %v1177 = vpack.c.b16 %v881, %v873
      %v1178 = vpack.c.b16 %v882, %v874
      %v1179 = vpack.c.b16 %v883, %v875
      %v1180 = vpack.c.b16 %v884, %v876
      %v1181 = vpack.c.b16 %v885, %v877
      %v1182 = vpack.c.b16 %v886, %v878
      %v1183 = vpack.c.b16 %v887, %v879
      %v1184 = vpack.c.b16 %v888, %v880
      %v1185 = vpack.c.b16 %v897, %v889
      %v1186 = vpack.c.b16 %v898, %v890
      %v1187 = vpack.c.b16 %v899, %v891
      %v1188 = vpack.c.b16 %v900, %v892
      %v1189 = vpack.c.b16 %v901, %v893
      %v1190 = vpack.c.b16 %v902, %v894
      %v1191 = vpack.c.b16 %v903, %v895
      %v1192 = vpack.c.b16 %v904, %v896
      %v1193 = vpack.c.b16 %v913, %v905
      %v1194 = vpack.c.b16 %v914, %v906
      %v1195 = vpack.c.b16 %v915, %v907
      %v1196 = vpack.c.b16 %v916, %v908
      %v1197 = vpack.c.b16 %v917, %v909
      %v1198 = vpack.c.b16 %v918, %v910
      %v1199 = vpack.c.b16 %v919, %v911
      %v1200 = vpack.c.b16 %v920, %v912
      %v1201 = vpack.c.b16 %v929, %v921
      %v1202 = vpack.c.b16 %v930, %v922
      %v1203 = vpack.c.b16 %v931, %v923
      %v1204 = vpack.c.b16 %v932, %v924
      %v1205 = vpack.c.b16 %v933, %v925
      %v1206 = vpack.c.b16 %v934, %v926
      %v1207 = vpack.c.b16 %v935, %v927
      %v1208 = vpack.c.b16 %v936, %v928
      %v1209 = vpack.c.b16 %v945, %v937
      %v1210 = vpack.c.b16 %v946, %v938
      %v1211 = vpack.c.b16 %v947, %v939
      %v1212 = vpack.c.b16 %v948, %v940
      %v1213 = vpack.c.b16 %v949, %v941
      %v1214 = vpack.c.b16 %v950, %v942
      %v1215 = vpack.c.b16 %v951, %v943
      %v1216 = vpack.c.b16 %v952, %v944
      %v1217 = vpack.c.b16 %v961, %v953
      %v1218 = vpack.c.b16 %v962, %v954
      %v1219 = vpack.c.b16 %v963, %v955
      %v1220 = vpack.c.b16 %v964, %v956
      %v1221 = vpack.c.b16 %v965, %v957
      %v1222 = vpack.c.b16 %v966, %v958
      %v1223 = vpack.c.b16 %v967, %v959
      %v1224 = vpack.c.b16 %v968, %v960
      %v1225 = vpack.c.b16 %v977, %v969
      %v1226 = vpack.c.b16 %v978, %v970
      %v1227 = vpack.c.b16 %v979, %v971
      %v1228 = vpack.c.b16 %v980, %v972
      %v1229 = vpack.c.b16 %v981, %v973
      %v1230 = vpack.c.b16 %v982, %v974
      %v1231 = vpack.c.b16 %v983, %v975
      %v1232 = vpack.c.b16 %v984, %v976
      %v1233 = vpack.c.b16 %v993, %v985
      %v1234 = vpack.c.b16 %v994, %v986
      %v1235 = vpack.c.b16 %v995, %v987
      %v1236 = vpack.c.b16 %v996, %v988
      %v1237 = vpack.c.b16 %v997, %v989
      %v1238 = vpack.c.b16 %v998, %v990
      %v1239 = vpack.c.b16 %v999, %v991
      %v1240 = vpack.c.b16 %v1000, %v992
      %v1241 = vpack.c.b16 %v1009, %v1001
      %v1242 = vpack.c.b16 %v1010, %v1002
      %v1243 = vpack.c.b16 %v1011, %v1003
      %v1244 = vpack.c.b16 %v1012, %v1004
      %v1245 = vpack.c.b16 %v1013, %v1005
      %v1246 = vpack.c.b16 %v1014, %v1006
      %v1247 = vpack.c.b16 %v1015, %v1007
      %v1248 = vpack.c.b16 %v1016, %v1008
      %v1249 = vpack.c.b16 %v1025, %v1017
      %v1250 = vpack.c.b16 %v1026, %v1018
      %v1251 = vpack.c.b16 %v1027, %v1019
      %v1252 = vpack.c.b16 %v1028, %v1020
      %v1253 = vpack.c.b16 %v1029, %v1021
      %v1254 = vpack.c.b16 %v1030, %v1022
      %v1255 = vpack.c.b16 %v1031, %v1023
      %v1256 = vpack.c.b16 %v1032, %v1024
      %v1257 = vpack.c.b16 %v1041, %v1033
      %v1258 = vpack.c.b16 %v1042, %v1034
      %v1259 = vpack.c.b16 %v1043, %v1035
      %v1260 = vpack.c.b16 %v1044, %v1036
      %v1261 = vpack.c.b16 %v1045, %v1037
      %v1262 = vpack.c.b16 %v1046, %v1038
      %v1263 = vpack.c.b16 %v1047, %v1039
      %v1264 = vpack.c.b16 %v1048, %v1040
      %v1265 = vpack.c.b16 %v1057, %v1049
      %v1266 = vpack.c.b16 %v1058, %v1050
      %v1267 = vpack.c.b16 %v1059, %v1051
      %v1268 = vpack.c.b16 %v1060, %v1052
      %v1269 = vpack.c.b16 %v1061, %v1053
      %v1270 = vpack.c.b16 %v1062, %v1054
      %v1271 = vpack.c.b16 %v1063, %v1055
      %v1272 = vpack.c.b16 %v1064, %v1056
      %v1273 = vpack.c.b16 %v1073, %v1065
      %v1274 = vpack.c.b16 %v1074, %v1066
      %v1275 = vpack.c.b16 %v1075, %v1067
      %v1276 = vpack.c.b16 %v1076, %v1068
      %v1277 = vpack.c.b16 %v1077, %v1069
      %v1278 = vpack.c.b16 %v1078, %v1070
      %v1279 = vpack.c.b16 %v1079, %v1071
      %v1280 = vpack.c.b16 %v1080, %v1072
      %vm1481 = vcmask 130048
      %v1483 = vsel %vm1481, %v470, 0
      %v1486 = vsel %vm1481, %v474, 0
      %1488 = vmatprep.subr.bf16.mxu0 %v1082
      %1489 = vmatpush1.bf16.msra.mxu0 %v1081
      %1490 = vmatprep.subr.bf16.mxu0 %v1090
      %1491 = vmatpush1.bf16.msra.mxu0 %v1089
      %1492 = vmatprep.subr.bf16.mxu0 %v1098
      %1493 = vmatpush1.bf16.msra.mxu0 %v1097
      %1494 = vmatprep.subr.bf16.mxu0 %v1106
      %1495 = vmatpush1.bf16.msra.mxu0 %v1105
      %1496 = vmatprep.subr.bf16.mxu0 %v1114
      %1497 = vmatpush1.bf16.msra.mxu0 %v1113
      %1498 = vmatprep.subr.bf16.mxu0 %v1122
      %1499 = vmatpush1.bf16.msra.mxu0 %v1121
      %1500 = vmatprep.subr.bf16.mxu0 %v1130
      %1501 = vmatpush1.bf16.msra.mxu0 %v1129
      %1502 = vmatprep.subr.bf16.mxu0 %v1138
      %1503 = vmatpush1.bf16.msra.mxu0 %v1137
      %1504 = vmatprep.subr.bf16.mxu0 %v1146
      %1505 = vmatpush1.bf16.msra.mxu0 %v1145
      %1506 = vmatprep.subr.bf16.mxu0 %v1154
      %1507 = vmatpush1.bf16.msra.mxu0 %v1153
      %1508 = vmatprep.subr.bf16.mxu0 %v1162
      %1509 = vmatpush1.bf16.msra.mxu0 %v1161
      %1510 = vmatprep.subr.bf16.mxu0 %v1170
      %1511 = vmatpush1.bf16.msra.mxu0 %v1169
      %1512 = vmatprep.subr.bf16.mxu0 %v1178
      %1513 = vmatpush1.bf16.msra.mxu0 %v1177
      %1514 = vmatprep.subr.bf16.mxu0 %v1186
      %1515 = vmatpush1.bf16.msra.mxu0 %v1185
      %1516 = vmatprep.subr.bf16.mxu0 %v1194
      %1517 = vmatpush1.bf16.msra.mxu0 %v1193
      %1518 = vmatprep.subr.bf16.mxu0 %v1202
      %1519 = vmatpush1.bf16.msra.mxu0 %v1201
      %1520 = vmatprep.mubr.bf16.mxu0 %v468
      %1521 = vmatmul.mubr.bf16.gmra.mrb[0].mxu0 %v467
      %v1522 = vpop.f32.mrb[0].mxu0
      %v1523 = vadd.f32 %v426, %v1522
      %v1524 = vpop.f32.mrb[0].mxu0
      %v1525 = vadd.f32 %v426, %v1524
      %v1526 = vpop.f32.mrb[0].mxu0
      %v1527 = vadd.f32 %v431, %v1526
      %v1528 = vpop.f32.mrb[0].mxu0
      %v1529 = vadd.f32 %v431, %v1528
      %1530 = vmatprep.mubr.bf16.mxu0 %v472
      %1531 = vmatmul.mubr.bf16.gmra.mrb[0].mxu0 %v471
      %v1532 = vpop.f32.mrb[0].mxu0
      %v1533 = vadd.f32 %v436, %v1532
      %v1534 = vpop.f32.mrb[0].mxu0
      %v1535 = vadd.f32 %v436, %v1534
      %v1536 = vpop.f32.mrb[0].mxu0
      %v1537 = vadd.f32 %v441, %v1536
      %v1538 = vpop.f32.mrb[0].mxu0
      %v1539 = vadd.f32 %v441, %v1538
      %1540 = vdwg.mxu0
      %1541 = vmatprep.subr.bf16.mxu0 %v1210
      %1542 = vmatpush1.bf16.msra.mxu0 %v1209
      %1543 = vmatprep.subr.bf16.mxu0 %v1218
      %1544 = vmatpush1.bf16.msra.mxu0 %v1217
      %1545 = vmatprep.subr.bf16.mxu0 %v1226
      %1546 = vmatpush1.bf16.msra.mxu0 %v1225
      %1547 = vmatprep.subr.bf16.mxu0 %v1234
      %1548 = vmatpush1.bf16.msra.mxu0 %v1233
      %1549 = vmatprep.subr.bf16.mxu0 %v1242
      %1550 = vmatpush1.bf16.msra.mxu0 %v1241
      %1551 = vmatprep.subr.bf16.mxu0 %v1250
      %1552 = vmatpush1.bf16.msra.mxu0 %v1249
      %1553 = vmatprep.subr.bf16.mxu0 %v1258
      %1554 = vmatpush1.bf16.msra.mxu0 %v1257
      %1555 = vmatprep.subr.bf16.mxu0 %v1266
      %1556 = vmatpush1.bf16.msra.mxu0 %v1265
      %1557 = vmatprep.subr.bf16.mxu0 %v1274
      %1558 = vmatpush1.bf16.msra.mxu0 %v1273
      %1559 = vmatprep.subr.bf16.mxu0 0
      %1560 = vmatpush1.bf16.msra.mxu0 0
      %1561 = vmatprep.subr.bf16.mxu0 0
      %1562 = vmatpush1.bf16.msra.mxu0 0
      %1563 = vmatprep.subr.bf16.mxu0 0
      %1564 = vmatpush1.bf16.msra.mxu0 0
      %1565 = vmatprep.subr.bf16.mxu0 0
      %1566 = vmatpush1.bf16.msra.mxu0 0
      %1567 = vmatprep.subr.bf16.mxu0 0
      %1568 = vmatpush1.bf16.msra.mxu0 0
      %1569 = vmatprep.subr.bf16.mxu0 0
      %1570 = vmatpush1.bf16.msra.mxu0 0
      %1571 = vmatprep.subr.bf16.mxu0 0
      %1572 = vmatpush1.bf16.msra.mxu0 0
      %1573 = vmatprep.mubr.bf16.mxu0 %v1483
      %1574 = vmatmul.mubr.bf16.gmra.mrb[0].mxu0 %v469
      %v1575 = vpop.f32.mrb[0].mxu0
      %v1576 = vadd.f32 %v1523, %v1575
      %v1577 = vpop.f32.mrb[0].mxu0
      %v1578 = vadd.f32 %v1525, %v1577
      %v1579 = vpop.f32.mrb[0].mxu0
      %v1580 = vadd.f32 %v1527, %v1579
      %v1581 = vpop.f32.mrb[0].mxu0
      %v1582 = vadd.f32 %v1529, %v1581
      %1583 = vmatprep.mubr.bf16.mxu0 %v1486
      %1584 = vmatmul.mubr.bf16.gmra.mrb[0].mxu0 %v473
      %v1585 = vpop.f32.mrb[0].mxu0
      %v1586 = vadd.f32 %v1533, %v1585
      %v1587 = vpop.f32.mrb[0].mxu0
      %v1588 = vadd.f32 %v1535, %v1587
      %v1589 = vpop.f32.mrb[0].mxu0
      %v1590 = vadd.f32 %v1537, %v1589
      %v1591 = vpop.f32.mrb[0].mxu0
      %v1592 = vadd.f32 %v1539, %v1591
      %1593 = vdwg.mxu0
      %1594 = vmatprep.subr.bf16.mxu0 %v1084
      %1595 = vmatpush1.bf16.msra.mxu0 %v1083
      %1596 = vmatprep.subr.bf16.mxu0 %v1092
      %1597 = vmatpush1.bf16.msra.mxu0 %v1091
      %1598 = vmatprep.subr.bf16.mxu0 %v1100
      %1599 = vmatpush1.bf16.msra.mxu0 %v1099
      %1600 = vmatprep.subr.bf16.mxu0 %v1108
      %1601 = vmatpush1.bf16.msra.mxu0 %v1107
      %1602 = vmatprep.subr.bf16.mxu0 %v1116
      %1603 = vmatpush1.bf16.msra.mxu0 %v1115
      %1604 = vmatprep.subr.bf16.mxu0 %v1124
      %1605 = vmatpush1.bf16.msra.mxu0 %v1123
      %1606 = vmatprep.subr.bf16.mxu0 %v1132
      %1607 = vmatpush1.bf16.msra.mxu0 %v1131
      %1608 = vmatprep.subr.bf16.mxu0 %v1140
      %1609 = vmatpush1.bf16.msra.mxu0 %v1139
      %1610 = vmatprep.subr.bf16.mxu0 %v1148
      %1611 = vmatpush1.bf16.msra.mxu0 %v1147
      %1612 = vmatprep.subr.bf16.mxu0 %v1156
      %1613 = vmatpush1.bf16.msra.mxu0 %v1155
      %1614 = vmatprep.subr.bf16.mxu0 %v1164
      %1615 = vmatpush1.bf16.msra.mxu0 %v1163
      %1616 = vmatprep.subr.bf16.mxu0 %v1172
      %1617 = vmatpush1.bf16.msra.mxu0 %v1171
      %1618 = vmatprep.subr.bf16.mxu0 %v1180
      %1619 = vmatpush1.bf16.msra.mxu0 %v1179
      %1620 = vmatprep.subr.bf16.mxu0 %v1188
      %1621 = vmatpush1.bf16.msra.mxu0 %v1187
      %1622 = vmatprep.subr.bf16.mxu0 %v1196
      %1623 = vmatpush1.bf16.msra.mxu0 %v1195
      %1624 = vmatprep.subr.bf16.mxu0 %v1204
      %1625 = vmatpush1.bf16.msra.mxu0 %v1203
      %1626 = vmatprep.mubr.bf16.mxu0 %v468
      %1627 = vmatmul.mubr.bf16.gmra.mrb[0].mxu0 %v467
      %v1628 = vpop.f32.mrb[0].mxu0
      %v1629 = vadd.f32 %v426, %v1628
      %v1630 = vpop.f32.mrb[0].mxu0
      %v1631 = vadd.f32 %v426, %v1630
      %v1632 = vpop.f32.mrb[0].mxu0
      %v1633 = vadd.f32 %v431, %v1632
      %v1634 = vpop.f32.mrb[0].mxu0
      %v1635 = vadd.f32 %v431, %v1634
      %1636 = vmatprep.mubr.bf16.mxu0 %v472
      %1637 = vmatmul.mubr.bf16.gmra.mrb[0].mxu0 %v471
      %v1638 = vpop.f32.mrb[0].mxu0
      %v1639 = vadd.f32 %v436, %v1638
      %v1640 = vpop.f32.mrb[0].mxu0
      %v1641 = vadd.f32 %v436, %v1640
      %v1642 = vpop.f32.mrb[0].mxu0
      %v1643 = vadd.f32 %v441, %v1642
      %v1644 = vpop.f32.mrb[0].mxu0
      %v1645 = vadd.f32 %v441, %v1644
      %1646 = vdwg.mxu0
      %1647 = vmatprep.subr.bf16.mxu0 %v1212
      %1648 = vmatpush1.bf16.msra.mxu0 %v1211
      %1649 = vmatprep.subr.bf16.mxu0 %v1220
      %1650 = vmatpush1.bf16.msra.mxu0 %v1219
      %1651 = vmatprep.subr.bf16.mxu0 %v1228
      %1652 = vmatpush1.bf16.msra.mxu0 %v1227
      %1653 = vmatprep.subr.bf16.mxu0 %v1236
      %1654 = vmatpush1.bf16.msra.mxu0 %v1235
      %1655 = vmatprep.subr.bf16.mxu0 %v1244
      %1656 = vmatpush1.bf16.msra.mxu0 %v1243
      %1657 = vmatprep.subr.bf16.mxu0 %v1252
      %1658 = vmatpush1.bf16.msra.mxu0 %v1251
      %1659 = vmatprep.subr.bf16.mxu0 %v1260
      %1660 = vmatpush1.bf16.msra.mxu0 %v1259
      %1661 = vmatprep.subr.bf16.mxu0 %v1268
      %1662 = vmatpush1.bf16.msra.mxu0 %v1267
      %1663 = vmatprep.subr.bf16.mxu0 %v1276
      %1664 = vmatpush1.bf16.msra.mxu0 %v1275
      %1665 = vmatprep.subr.bf16.mxu0 0
      %1666 = vmatpush1.bf16.msra.mxu0 0
      %1667 = vmatprep.subr.bf16.mxu0 0
      %1668 = vmatpush1.bf16.msra.mxu0 0
      %1669 = vmatprep.subr.bf16.mxu0 0
      %1670 = vmatpush1.bf16.msra.mxu0 0
      %1671 = vmatprep.subr.bf16.mxu0 0
      %1672 = vmatpush1.bf16.msra.mxu0 0
      %1673 = vmatprep.subr.bf16.mxu0 0
      %1674 = vmatpush1.bf16.msra.mxu0 0
      %1675 = vmatprep.subr.bf16.mxu0 0
      %1676 = vmatpush1.bf16.msra.mxu0 0
      %1677 = vmatprep.subr.bf16.mxu0 0
      %1678 = vmatpush1.bf16.msra.mxu0 0
      %1679 = vmatprep.mubr.bf16.mxu0 %v1483
      %1680 = vmatmul.mubr.bf16.gmra.mrb[0].mxu0 %v469
      %v1681 = vpop.f32.mrb[0].mxu0
      %v1682 = vadd.f32 %v1629, %v1681
      %v1683 = vpop.f32.mrb[0].mxu0
      %v1684 = vadd.f32 %v1631, %v1683
      %v1685 = vpop.f32.mrb[0].mxu0
      %v1686 = vadd.f32 %v1633, %v1685
      %v1687 = vpop.f32.mrb[0].mxu0
      %v1688 = vadd.f32 %v1635, %v1687
      %1689 = vmatprep.mubr.bf16.mxu0 %v1486
      %1690 = vmatmul.mubr.bf16.gmra.mrb[0].mxu0 %v473
      %v1691 = vpop.f32.mrb[0].mxu0
      %v1692 = vadd.f32 %v1639, %v1691
      %v1693 = vpop.f32.mrb[0].mxu0
      %v1694 = vadd.f32 %v1641, %v1693
      %v1695 = vpop.f32.mrb[0].mxu0
      %v1696 = vadd.f32 %v1643, %v1695
      %v1697 = vpop.f32.mrb[0].mxu0
      %v1698 = vadd.f32 %v1645, %v1697
      %1699 = vdwg.mxu0
      %1700 = vmatprep.subr.bf16.mxu0 %v1086
      %1701 = vmatpush1.bf16.msra.mxu0 %v1085
      %1702 = vmatprep.subr.bf16.mxu0 %v1094
      %1703 = vmatpush1.bf16.msra.mxu0 %v1093
      %1704 = vmatprep.subr.bf16.mxu0 %v1102
      %1705 = vmatpush1.bf16.msra.mxu0 %v1101
      %1706 = vmatprep.subr.bf16.mxu0 %v1110
      %1707 = vmatpush1.bf16.msra.mxu0 %v1109
      %1708 = vmatprep.subr.bf16.mxu0 %v1118
      %1709 = vmatpush1.bf16.msra.mxu0 %v1117
      %1710 = vmatprep.subr.bf16.mxu0 %v1126
      %1711 = vmatpush1.bf16.msra.mxu0 %v1125
      %1712 = vmatprep.subr.bf16.mxu0 %v1134
      %1713 = vmatpush1.bf16.msra.mxu0 %v1133
      %1714 = vmatprep.subr.bf16.mxu0 %v1142
      %1715 = vmatpush1.bf16.msra.mxu0 %v1141
      %1716 = vmatprep.subr.bf16.mxu0 %v1150
      %1717 = vmatpush1.bf16.msra.mxu0 %v1149
      %1718 = vmatprep.subr.bf16.mxu0 %v1158
      %1719 = vmatpush1.bf16.msra.mxu0 %v1157
      %1720 = vmatprep.subr.bf16.mxu0 %v1166
      %1721 = vmatpush1.bf16.msra.mxu0 %v1165
      %1722 = vmatprep.subr.bf16.mxu0 %v1174
      %1723 = vmatpush1.bf16.msra.mxu0 %v1173
      %1724 = vmatprep.subr.bf16.mxu0 %v1182
      %1725 = vmatpush1.bf16.msra.mxu0 %v1181
      %1726 = vmatprep.subr.bf16.mxu0 %v1190
      %1727 = vmatpush1.bf16.msra.mxu0 %v1189
      %1728 = vmatprep.subr.bf16.mxu0 %v1198
      %1729 = vmatpush1.bf16.msra.mxu0 %v1197
      %1730 = vmatprep.subr.bf16.mxu0 %v1206
      %1731 = vmatpush1.bf16.msra.mxu0 %v1205
      %1732 = vmatprep.mubr.bf16.mxu0 %v468
      %1733 = vmatmul.mubr.bf16.gmra.mrb[0].mxu0 %v467
      %v1734 = vpop.f32.mrb[0].mxu0
      %v1735 = vadd.f32 %v426, %v1734
      %v1736 = vpop.f32.mrb[0].mxu0
      %v1737 = vadd.f32 %v426, %v1736
      %v1738 = vpop.f32.mrb[0].mxu0
      %v1739 = vadd.f32 %v431, %v1738
      %v1740 = vpop.f32.mrb[0].mxu0
      %v1741 = vadd.f32 %v431, %v1740
      %1742 = vmatprep.mubr.bf16.mxu0 %v472
      %1743 = vmatmul.mubr.bf16.gmra.mrb[0].mxu0 %v471
      %v1744 = vpop.f32.mrb[0].mxu0
      %v1745 = vadd.f32 %v436, %v1744
      %v1746 = vpop.f32.mrb[0].mxu0
      %v1747 = vadd.f32 %v436, %v1746
      %v1748 = vpop.f32.mrb[0].mxu0
      %v1749 = vadd.f32 %v441, %v1748
      %v1750 = vpop.f32.mrb[0].mxu0
      %v1751 = vadd.f32 %v441, %v1750
      %1752 = vdwg.mxu0
      %1753 = vmatprep.subr.bf16.mxu0 %v1214
      %1754 = vmatpush1.bf16.msra.mxu0 %v1213
      %1755 = vmatprep.subr.bf16.mxu0 %v1222
      %1756 = vmatpush1.bf16.msra.mxu0 %v1221
      %1757 = vmatprep.subr.bf16.mxu0 %v1230
      %1758 = vmatpush1.bf16.msra.mxu0 %v1229
      %1759 = vmatprep.subr.bf16.mxu0 %v1238
      %1760 = vmatpush1.bf16.msra.mxu0 %v1237
      %1761 = vmatprep.subr.bf16.mxu0 %v1246
      %1762 = vmatpush1.bf16.msra.mxu0 %v1245
      %1763 = vmatprep.subr.bf16.mxu0 %v1254
      %1764 = vmatpush1.bf16.msra.mxu0 %v1253
      %1765 = vmatprep.subr.bf16.mxu0 %v1262
      %1766 = vmatpush1.bf16.msra.mxu0 %v1261
      %1767 = vmatprep.subr.bf16.mxu0 %v1270
      %1768 = vmatpush1.bf16.msra.mxu0 %v1269
      %1769 = vmatprep.subr.bf16.mxu0 %v1278
      %1770 = vmatpush1.bf16.msra.mxu0 %v1277
      %1771 = vmatprep.subr.bf16.mxu0 0
      %1772 = vmatpush1.bf16.msra.mxu0 0
      %1773 = vmatprep.subr.bf16.mxu0 0
      %1774 = vmatpush1.bf16.msra.mxu0 0
      %1775 = vmatprep.subr.bf16.mxu0 0
      %1776 = vmatpush1.bf16.msra.mxu0 0
      %1777 = vmatprep.subr.bf16.mxu0 0
      %1778 = vmatpush1.bf16.msra.mxu0 0
      %1779 = vmatprep.subr.bf16.mxu0 0
      %1780 = vmatpush1.bf16.msra.mxu0 0
      %1781 = vmatprep.subr.bf16.mxu0 0
      %1782 = vmatpush1.bf16.msra.mxu0 0
      %1783 = vmatprep.subr.bf16.mxu0 0
      %1784 = vmatpush1.bf16.msra.mxu0 0
      %1785 = vmatprep.mubr.bf16.mxu0 %v1483
      %1786 = vmatmul.mubr.bf16.gmra.mrb[0].mxu0 %v469
      %v1787 = vpop.f32.mrb[0].mxu0
      %v1788 = vadd.f32 %v1735, %v1787
      %v1789 = vpop.f32.mrb[0].mxu0
      %v1790 = vadd.f32 %v1737, %v1789
      %v1791 = vpop.f32.mrb[0].mxu0
      %v1792 = vadd.f32 %v1739, %v1791
      %v1793 = vpop.f32.mrb[0].mxu0
      %v1794 = vadd.f32 %v1741, %v1793
      %1795 = vmatprep.mubr.bf16.mxu0 %v1486
      %1796 = vmatmul.mubr.bf16.gmra.mrb[0].mxu0 %v473
      %v1797 = vpop.f32.mrb[0].mxu0
      %v1798 = vadd.f32 %v1745, %v1797
      %v1799 = vpop.f32.mrb[0].mxu0
      %v1800 = vadd.f32 %v1747, %v1799
      %v1801 = vpop.f32.mrb[0].mxu0
      %v1802 = vadd.f32 %v1749, %v1801
      %v1803 = vpop.f32.mrb[0].mxu0
      %v1804 = vadd.f32 %v1751, %v1803
      %1805 = vdwg.mxu0
      %1806 = vmatprep.subr.bf16.mxu0 %v1088
      %1807 = vmatpush1.bf16.msra.mxu0 %v1087
      %1808 = vmatprep.subr.bf16.mxu0 %v1096
      %1809 = vmatpush1.bf16.msra.mxu0 %v1095
      %1810 = vmatprep.subr.bf16.mxu0 %v1104
      %1811 = vmatpush1.bf16.msra.mxu0 %v1103
      %1812 = vmatprep.subr.bf16.mxu0 %v1112
      %1813 = vmatpush1.bf16.msra.mxu0 %v1111
      %1814 = vmatprep.subr.bf16.mxu0 %v1120
      %1815 = vmatpush1.bf16.msra.mxu0 %v1119
      %1816 = vmatprep.subr.bf16.mxu0 %v1128
      %1817 = vmatpush1.bf16.msra.mxu0 %v1127
      %1818 = vmatprep.subr.bf16.mxu0 %v1136
      %1819 = vmatpush1.bf16.msra.mxu0 %v1135
      %1820 = vmatprep.subr.bf16.mxu0 %v1144
      %1821 = vmatpush1.bf16.msra.mxu0 %v1143
      %1822 = vmatprep.subr.bf16.mxu0 %v1152
      %1823 = vmatpush1.bf16.msra.mxu0 %v1151
      %1824 = vmatprep.subr.bf16.mxu0 %v1160
      %1825 = vmatpush1.bf16.msra.mxu0 %v1159
      %1826 = vmatprep.subr.bf16.mxu0 %v1168
      %1827 = vmatpush1.bf16.msra.mxu0 %v1167
      %1828 = vmatprep.subr.bf16.mxu0 %v1176
      %1829 = vmatpush1.bf16.msra.mxu0 %v1175
      %1830 = vmatprep.subr.bf16.mxu0 %v1184
      %1831 = vmatpush1.bf16.msra.mxu0 %v1183
      %1832 = vmatprep.subr.bf16.mxu0 %v1192
      %1833 = vmatpush1.bf16.msra.mxu0 %v1191
      %1834 = vmatprep.subr.bf16.mxu0 %v1200
      %1835 = vmatpush1.bf16.msra.mxu0 %v1199
      %1836 = vmatprep.subr.bf16.mxu0 %v1208
      %1837 = vmatpush1.bf16.msra.mxu0 %v1207
      %1838 = vmatprep.mubr.bf16.mxu0 %v468
      %1839 = vmatmul.mubr.bf16.gmra.mrb[0].mxu0 %v467
      %v1840 = vpop.f32.mrb[0].mxu0
      %v1841 = vadd.f32 %v426, %v1840
      %v1842 = vpop.f32.mrb[0].mxu0
      %v1843 = vadd.f32 %v426, %v1842
      %v1844 = vpop.f32.mrb[0].mxu0
      %v1845 = vadd.f32 %v431, %v1844
      %v1846 = vpop.f32.mrb[0].mxu0
      %v1847 = vadd.f32 %v431, %v1846
      %1848 = vmatprep.mubr.bf16.mxu0 %v472
      %1849 = vmatmul.mubr.bf16.gmra.mrb[0].mxu0 %v471
      %v1850 = vpop.f32.mrb[0].mxu0
      %v1851 = vadd.f32 %v436, %v1850
      %v1852 = vpop.f32.mrb[0].mxu0
      %v1853 = vadd.f32 %v436, %v1852
      %v1854 = vpop.f32.mrb[0].mxu0
      %v1855 = vadd.f32 %v441, %v1854
      %v1856 = vpop.f32.mrb[0].mxu0
      %v1857 = vadd.f32 %v441, %v1856
      %1858 = vdwg.mxu0
      %1859 = vmatprep.subr.bf16.mxu0 %v1216
      %1860 = vmatpush1.bf16.msra.mxu0 %v1215
      %1861 = vmatprep.subr.bf16.mxu0 %v1224
      %1862 = vmatpush1.bf16.msra.mxu0 %v1223
      %1863 = vmatprep.subr.bf16.mxu0 %v1232
      %1864 = vmatpush1.bf16.msra.mxu0 %v1231
      %1865 = vmatprep.subr.bf16.mxu0 %v1240
      %1866 = vmatpush1.bf16.msra.mxu0 %v1239
      %1867 = vmatprep.subr.bf16.mxu0 %v1248
      %1868 = vmatpush1.bf16.msra.mxu0 %v1247
      %1869 = vmatprep.subr.bf16.mxu0 %v1256
      %1870 = vmatpush1.bf16.msra.mxu0 %v1255
      %1871 = vmatprep.subr.bf16.mxu0 %v1264
      %1872 = vmatpush1.bf16.msra.mxu0 %v1263
      %1873 = vmatprep.subr.bf16.mxu0 %v1272
      %1874 = vmatpush1.bf16.msra.mxu0 %v1271
      %1875 = vmatprep.subr.bf16.mxu0 %v1280
      %1876 = vmatpush1.bf16.msra.mxu0 %v1279
      %1877 = vmatprep.subr.bf16.mxu0 0
      %1878 = vmatpush1.bf16.msra.mxu0 0
      %1879 = vmatprep.subr.bf16.mxu0 0
      %1880 = vmatpush1.bf16.msra.mxu0 0
      %1881 = vmatprep.subr.bf16.mxu0 0
      %1882 = vmatpush1.bf16.msra.mxu0 0
      %1883 = vmatprep.subr.bf16.mxu0 0
      %1884 = vmatpush1.bf16.msra.mxu0 0
      %1885 = vmatprep.subr.bf16.mxu0 0
      %1886 = vmatpush1.bf16.msra.mxu0 0
      %1887 = vmatprep.subr.bf16.mxu0 0
      %1888 = vmatpush1.bf16.msra.mxu0 0
      %1889 = vmatprep.subr.bf16.mxu0 0
      %1890 = vmatpush1.bf16.msra.mxu0 0
      %1891 = vmatprep.mubr.bf16.mxu0 %v1483
      %1892 = vmatmul.mubr.bf16.gmra.mrb[0].mxu0 %v469
      %v1893 = vpop.f32.mrb[0].mxu0
      %v1894 = vadd.f32 %v1841, %v1893
      %v1895 = vpop.f32.mrb[0].mxu0
      %v1896 = vadd.f32 %v1843, %v1895
      %v1897 = vpop.f32.mrb[0].mxu0
      %v1898 = vadd.f32 %v1845, %v1897
      %v1899 = vpop.f32.mrb[0].mxu0
      %v1900 = vadd.f32 %v1847, %v1899
      %1901 = vmatprep.mubr.bf16.mxu0 %v1486
      %1902 = vmatmul.mubr.bf16.gmra.mrb[0].mxu0 %v473
      %v1903 = vpop.f32.mrb[0].mxu0
      %v1904 = vadd.f32 %v1851, %v1903
      %v1905 = vpop.f32.mrb[0].mxu0
      %v1906 = vadd.f32 %v1853, %v1905
      %v1907 = vpop.f32.mrb[0].mxu0
      %v1908 = vadd.f32 %v1855, %v1907
      %v1909 = vpop.f32.mrb[0].mxu0
      %v1910 = vadd.f32 %v1857, %v1909
      %1911 = vdwg.mxu0
      %v1912 = vmax.f32 %v1576, 0.0
      %v1913 = vmax.f32 %v1578, 0.0
      %v1914 = vmax.f32 %v1682, 0.0
      %v1915 = vmax.f32 %v1684, 0.0
      %v1916 = vmax.f32 %v1788, 0.0
      %v1917 = vmax.f32 %v1790, 0.0
      %v1918 = vmax.f32 %v1894, 0.0
      %v1919 = vmax.f32 %v1896, 0.0
      %v1920 = vmax.f32 %v1580, 0.0
      %v1921 = vmax.f32 %v1582, 0.0
      %v1922 = vmax.f32 %v1686, 0.0
      %v1923 = vmax.f32 %v1688, 0.0
      %v1924 = vmax.f32 %v1792, 0.0
      %v1925 = vmax.f32 %v1794, 0.0
      %v1926 = vmax.f32 %v1898, 0.0
      %v1927 = vmax.f32 %v1900, 0.0
      %v1928 = vmax.f32 %v1586, 0.0
      %v1929 = vmax.f32 %v1588, 0.0
      %v1930 = vmax.f32 %v1692, 0.0
      %v1931 = vmax.f32 %v1694, 0.0
      %v1932 = vmax.f32 %v1798, 0.0
      %v1933 = vmax.f32 %v1800, 0.0
      %v1934 = vmax.f32 %v1904, 0.0
      %v1935 = vmax.f32 %v1906, 0.0
      %v1936 = vmax.f32 %v1590, 0.0
      %v1937 = vmax.f32 %v1592, 0.0
      %v1938 = vmax.f32 %v1696, 0.0
      %v1939 = vmax.f32 %v1698, 0.0
      %v1940 = vmax.f32 %v1802, 0.0
      %v1941 = vmax.f32 %v1804, 0.0
      %v1942 = vmax.f32 %v1908, 0.0
      %v1943 = vmax.f32 %v1910, 0.0
      %v1944 = vpack.c.bf16 %v1920, %v1912
      %v1945 = vpack.c.bf16 %v1921, %v1913
      %v1946 = vpack.c.bf16 %v1922, %v1914
      %v1947 = vpack.c.bf16 %v1923, %v1915
      %v1948 = vpack.c.bf16 %v1924, %v1916
      %v1949 = vpack.c.bf16 %v1925, %v1917
      %v1950 = vpack.c.bf16 %v1926, %v1918
      %v1951 = vpack.c.bf16 %v1927, %v1919
      %v1952 = vpack.c.bf16 %v1936, %v1928
      %v1953 = vpack.c.bf16 %v1937, %v1929
      %v1954 = vpack.c.bf16 %v1938, %v1930
      %v1955 = vpack.c.bf16 %v1939, %v1931
      %v1956 = vpack.c.bf16 %v1940, %v1932
      %v1957 = vpack.c.bf16 %v1941, %v1933
      %v1958 = vpack.c.bf16 %v1942, %v1934
      %v1959 = vpack.c.bf16 %v1943, %v1935
      %v1976 = vunpack.c.l.b16 %v1944
      %v1977 = vunpack.c.l.b16 %v1945
      %v1978 = vunpack.c.l.b16 %v1946
      %v1979 = vunpack.c.l.b16 %v1947
      %v1980 = vunpack.c.l.b16 %v1948
      %v1981 = vunpack.c.l.b16 %v1949
      %v1982 = vunpack.c.l.b16 %v1950
      %v1983 = vunpack.c.l.b16 %v1951
      %v1984 = vunpack.c.h.b16 %v1944
      %v1985 = vunpack.c.h.b16 %v1945
      %v1986 = vunpack.c.h.b16 %v1946
      %v1987 = vunpack.c.h.b16 %v1947
      %v1988 = vunpack.c.h.b16 %v1948
      %v1989 = vunpack.c.h.b16 %v1949
      %v1990 = vunpack.c.h.b16 %v1950
      %v1991 = vunpack.c.h.b16 %v1951
      %v1992 = vunpack.c.l.b16 %v1952
      %v1993 = vunpack.c.l.b16 %v1953
      %v1994 = vunpack.c.l.b16 %v1954
      %v1995 = vunpack.c.l.b16 %v1955
      %v1996 = vunpack.c.l.b16 %v1956
      %v1997 = vunpack.c.l.b16 %v1957
      %v1998 = vunpack.c.l.b16 %v1958
      %v1999 = vunpack.c.l.b16 %v1959
      %v2000 = vunpack.c.h.b16 %v1952
      %v2001 = vunpack.c.h.b16 %v1953
      %v2002 = vunpack.c.h.b16 %v1954
      %v2003 = vunpack.c.h.b16 %v1955
      %v2004 = vunpack.c.h.b16 %v1956
      %v2005 = vunpack.c.h.b16 %v1957
      %v2006 = vunpack.c.h.b16 %v1958
      %v2007 = vunpack.c.h.b16 %v1959
      %v2008 = vpack.c.b16 %v1977, %v1976
      %v2009 = vpack.c.b16 %v1979, %v1978
      %v2010 = vpack.c.b16 %v1981, %v1980
      %v2011 = vpack.c.b16 %v1983, %v1982
      %v2012 = vpack.c.b16 %v1985, %v1984
      %v2013 = vpack.c.b16 %v1987, %v1986
      %v2014 = vpack.c.b16 %v1989, %v1988
      %v2015 = vpack.c.b16 %v1991, %v1990
      %v2016 = vpack.c.b16 %v1993, %v1992
      %v2017 = vpack.c.b16 %v1995, %v1994
      %v2018 = vpack.c.b16 %v1997, %v1996
      %v2019 = vpack.c.b16 %v1999, %v1998
      %v2020 = vpack.c.b16 %v2001, %v2000
      %v2021 = vpack.c.b16 %v2003, %v2002
      %v2022 = vpack.c.b16 %v2005, %v2004
      %v2023 = vpack.c.b16 %v2007, %v2006
      %2040 = vst [vmem:[%s208] sm:$0xff] %v2008
      %2041 = vst [vmem:[%s208 + $0x8] sm:$0xff] %v2009
      %2042 = vst [vmem:[%s208 + $0x10] sm:$0xff] %v2010
      %2043 = vst [vmem:[%s208 + $0x18] sm:$0xff] %v2011
      %2044 = vst [vmem:[%s208 + $0x20] sm:$0xff] %v2012
      %2045 = vst [vmem:[%s208 + $0x28] sm:$0xff] %v2013
      %2046 = vst [vmem:[%s208 + $0x30] sm:$0xff] %v2014
      %2047 = vst [vmem:[%s208 + $0x38] sm:$0xff] %v2015
      %2048 = vst [vmem:[%s208 + $0x40] sm:$0xff] %v2016
      %2049 = vst [vmem:[%s208 + $0x48] sm:$0xff] %v2017
      %2050 = vst [vmem:[%s208 + $0x50] sm:$0xff] %v2018
      %2051 = vst [vmem:[%s208 + $0x58] sm:$0xff] %v2019
      %2052 = vst [vmem:[%s208 + $0x60] sm:$0xff] %v2020
      %2053 = vst [vmem:[%s208 + $0x68] sm:$0xff] %v2021
      %2054 = vst [vmem:[%s208 + $0x70] sm:$0xff] %v2022
      %2055 = vst [vmem:[%s208 + $0x78] sm:$0xff] %v2023
      %s2056 = smul.u32 8, %s19
      %p2057 = scmp.lt.s32.totalorder %s18, 1
      %s2058 = scalar_select %p2057, %s18, 1
      %p2059 = scmp.lt.s32.totalorder %s2056, 7
      %s2060 = scalar_select %p2059, %s2056, 7
      %s2061 = smul.addr %s2058, 32
      %s2062 = sadd.s32 %s2060, %s2061
      %s2063 = smul.addr %s2062, 4
      %s2064 = scalar_lea.vmem %s3, %s2063
      // Predicated region
      $region33: #{_lambda_.6} parent=31 // pred_check
        %p2065 = pneg %p116
      $region34: #{_lambda_.6} parent=31 // pred_check_branch
        %2067 = sbr.rel (%p2065) target = $region36
      $region35: #{_lambda_.6} parent=31 // pred_region
        %s2068 = smul.u32 8, %s19
      $region36: #{_lambda_.6} parent=31 // pred_fallthru
        _
    $region32: #{_lambda_.6} parent=5 // pred_fallthru
      _
    %p2069 = scmp.le.s32.totalorder 2, %s9
    // Predicated region
    $region37: #{_lambda_.6} parent=5 // pred_check
      %p2070 = pneg %p2069
    $region38: #{_lambda_.6} parent=5 // pred_check_branch
      %2072 = sbr.rel (%p2070) target = $region40
    $region39: #{_lambda_.6} parent=5 // pred_region
      %s2073 = ssub.s32 %s9, 2
      // Predicated region
      $region41: #{_lambda_.6} parent=39 // pred_check
        %p2074 = pneg %p122
      $region42: #{_lambda_.6} parent=39 // pred_check_branch
        %2076 = sbr.rel (%p2074) target = $region44
      $region43: #{_lambda_.6} parent=39 // pred_region
        %s2077 = smul.u32 8, %s21
        %p2078 = scmp.lt.s32.totalorder %s20, 1
        %s2079 = scalar_select %p2078, %s20, 1
        %p2080 = scmp.lt.s32.totalorder %s2077, 7
        %s2081 = scalar_select %p2080, %s2077, 7
        %s2082 = smul.addr %s2079, 32
        %s2083 = sadd.s32 %s2081, %s2082
        %s2084 = smul.addr %s2083, 4
        %s2085 = scalar_lea.vmem %s3, %s2084
      $region44: #{_lambda_.6} parent=39 // pred_fallthru
        _
    $region40: #{_lambda_.6} parent=5 // pred_fallthru
      _
  $region6: #{_lambda_.6} parent=0 // loop_footer
    %s13 = sadd.s32 1, %s9
  $region7: #{_lambda_.6} parent=0 // loop_footer_branch
    %8 = sbr.rel target = $region3
  $region8: #{_lambda_.6} parent=0 // loop_exit
    _

// kernel: _lambda_.7
$region0: #{_lambda_.7}
  #allocation0 [shape = 'u32[]', space=smem, size = 0x4, offset = 0x4, fixed_abs, tag = 'smem constant byte address 0x4 - core index']
  #allocation1 [shape = 'u32[144,128]{1,0:T(1,128)}', space=vmem, size = 0x12000, scoped, tag = 'internal scratch']
  %s0 = inlined_call_operand.vmem [shape: bf16[2,800,256], index: 0, kind: input, shape index: {}]
  %s1 = inlined_call_operand.vmem [shape: bf16[32,800], index: 1, kind: input, shape index: {}]
  %s2 = inlined_call_operand.vmem [shape: f32[32,1], index: 2, kind: input, shape index: {}]
  %s3 = inlined_call_operand.vmem [shape: bf16[2,32,256], index: 3, kind: output, shape index: {}]
  %s4 = sld [smem:[#allocation0]]
  $region45: #{_lambda_.7} parent=0
    _
  %s6 = ssub.s32 1, %s4
  %s7 = scalar_select 0, %s6, %s4
  loop: start=0, step=1, limit=4
  $region2: #{_lambda_.7} parent=0 // loop_pre_header
    _
  $region3: #{_lambda_.7} parent=0 // loop_header
    %s9 = sphi 0, %s13
    %p10 = scmp.ge.s32.totalorder %s9, 4
    %s16 = sphi 0, %s28
    %s17 = sphi 0, %s24
    %s18 = sphi 0, %s16
    %s19 = sphi 0, %s17
    %s20 = sphi 0, %s18
    %s21 = sphi 0, %s19
    %s33 = sphi 0, %s35
    %s36 = sphi 0, %s33
    %s37 = sphi 0, %s36
    %s53 = sphi 0, %s37
    %s57 = sphi 0, %s57
    %s59 = sphi 0, %s57
    %s60 = sphi 0, %s59
    %s74 = sphi 0, %s60
    %s78 = sphi 0, %s78
    %s80 = sphi 0, %s78
    %s81 = sphi 0, %s80
    %s95 = sphi 0, %s81
    %s103 = sphi 0, %s105
    %s106 = sphi 0, %s103
    %s107 = sphi 0, %s106
    %s123 = sphi 0, %s107
  $region4: #{_lambda_.7} parent=0 // loop_header_branch
    %12 = sbr.rel (%p10) target = $region8
  $region5: #{_lambda_.7} parent=0 // loop_body
    %s14 = ssub.s32 %s9, 1
    %s15 = ssub.s32 %s9, 2
    %s22 = sadd.s32 1, %s17
    %p23 = scmp.ge.s32.totalorder %s22, 1
    %s24 = scalar_select %p23, 0, %s22
    %s25 = sadd.s32 1, %s16
    %s26 = scalar_select %p23, %s25, %s16
    %p27 = scmp.ge.s32.totalorder %s26, 2
    %s28 = scalar_select %p27, 0, %s26
    %s29 = ssub.s32 %s16, %s28
    %s30 = ssub.s32 %s17, %s24
    %s31 = sor.u32 %s29, %s30
    %p32 = scmp.eq.s32.totalorder %s31, 0
    %s34 = sadd.s32 %s33, 1
    %s35 = scalar_select %p32, %s33, %s34
    %p38 = pneg %p32
    %p39 = scmp.eq.s32.totalorder %s9, 1
    %p40 = por %p38, %p39
    %p41 = scmp.ne.s32.totalorder %s33, %s36
    %p42 = scmp.eq.s32.totalorder %s9, 0
    %p43 = por %p41, %p42
    %p44 = scmp.ne.s32.totalorder %s33, %s36
    %p45 = scmp.eq.s32.totalorder %s14, 1
    %p46 = por %p44, %p45
    %p47 = scmp.ne.s32.totalorder %s36, %s37
    %p48 = scmp.eq.s32.totalorder %s14, 0
    %p49 = por %p47, %p48
    %p50 = scmp.ne.s32.totalorder %s36, %s37
    %p51 = scmp.eq.s32.totalorder %s15, 1
    %p52 = por %p50, %p51
    %p54 = scmp.ne.s32.totalorder %s37, %s53
    %p55 = scmp.eq.s32.totalorder %s15, 0
    %p56 = por %p54, %p55
    %s58 = sadd.s32 %s57, 1
    %p61 = scmp.eq.s32.totalorder %s9, 1
    %p62 = scmp.ne.s32.totalorder %s57, %s59
    %p63 = scmp.eq.s32.totalorder %s9, 0
    %p64 = por %p62, %p63
    %p65 = scmp.ne.s32.totalorder %s57, %s59
    %p66 = scmp.eq.s32.totalorder %s14, 1
    %p67 = por %p65, %p66
    %p68 = scmp.ne.s32.totalorder %s59, %s60
    %p69 = scmp.eq.s32.totalorder %s14, 0
    %p70 = por %p68, %p69
    %p71 = scmp.ne.s32.totalorder %s59, %s60
    %p72 = scmp.eq.s32.totalorder %s15, 1
    %p73 = por %p71, %p72
    %p75 = scmp.ne.s32.totalorder %s60, %s74
    %p76 = scmp.eq.s32.totalorder %s15, 0
    %p77 = por %p75, %p76
    %s79 = sadd.s32 %s78, 1
    %p82 = scmp.eq.s32.totalorder %s9, 1
    %p83 = scmp.ne.s32.totalorder %s78, %s80
    %p84 = scmp.eq.s32.totalorder %s9, 0
    %p85 = por %p83, %p84
    %p86 = scmp.ne.s32.totalorder %s78, %s80
    %p87 = scmp.eq.s32.totalorder %s14, 1
    %p88 = por %p86, %p87
    %p89 = scmp.ne.s32.totalorder %s80, %s81
    %p90 = scmp.eq.s32.totalorder %s14, 0
    %p91 = por %p89, %p90
    %p92 = scmp.ne.s32.totalorder %s80, %s81
    %p93 = scmp.eq.s32.totalorder %s15, 1
    %p94 = por %p92, %p93
    %p96 = scmp.ne.s32.totalorder %s81, %s95
    %p97 = scmp.eq.s32.totalorder %s15, 0
    %p98 = por %p96, %p97
    %s99 = ssub.s32 %s16, %s28
    %s100 = ssub.s32 %s17, %s24
    %s101 = sor.u32 %s99, %s100
    %p102 = scmp.eq.s32.totalorder %s101, 0
    %s104 = sadd.s32 %s103, 1
    %s105 = scalar_select %p102, %s103, %s104
    %p108 = pneg %p102
    %p109 = scmp.eq.s32.totalorder %s9, 1
    %p110 = por %p108, %p109
    %p111 = scmp.ne.s32.totalorder %s103, %s106
    %p112 = scmp.eq.s32.totalorder %s9, 0
    %p113 = por %p111, %p112
    %p114 = scmp.ne.s32.totalorder %s103, %s106
    %p115 = scmp.eq.s32.totalorder %s14, 1
    %p116 = por %p114, %p115
    %p117 = scmp.ne.s32.totalorder %s106, %s107
    %p118 = scmp.eq.s32.totalorder %s14, 0
    %p119 = por %p117, %p118
    %p120 = scmp.ne.s32.totalorder %s106, %s107
    %p121 = scmp.eq.s32.totalorder %s15, 1
    %p122 = por %p120, %p121
    %p124 = scmp.ne.s32.totalorder %s107, %s123
    %p125 = scmp.eq.s32.totalorder %s15, 0
    %p126 = por %p124, %p125
    %p127 = scmp.le.s32.totalorder 1, %s9
    %p128 = scmp.lt.s32.totalorder %s9, 3
    %p129 = pnand %p127, %p128
    %p130 = pneg %p129
    // Predicated region
    $region9: #{_lambda_.7} parent=5 // pred_check
      _
    $region10: #{_lambda_.7} parent=5 // pred_check_branch
      %132 = sbr.rel (%p129) target = $region12
    $region11: #{_lambda_.7} parent=5 // pred_region
      %s133 = ssub.s32 %s9, 1
      // Predicated region
      $region13: #{_lambda_.7} parent=11 // pred_check
        %p134 = pneg %p70
      $region14: #{_lambda_.7} parent=11 // pred_check_branch
        %136 = sbr.rel (%p134) target = $region16
      $region15: #{_lambda_.7} parent=11 // pred_region
        _
      $region16: #{_lambda_.7} parent=11 // pred_fallthru
        _
      // Predicated region
      $region17: #{_lambda_.7} parent=11 // pred_check
        %p137 = pneg %p91
      $region18: #{_lambda_.7} parent=11 // pred_check_branch
        %139 = sbr.rel (%p137) target = $region20
      $region19: #{_lambda_.7} parent=11 // pred_region
        _
      $region20: #{_lambda_.7} parent=11 // pred_fallthru
        _
    $region12: #{_lambda_.7} parent=5 // pred_fallthru
      _
    %p140 = scmp.lt.s32.totalorder %s9, 2
    // Predicated region
    $region21: #{_lambda_.7} parent=5 // pred_check
      %p141 = pneg %p140
    $region22: #{_lambda_.7} parent=5 // pred_check_branch
      %143 = sbr.rel (%p141) target = $region24
    $region23: #{_lambda_.7} parent=5 // pred_region
      // Predicated region
      $region25: #{_lambda_.7} parent=23 // pred_check
        %p144 = pneg %p43
      $region26: #{_lambda_.7} parent=23 // pred_check_branch
        %146 = sbr.rel (%p144) target = $region28
      $region27: #{_lambda_.7} parent=23 // pred_region
        %s147 = smul.u32 2, %s17
        %p148 = scmp.lt.s32.totalorder %s16, 1
        %s149 = scalar_select %p148, %s16, 1
        %p150 = scmp.lt.s32.totalorder %s147, 1
        %s151 = scalar_select %p150, %s147, 1
        %s152 = smul.addr %s149, 200
        %s153 = sadd.s32 %s151, %s152
        %s154 = smul.addr %s153, 4
        %s155 = scalar_lea.vmem %s0, %s154
        %s156 = smul.u32 2, %s17
      $region28: #{_lambda_.7} parent=23 // pred_fallthru
        _
    $region24: #{_lambda_.7} parent=5 // pred_fallthru
      _
    %p157 = scmp.le.s32.totalorder 1, %s9
    %p158 = scmp.lt.s32.totalorder %s9, 3
    %p159 = pnand %p157, %p158
    %p160 = pneg %p159
    // Predicated region
    $region29: #{_lambda_.7} parent=5 // pred_check
      _
    $region30: #{_lambda_.7} parent=5 // pred_check_branch
      %162 = sbr.rel (%p159) target = $region32
    $region31: #{_lambda_.7} parent=5 // pred_region
      %s163 = ssub.s32 %s9, 1
      %s164 = smul.u32 2, %s19
      %p165 = scmp.lt.s32.totalorder %s18, 1
      %s166 = scalar_select %p165, %s18, 1
      %p167 = scmp.lt.s32.totalorder %s164, 1
      %s168 = scalar_select %p167, %s164, 1
      %s169 = smul.addr %s166, 200
      %s170 = sadd.s32 %s168, %s169
      %s171 = smul.addr %s170, 4
      %s172 = scalar_lea.vmem %s0, %s171
      %p173 = pneg %p49
      %p174 = pneg %p46
      %p175 = pneg %p70
      %p176 = pneg %p67
      %p177 = pneg %p91
      %p178 = pneg %p88
      %p179 = pneg %p119
      %p180 = pneg %p116
      %s181 = smul.u32 2, %s19
      %p182 = scmp.lt.s32.totalorder %s18, 1
      %s183 = scalar_select %p182, %s18, 1
      %p184 = scmp.lt.s32.totalorder %s181, 1
      %s185 = scalar_select %p184, %s181, 1
      %s186 = smul.addr %s183, 8
      %s187 = sadd.s32 %s185, %s186
      %s188 = smul.addr %s187, 4
      %s189 = scalar_lea.vmem %s3, %s188
      %s190 = smul.u32 2, %s19
      %p191 = scmp.lt.s32.totalorder %s18, 1
      %s192 = scalar_select %p191, %s18, 1
      %p193 = scmp.lt.s32.totalorder %s190, 1
      %s194 = scalar_select %p193, %s190, 1
      %s195 = smul.addr %s192, 200
      %s196 = sadd.s32 %s194, %s195
      %s197 = smul.addr %s196, 4
      %s198 = scalar_lea.vmem %s0, %s197
      %s199 = smul.u32 2, %s19
      %s200 = smul.u32 2, %s19
      %p201 = scmp.lt.s32.totalorder %s18, 1
      %s202 = scalar_select %p201, %s18, 1
      %p203 = scmp.lt.s32.totalorder %s200, 1
      %s204 = scalar_select %p203, %s200, 1
      %s205 = smul.addr %s202, 8
      %s206 = sadd.s32 %s204, %s205
      %s207 = smul.addr %s206, 4
      %s208 = scalar_lea.vmem %s3, %s207
      %s209 = smul.u32 2, %s19
      %v211 = vld [vmem:[%s1] sm:$0xff]
      %v212 = vld [vmem:[%s1 + $0x8] sm:$0xff]
      %v213 = vld [vmem:[%s1 + $0x10] sm:$0xff]
      %v214 = vld [vmem:[%s1 + $0x18] sm:$0xf]
      %v215 = vld [vmem:[%s1 + $0x1c] sm:$0xff]
      %v216 = vld [vmem:[%s1 + $0x24] sm:$0xff]
      %v217 = vld [vmem:[%s1 + $0x2c] sm:$0xff]
      %v218 = vld [vmem:[%s1 + $0x34] sm:$0xf]
      %v219 = vld [vmem:[%s1 + $0x38] sm:$0xff]
      %v220 = vld [vmem:[%s1 + $0x40] sm:$0xff]
      %v221 = vld [vmem:[%s1 + $0x48] sm:$0xff]
      %v222 = vld [vmem:[%s1 + $0x50] sm:$0xf]
      %v223 = vld [vmem:[%s1 + $0x54] sm:$0xff]
      %v224 = vld [vmem:[%s1 + $0x5c] sm:$0xff]
      %v225 = vld [vmem:[%s1 + $0x64] sm:$0xff]
      %v226 = vld [vmem:[%s1 + $0x6c] sm:$0xf]
      %v227 = vld [vmem:[%s198] sm:$0xff]
      %v228 = vld [vmem:[%s198 + $0x8] sm:$0xff]
      %v229 = vld [vmem:[%s198 + $0x10] sm:$0xff]
      %v230 = vld [vmem:[%s198 + $0x18] sm:$0xff]
      %v231 = vld [vmem:[%s198 + $0x20] sm:$0xff]
      %v232 = vld [vmem:[%s198 + $0x28] sm:$0xff]
      %v233 = vld [vmem:[%s198 + $0x30] sm:$0xff]
      %v234 = vld [vmem:[%s198 + $0x38] sm:$0xff]
      %v235 = vld [vmem:[%s198 + $0x40] sm:$0xff]
      %v236 = vld [vmem:[%s198 + $0x48] sm:$0xff]
      %v237 = vld [vmem:[%s198 + $0x50] sm:$0xff]
      %v238 = vld [vmem:[%s198 + $0x58] sm:$0xff]
      %v239 = vld [vmem:[%s198 + $0x60] sm:$0xff]
      %v240 = vld [vmem:[%s198 + $0x68] sm:$0xff]
      %v241 = vld [vmem:[%s198 + $0x70] sm:$0xff]
      %v242 = vld [vmem:[%s198 + $0x78] sm:$0xff]
      %v243 = vld [vmem:[%s198 + $0x80] sm:$0xff]
      %v244 = vld [vmem:[%s198 + $0x88] sm:$0xff]
      %v245 = vld [vmem:[%s198 + $0x90] sm:$0xff]
      %v246 = vld [vmem:[%s198 + $0x98] sm:$0xff]
      %v247 = vld [vmem:[%s198 + $0xa0] sm:$0xff]
      %v248 = vld [vmem:[%s198 + $0xa8] sm:$0xff]
      %v249 = vld [vmem:[%s198 + $0xb0] sm:$0xff]
      %v250 = vld [vmem:[%s198 + $0xb8] sm:$0xff]
      %v251 = vld [vmem:[%s198 + $0xc0] sm:$0xff]
      %v252 = vld [vmem:[%s198 + $0xc8] sm:$0xff]
      %v253 = vld [vmem:[%s198 + $0xd0] sm:$0xff]
      %v254 = vld [vmem:[%s198 + $0xd8] sm:$0xff]
      %v255 = vld [vmem:[%s198 + $0xe0] sm:$0xff]
      %v256 = vld [vmem:[%s198 + $0xe8] sm:$0xff]
      %v257 = vld [vmem:[%s198 + $0xf0] sm:$0xff]
      %v258 = vld [vmem:[%s198 + $0xf8] sm:$0xff]
      %v259 = vld [vmem:[%s198 + $0x100] sm:$0xff]
      %v260 = vld [vmem:[%s198 + $0x108] sm:$0xff]
      %v261 = vld [vmem:[%s198 + $0x110] sm:$0xff]
      %v262 = vld [vmem:[%s198 + $0x118] sm:$0xff]
      %v263 = vld [vmem:[%s198 + $0x120] sm:$0xff]
      %v264 = vld [vmem:[%s198 + $0x128] sm:$0xff]
      %v265 = vld [vmem:[%s198 + $0x130] sm:$0xff]
      %v266 = vld [vmem:[%s198 + $0x138] sm:$0xff]
      %v267 = vld [vmem:[%s198 + $0x140] sm:$0xff]
      %v268 = vld [vmem:[%s198 + $0x148] sm:$0xff]
      %v269 = vld [vmem:[%s198 + $0x150] sm:$0xff]
      %v270 = vld [vmem:[%s198 + $0x158] sm:$0xff]
      %v271 = vld [vmem:[%s198 + $0x160] sm:$0xff]
      %v272 = vld [vmem:[%s198 + $0x168] sm:$0xff]
      %v273 = vld [vmem:[%s198 + $0x170] sm:$0xff]
      %v274 = vld [vmem:[%s198 + $0x178] sm:$0xff]
      %v275 = vld [vmem:[%s198 + $0x180] sm:$0xff]
      %v276 = vld [vmem:[%s198 + $0x188] sm:$0xff]
      %v277 = vld [vmem:[%s198 + $0x190] sm:$0xff]
      %v278 = vld [vmem:[%s198 + $0x198] sm:$0xff]
      %v279 = vld [vmem:[%s198 + $0x1a0] sm:$0xff]
      %v280 = vld [vmem:[%s198 + $0x1a8] sm:$0xff]
      %v281 = vld [vmem:[%s198 + $0x1b0] sm:$0xff]
      %v282 = vld [vmem:[%s198 + $0x1b8] sm:$0xff]
      %v283 = vld [vmem:[%s198 + $0x1c0] sm:$0xff]
      %v284 = vld [vmem:[%s198 + $0x1c8] sm:$0xff]
      %v285 = vld [vmem:[%s198 + $0x1d0] sm:$0xff]
      %v286 = vld [vmem:[%s198 + $0x1d8] sm:$0xff]
      %v287 = vld [vmem:[%s198 + $0x1e0] sm:$0xff]
      %v288 = vld [vmem:[%s198 + $0x1e8] sm:$0xff]
      %v289 = vld [vmem:[%s198 + $0x1f0] sm:$0xff]
      %v290 = vld [vmem:[%s198 + $0x1f8] sm:$0xff]
      %v291 = vld [vmem:[%s198 + $0x200] sm:$0xff]
      %v292 = vld [vmem:[%s198 + $0x208] sm:$0xff]
      %v293 = vld [vmem:[%s198 + $0x210] sm:$0xff]
      %v294 = vld [vmem:[%s198 + $0x218] sm:$0xff]
      %v295 = vld [vmem:[%s198 + $0x220] sm:$0xff]
      %v296 = vld [vmem:[%s198 + $0x228] sm:$0xff]
      %v297 = vld [vmem:[%s198 + $0x230] sm:$0xff]
      %v298 = vld [vmem:[%s198 + $0x238] sm:$0xff]
      %v299 = vld [vmem:[%s198 + $0x240] sm:$0xff]
      %v300 = vld [vmem:[%s198 + $0x248] sm:$0xff]
      %v301 = vld [vmem:[%s198 + $0x250] sm:$0xff]
      %v302 = vld [vmem:[%s198 + $0x258] sm:$0xff]
      %v303 = vld [vmem:[%s198 + $0x260] sm:$0xff]
      %v304 = vld [vmem:[%s198 + $0x268] sm:$0xff]
      %v305 = vld [vmem:[%s198 + $0x270] sm:$0xff]
      %v306 = vld [vmem:[%s198 + $0x278] sm:$0xff]
      %v307 = vld [vmem:[%s198 + $0x280] sm:$0xff]
      %v308 = vld [vmem:[%s198 + $0x288] sm:$0xff]
      %v309 = vld [vmem:[%s198 + $0x290] sm:$0xff]
      %v310 = vld [vmem:[%s198 + $0x298] sm:$0xff]
      %v311 = vld [vmem:[%s198 + $0x2a0] sm:$0xff]
      %v312 = vld [vmem:[%s198 + $0x2a8] sm:$0xff]
      %v313 = vld [vmem:[%s198 + $0x2b0] sm:$0xff]
      %v314 = vld [vmem:[%s198 + $0x2b8] sm:$0xff]
      %v315 = vld [vmem:[%s198 + $0x2c0] sm:$0xff]
      %v316 = vld [vmem:[%s198 + $0x2c8] sm:$0xff]
      %v317 = vld [vmem:[%s198 + $0x2d0] sm:$0xff]
      %v318 = vld [vmem:[%s198 + $0x2d8] sm:$0xff]
      %v319 = vld [vmem:[%s198 + $0x2e0] sm:$0xff]
      %v320 = vld [vmem:[%s198 + $0x2e8] sm:$0xff]
      %v321 = vld [vmem:[%s198 + $0x2f0] sm:$0xff]
      %v322 = vld [vmem:[%s198 + $0x2f8] sm:$0xff]
      %v323 = vld [vmem:[%s198 + $0x300] sm:$0xff]
      %v324 = vld [vmem:[%s198 + $0x308] sm:$0xff]
      %v325 = vld [vmem:[%s198 + $0x310] sm:$0xff]
      %v326 = vld [vmem:[%s198 + $0x318] sm:$0xff]
      %v327 = vld [vmem:[%s2] sm:$0xff]
      %v328 = vld [vmem:[%s2 + $0x8] sm:$0xff]
      %v329 = vld [vmem:[%s2 + $0x10] sm:$0xff]
      %v330 = vld [vmem:[%s2 + $0x18] sm:$0xff]
      %332 = vset.pattern.permute.xlu0 0
      %333 = vperm.xlu0 %332, %v327
      %v334 = vpop.permute.xlu0 %333
      %337 = vset.pattern.permute.xlu0 0
      %338 = vperm.xlu0 %337, %v328
      %v339 = vpop.permute.xlu0 %338
      %342 = vset.pattern.permute.xlu0 0
      %343 = vperm.xlu0 %342, %v329
      %v344 = vpop.permute.xlu0 %343
      %347 = vset.pattern.permute.xlu0 0
      %348 = vperm.xlu0 %347, %v330
      %v349 = vpop.permute.xlu0 %348
      %v367 = vunpack.c.l.b16 %v211
      %v368 = vunpack.c.h.b16 %v211
      %v369 = vunpack.c.l.b16 %v212
      %v370 = vunpack.c.h.b16 %v212
      %v371 = vunpack.c.l.b16 %v213
      %v372 = vunpack.c.h.b16 %v213
      %v373 = vunpack.c.l.b16 %v214
      %v374 = vunpack.c.l.b16 %v215
      %v375 = vunpack.c.h.b16 %v215
      %v376 = vunpack.c.l.b16 %v216
      %v377 = vunpack.c.h.b16 %v216
      %v378 = vunpack.c.l.b16 %v217
      %v379 = vunpack.c.h.b16 %v217
      %v380 = vunpack.c.l.b16 %v218
      %v381 = vunpack.c.l.b16 %v219
      %v382 = vunpack.c.h.b16 %v219
      %v383 = vunpack.c.l.b16 %v220
      %v384 = vunpack.c.h.b16 %v220
      %v385 = vunpack.c.l.b16 %v221
      %v386 = vunpack.c.h.b16 %v221
      %v387 = vunpack.c.l.b16 %v222
      %v388 = vunpack.c.l.b16 %v223
      %v389 = vunpack.c.h.b16 %v223
      %v390 = vunpack.c.l.b16 %v224
      %v391 = vunpack.c.h.b16 %v224
      %v392 = vunpack.c.l.b16 %v225
      %v393 = vunpack.c.h.b16 %v225
      %v394 = vunpack.c.l.b16 %v226
      %v395 = vpack.c.b16 %v374, %v367
      %v396 = vpack.c.b16 %v375, %v368
      %v397 = vpack.c.b16 %v376, %v369
      %v398 = vpack.c.b16 %v377, %v370
      %v399 = vpack.c.b16 %v378, %v371
      %v400 = vpack.c.b16 %v379, %v372
      %v401 = vpack.c.b16 %v380, %v373
      %v402 = vpack.c.b16 %v388, %v381
      %v403 = vpack.c.b16 %v389, %v382
      %v404 = vpack.c.b16 %v390, %v383
      %v405 = vpack.c.b16 %v391, %v384
      %v406 = vpack.c.b16 %v392, %v385
      %v407 = vpack.c.b16 %v393, %v386
      %v408 = vpack.c.b16 %v394, %v387
      %v521 = vunpack.c.l.b16 %v227
      %v522 = vunpack.c.h.b16 %v227
      %v523 = vunpack.c.l.b16 %v228
      %v524 = vunpack.c.h.b16 %v228
      %v525 = vunpack.c.l.b16 %v229
      %v526 = vunpack.c.h.b16 %v229
      %v527 = vunpack.c.l.b16 %v230
      %v528 = vunpack.c.h.b16 %v230
      %v529 = vunpack.c.l.b16 %v231
      %v530 = vunpack.c.h.b16 %v231
      %v531 = vunpack.c.l.b16 %v232
      %v532 = vunpack.c.h.b16 %v232
      %v533 = vunpack.c.l.b16 %v233
      %v534 = vunpack.c.h.b16 %v233
      %v535 = vunpack.c.l.b16 %v234
      %v536 = vunpack.c.h.b16 %v234
      %v537 = vunpack.c.l.b16 %v235
      %v538 = vunpack.c.h.b16 %v235
      %v539 = vunpack.c.l.b16 %v236
      %v540 = vunpack.c.h.b16 %v236
      %v541 = vunpack.c.l.b16 %v237
      %v542 = vunpack.c.h.b16 %v237
      %v543 = vunpack.c.l.b16 %v238
      %v544 = vunpack.c.h.b16 %v238
      %v545 = vunpack.c.l.b16 %v239
      %v546 = vunpack.c.h.b16 %v239
      %v547 = vunpack.c.l.b16 %v240
      %v548 = vunpack.c.h.b16 %v240
      %v549 = vunpack.c.l.b16 %v241
      %v550 = vunpack.c.h.b16 %v241
      %v551 = vunpack.c.l.b16 %v242
      %v552 = vunpack.c.h.b16 %v242
      %v553 = vunpack.c.l.b16 %v243
      %v554 = vunpack.c.h.b16 %v243
      %v555 = vunpack.c.l.b16 %v244
      %v556 = vunpack.c.h.b16 %v244
      %v557 = vunpack.c.l.b16 %v245
      %v558 = vunpack.c.h.b16 %v245
      %v559 = vunpack.c.l.b16 %v246
      %v560 = vunpack.c.h.b16 %v246
      %v561 = vunpack.c.l.b16 %v247
      %v562 = vunpack.c.h.b16 %v247
      %v563 = vunpack.c.l.b16 %v248
      %v564 = vunpack.c.h.b16 %v248
      %v565 = vunpack.c.l.b16 %v249
      %v566 = vunpack.c.h.b16 %v249
      %v567 = vunpack.c.l.b16 %v250
      %v568 = vunpack.c.h.b16 %v250
      %v569 = vunpack.c.l.b16 %v251
      %v570 = vunpack.c.h.b16 %v251
      %v571 = vunpack.c.l.b16 %v252
      %v572 = vunpack.c.h.b16 %v252
      %v573 = vunpack.c.l.b16 %v253
      %v574 = vunpack.c.h.b16 %v253
      %v575 = vunpack.c.l.b16 %v254
      %v576 = vunpack.c.h.b16 %v254
      %v577 = vunpack.c.l.b16 %v255
      %v578 = vunpack.c.h.b16 %v255
      %v579 = vunpack.c.l.b16 %v256
      %v580 = vunpack.c.h.b16 %v256
      %v581 = vunpack.c.l.b16 %v257
      %v582 = vunpack.c.h.b16 %v257
      %v583 = vunpack.c.l.b16 %v258
      %v584 = vunpack.c.h.b16 %v258
      %v585 = vunpack.c.l.b16 %v259
      %v586 = vunpack.c.h.b16 %v259
      %v587 = vunpack.c.l.b16 %v260
      %v588 = vunpack.c.h.b16 %v260
      %v589 = vunpack.c.l.b16 %v261
      %v590 = vunpack.c.h.b16 %v261
      %v591 = vunpack.c.l.b16 %v262
      %v592 = vunpack.c.h.b16 %v262
      %v593 = vunpack.c.l.b16 %v263
      %v594 = vunpack.c.h.b16 %v263
      %v595 = vunpack.c.l.b16 %v264
      %v596 = vunpack.c.h.b16 %v264
      %v597 = vunpack.c.l.b16 %v265
      %v598 = vunpack.c.h.b16 %v265
      %v599 = vunpack.c.l.b16 %v266
      %v600 = vunpack.c.h.b16 %v266
      %v601 = vunpack.c.l.b16 %v267
      %v602 = vunpack.c.h.b16 %v267
      %v603 = vunpack.c.l.b16 %v268
      %v604 = vunpack.c.h.b16 %v268
      %v605 = vunpack.c.l.b16 %v269
      %v606 = vunpack.c.h.b16 %v269
      %v607 = vunpack.c.l.b16 %v270
      %v608 = vunpack.c.h.b16 %v270
      %v609 = vunpack.c.l.b16 %v271
      %v610 = vunpack.c.h.b16 %v271
      %v611 = vunpack.c.l.b16 %v272
      %v612 = vunpack.c.h.b16 %v272
      %v613 = vunpack.c.l.b16 %v273
      %v614 = vunpack.c.h.b16 %v273
      %v615 = vunpack.c.l.b16 %v274
      %v616 = vunpack.c.h.b16 %v274
      %v617 = vunpack.c.l.b16 %v275
      %v618 = vunpack.c.h.b16 %v275
      %v619 = vunpack.c.l.b16 %v276
      %v620 = vunpack.c.h.b16 %v276
      %v621 = vunpack.c.l.b16 %v277
      %v622 = vunpack.c.h.b16 %v277
      %v623 = vunpack.c.l.b16 %v278
      %v624 = vunpack.c.h.b16 %v278
      %v625 = vunpack.c.l.b16 %v279
      %v626 = vunpack.c.h.b16 %v279
      %v627 = vunpack.c.l.b16 %v280
      %v628 = vunpack.c.h.b16 %v280
      %v629 = vunpack.c.l.b16 %v281
      %v630 = vunpack.c.h.b16 %v281
      %v631 = vunpack.c.l.b16 %v282
      %v632 = vunpack.c.h.b16 %v282
      %v633 = vunpack.c.l.b16 %v283
      %v634 = vunpack.c.h.b16 %v283
      %v635 = vunpack.c.l.b16 %v284
      %v636 = vunpack.c.h.b16 %v284
      %v637 = vunpack.c.l.b16 %v285
      %v638 = vunpack.c.h.b16 %v285
      %v639 = vunpack.c.l.b16 %v286
      %v640 = vunpack.c.h.b16 %v286
      %v641 = vunpack.c.l.b16 %v287
      %v642 = vunpack.c.h.b16 %v287
      %v643 = vunpack.c.l.b16 %v288
      %v644 = vunpack.c.h.b16 %v288
      %v645 = vunpack.c.l.b16 %v289
      %v646 = vunpack.c.h.b16 %v289
      %v647 = vunpack.c.l.b16 %v290
      %v648 = vunpack.c.h.b16 %v290
      %v649 = vunpack.c.l.b16 %v291
      %v650 = vunpack.c.h.b16 %v291
      %v651 = vunpack.c.l.b16 %v292
      %v652 = vunpack.c.h.b16 %v292
      %v653 = vunpack.c.l.b16 %v293
      %v654 = vunpack.c.h.b16 %v293
      %v655 = vunpack.c.l.b16 %v294
      %v656 = vunpack.c.h.b16 %v294
      %v657 = vunpack.c.l.b16 %v295
      %v658 = vunpack.c.h.b16 %v295
      %v659 = vunpack.c.l.b16 %v296
      %v660 = vunpack.c.h.b16 %v296
      %v661 = vunpack.c.l.b16 %v297
      %v662 = vunpack.c.h.b16 %v297
      %v663 = vunpack.c.l.b16 %v298
      %v664 = vunpack.c.h.b16 %v298
      %v665 = vunpack.c.l.b16 %v299
      %v666 = vunpack.c.h.b16 %v299
      %v667 = vunpack.c.l.b16 %v300
      %v668 = vunpack.c.h.b16 %v300
      %v669 = vunpack.c.l.b16 %v301
      %v670 = vunpack.c.h.b16 %v301
      %v671 = vunpack.c.l.b16 %v302
      %v672 = vunpack.c.h.b16 %v302
      %v673 = vunpack.c.l.b16 %v303
      %v674 = vunpack.c.h.b16 %v303
      %v675 = vunpack.c.l.b16 %v304
      %v676 = vunpack.c.h.b16 %v304
      %v677 = vunpack.c.l.b16 %v305
      %v678 = vunpack.c.h.b16 %v305
      %v679 = vunpack.c.l.b16 %v306
      %v680 = vunpack.c.h.b16 %v306
      %v681 = vunpack.c.l.b16 %v307
      %v682 = vunpack.c.h.b16 %v307
      %v683 = vunpack.c.l.b16 %v308
      %v684 = vunpack.c.h.b16 %v308
      %v685 = vunpack.c.l.b16 %v309
      %v686 = vunpack.c.h.b16 %v309
      %v687 = vunpack.c.l.b16 %v310
      %v688 = vunpack.c.h.b16 %v310
      %v689 = vunpack.c.l.b16 %v311
      %v690 = vunpack.c.h.b16 %v311
      %v691 = vunpack.c.l.b16 %v312
      %v692 = vunpack.c.h.b16 %v312
      %v693 = vunpack.c.l.b16 %v313
      %v694 = vunpack.c.h.b16 %v313
      %v695 = vunpack.c.l.b16 %v314
      %v696 = vunpack.c.h.b16 %v314
      %v697 = vunpack.c.l.b16 %v315
      %v698 = vunpack.c.h.b16 %v315
      %v699 = vunpack.c.l.b16 %v316
      %v700 = vunpack.c.h.b16 %v316
      %v701 = vunpack.c.l.b16 %v317
      %v702 = vunpack.c.h.b16 %v317
      %v703 = vunpack.c.l.b16 %v318
      %v704 = vunpack.c.h.b16 %v318
      %v705 = vunpack.c.l.b16 %v319
      %v706 = vunpack.c.h.b16 %v319
      %v707 = vunpack.c.l.b16 %v320
      %v708 = vunpack.c.h.b16 %v320
      %v709 = vunpack.c.l.b16 %v321
      %v710 = vunpack.c.h.b16 %v321
      %v711 = vunpack.c.l.b16 %v322
      %v712 = vunpack.c.h.b16 %v322
      %v713 = vunpack.c.l.b16 %v323
      %v714 = vunpack.c.h.b16 %v323
      %v715 = vunpack.c.l.b16 %v324
      %v716 = vunpack.c.h.b16 %v324
      %v717 = vunpack.c.l.b16 %v325
      %v718 = vunpack.c.h.b16 %v325
      %v719 = vunpack.c.l.b16 %v326
      %v720 = vunpack.c.h.b16 %v326
      %v721 = vpack.c.b16 %v523, %v521
      %v722 = vpack.c.b16 %v524, %v522
      %v723 = vpack.c.b16 %v527, %v525
      %v724 = vpack.c.b16 %v528, %v526
      %v725 = vpack.c.b16 %v531, %v529
      %v726 = vpack.c.b16 %v532, %v530
      %v727 = vpack.c.b16 %v535, %v533
      %v728 = vpack.c.b16 %v536, %v534
      %v729 = vpack.c.b16 %v539, %v537
      %v730 = vpack.c.b16 %v540, %v538
      %v731 = vpack.c.b16 %v543, %v541
      %v732 = vpack.c.b16 %v544, %v542
      %v733 = vpack.c.b16 %v547, %v545
      %v734 = vpack.c.b16 %v548, %v546
      %v735 = vpack.c.b16 %v551, %v549
      %v736 = vpack.c.b16 %v552, %v550
      %v737 = vpack.c.b16 %v555, %v553
      %v738 = vpack.c.b16 %v556, %v554
      %v739 = vpack.c.b16 %v559, %v557
      %v740 = vpack.c.b16 %v560, %v558
      %v741 = vpack.c.b16 %v563, %v561
      %v742 = vpack.c.b16 %v564, %v562
      %v743 = vpack.c.b16 %v567, %v565
      %v744 = vpack.c.b16 %v568, %v566
      %v745 = vpack.c.b16 %v571, %v569
      %v746 = vpack.c.b16 %v572, %v570
      %v747 = vpack.c.b16 %v575, %v573
      %v748 = vpack.c.b16 %v576, %v574
      %v749 = vpack.c.b16 %v579, %v577
      %v750 = vpack.c.b16 %v580, %v578
      %v751 = vpack.c.b16 %v583, %v581
      %v752 = vpack.c.b16 %v584, %v582
      %v753 = vpack.c.b16 %v587, %v585
      %v754 = vpack.c.b16 %v588, %v586
      %v755 = vpack.c.b16 %v591, %v589
      %v756 = vpack.c.b16 %v592, %v590
      %v757 = vpack.c.b16 %v595, %v593
      %v758 = vpack.c.b16 %v596, %v594
      %v759 = vpack.c.b16 %v599, %v597
      %v760 = vpack.c.b16 %v600, %v598
      %v761 = vpack.c.b16 %v603, %v601
      %v762 = vpack.c.b16 %v604, %v602
      %v763 = vpack.c.b16 %v607, %v605
      %v764 = vpack.c.b16 %v608, %v606
      %v765 = vpack.c.b16 %v611, %v609
      %v766 = vpack.c.b16 %v612, %v610
      %v767 = vpack.c.b16 %v615, %v613
      %v768 = vpack.c.b16 %v616, %v614
      %v769 = vpack.c.b16 %v619, %v617
      %v770 = vpack.c.b16 %v620, %v618
      %v771 = vpack.c.b16 %v623, %v621
      %v772 = vpack.c.b16 %v624, %v622
      %v773 = vpack.c.b16 %v627, %v625
      %v774 = vpack.c.b16 %v628, %v626
      %v775 = vpack.c.b16 %v631, %v629
      %v776 = vpack.c.b16 %v632, %v630
      %v777 = vpack.c.b16 %v635, %v633
      %v778 = vpack.c.b16 %v636, %v634
      %v779 = vpack.c.b16 %v639, %v637
      %v780 = vpack.c.b16 %v640, %v638
      %v781 = vpack.c.b16 %v643, %v641
      %v782 = vpack.c.b16 %v644, %v642
      %v783 = vpack.c.b16 %v647, %v645
      %v784 = vpack.c.b16 %v648, %v646
      %v785 = vpack.c.b16 %v651, %v649
      %v786 = vpack.c.b16 %v652, %v650
      %v787 = vpack.c.b16 %v655, %v653
      %v788 = vpack.c.b16 %v656, %v654
      %v789 = vpack.c.b16 %v659, %v657
      %v790 = vpack.c.b16 %v660, %v658
      %v791 = vpack.c.b16 %v663, %v661
      %v792 = vpack.c.b16 %v664, %v662
      %v793 = vpack.c.b16 %v667, %v665
      %v794 = vpack.c.b16 %v668, %v666
      %v795 = vpack.c.b16 %v671, %v669
      %v796 = vpack.c.b16 %v672, %v670
      %v797 = vpack.c.b16 %v675, %v673
      %v798 = vpack.c.b16 %v676, %v674
      %v799 = vpack.c.b16 %v679, %v677
      %v800 = vpack.c.b16 %v680, %v678
      %v801 = vpack.c.b16 %v683, %v681
      %v802 = vpack.c.b16 %v684, %v682
      %v803 = vpack.c.b16 %v687, %v685
      %v804 = vpack.c.b16 %v688, %v686
      %v805 = vpack.c.b16 %v691, %v689
      %v806 = vpack.c.b16 %v692, %v690
      %v807 = vpack.c.b16 %v695, %v693
      %v808 = vpack.c.b16 %v696, %v694
      %v809 = vpack.c.b16 %v699, %v697
      %v810 = vpack.c.b16 %v700, %v698
      %v811 = vpack.c.b16 %v703, %v701
      %v812 = vpack.c.b16 %v704, %v702
      %v813 = vpack.c.b16 %v707, %v705
      %v814 = vpack.c.b16 %v708, %v706
      %v815 = vpack.c.b16 %v711, %v709
      %v816 = vpack.c.b16 %v712, %v710
      %v817 = vpack.c.b16 %v715, %v713
      %v818 = vpack.c.b16 %v716, %v714
      %v819 = vpack.c.b16 %v719, %v717
      %v820 = vpack.c.b16 %v720, %v718
      %vm921 = vcmask 261120
      %v923 = vsel %vm921, %v401, 0
      %v926 = vsel %vm921, %v408, 0
      %928 = vmatprep.subr.bf16.mxu0 %v722
      %929 = vmatpush1.bf16.msra.mxu0 %v721
      %930 = vmatprep.subr.bf16.mxu0 %v724
      %931 = vmatpush1.bf16.msra.mxu0 %v723
      %932 = vmatprep.subr.bf16.mxu0 %v726
      %933 = vmatpush1.bf16.msra.mxu0 %v725
      %934 = vmatprep.subr.bf16.mxu0 %v728
      %935 = vmatpush1.bf16.msra.mxu0 %v727
      %936 = vmatprep.subr.bf16.mxu0 %v730
      %937 = vmatpush1.bf16.msra.mxu0 %v729
      %938 = vmatprep.subr.bf16.mxu0 %v732
      %939 = vmatpush1.bf16.msra.mxu0 %v731
      %940 = vmatprep.subr.bf16.mxu0 %v734
      %941 = vmatpush1.bf16.msra.mxu0 %v733
      %942 = vmatprep.subr.bf16.mxu0 %v736
      %943 = vmatpush1.bf16.msra.mxu0 %v735
      %944 = vmatprep.subr.bf16.mxu0 %v738
      %945 = vmatpush1.bf16.msra.mxu0 %v737
      %946 = vmatprep.subr.bf16.mxu0 %v740
      %947 = vmatpush1.bf16.msra.mxu0 %v739
      %948 = vmatprep.subr.bf16.mxu0 %v742
      %949 = vmatpush1.bf16.msra.mxu0 %v741
      %950 = vmatprep.subr.bf16.mxu0 %v744
      %951 = vmatpush1.bf16.msra.mxu0 %v743
      %952 = vmatprep.subr.bf16.mxu0 %v746
      %953 = vmatpush1.bf16.msra.mxu0 %v745
      %954 = vmatprep.subr.bf16.mxu0 %v748
      %955 = vmatpush1.bf16.msra.mxu0 %v747
      %956 = vmatprep.subr.bf16.mxu0 %v750
      %957 = vmatpush1.bf16.msra.mxu0 %v749
      %958 = vmatprep.subr.bf16.mxu0 %v752
      %959 = vmatpush1.bf16.msra.mxu0 %v751
      %960 = vmatprep.mubr.bf16.mxu0 %v396
      %961 = vmatmul.mubr.bf16.gmra.mrb[0].mxu0 %v395
      %v962 = vpop.f32.mrb[0].mxu0
      %v963 = vadd.f32 %v334, %v962
      %v964 = vpop.f32.mrb[0].mxu0
      %v965 = vadd.f32 %v334, %v964
      %v966 = vpop.f32.mrb[0].mxu0
      %v967 = vadd.f32 %v339, %v966
      %v968 = vpop.f32.mrb[0].mxu0
      %v969 = vadd.f32 %v339, %v968
      %970 = vmatprep.mubr.bf16.mxu0 %v403
      %971 = vmatmul.mubr.bf16.gmra.mrb[0].mxu0 %v402
      %v972 = vpop.f32.mrb[0].mxu0
      %v973 = vadd.f32 %v344, %v972
      %v974 = vpop.f32.mrb[0].mxu0
      %v975 = vadd.f32 %v344, %v974
      %v976 = vpop.f32.mrb[0].mxu0
      %v977 = vadd.f32 %v349, %v976
      %v978 = vpop.f32.mrb[0].mxu0
      %v979 = vadd.f32 %v349, %v978
      %980 = vdwg.mxu0
      %981 = vmatprep.subr.bf16.mxu0 %v754
      %982 = vmatpush1.bf16.msra.mxu0 %v753
      %983 = vmatprep.subr.bf16.mxu0 %v756
      %984 = vmatpush1.bf16.msra.mxu0 %v755
      %985 = vmatprep.subr.bf16.mxu0 %v758
      %986 = vmatpush1.bf16.msra.mxu0 %v757
      %987 = vmatprep.subr.bf16.mxu0 %v760
      %988 = vmatpush1.bf16.msra.mxu0 %v759
      %989 = vmatprep.subr.bf16.mxu0 %v762
      %990 = vmatpush1.bf16.msra.mxu0 %v761
      %991 = vmatprep.subr.bf16.mxu0 %v764
      %992 = vmatpush1.bf16.msra.mxu0 %v763
      %993 = vmatprep.subr.bf16.mxu0 %v766
      %994 = vmatpush1.bf16.msra.mxu0 %v765
      %995 = vmatprep.subr.bf16.mxu0 %v768
      %996 = vmatpush1.bf16.msra.mxu0 %v767
      %997 = vmatprep.subr.bf16.mxu0 %v770
      %998 = vmatpush1.bf16.msra.mxu0 %v769
      %999 = vmatprep.subr.bf16.mxu0 %v772
      %1000 = vmatpush1.bf16.msra.mxu0 %v771
      %1001 = vmatprep.subr.bf16.mxu0 %v774
      %1002 = vmatpush1.bf16.msra.mxu0 %v773
      %1003 = vmatprep.subr.bf16.mxu0 %v776
      %1004 = vmatpush1.bf16.msra.mxu0 %v775
      %1005 = vmatprep.subr.bf16.mxu0 %v778
      %1006 = vmatpush1.bf16.msra.mxu0 %v777
      %1007 = vmatprep.subr.bf16.mxu0 %v780
      %1008 = vmatpush1.bf16.msra.mxu0 %v779
      %1009 = vmatprep.subr.bf16.mxu0 %v782
      %1010 = vmatpush1.bf16.msra.mxu0 %v781
      %1011 = vmatprep.subr.bf16.mxu0 %v784
      %1012 = vmatpush1.bf16.msra.mxu0 %v783
      %1013 = vmatprep.mubr.bf16.mxu0 %v398
      %1014 = vmatmul.mubr.bf16.gmra.mrb[0].mxu0 %v397
      %v1015 = vpop.f32.mrb[0].mxu0
      %v1016 = vadd.f32 %v963, %v1015
      %v1017 = vpop.f32.mrb[0].mxu0
      %v1018 = vadd.f32 %v965, %v1017
      %v1019 = vpop.f32.mrb[0].mxu0
      %v1020 = vadd.f32 %v967, %v1019
      %v1021 = vpop.f32.mrb[0].mxu0
      %v1022 = vadd.f32 %v969, %v1021
      %1023 = vmatprep.mubr.bf16.mxu0 %v405
      %1024 = vmatmul.mubr.bf16.gmra.mrb[0].mxu0 %v404
      %v1025 = vpop.f32.mrb[0].mxu0
      %v1026 = vadd.f32 %v973, %v1025
      %v1027 = vpop.f32.mrb[0].mxu0
      %v1028 = vadd.f32 %v975, %v1027
      %v1029 = vpop.f32.mrb[0].mxu0
      %v1030 = vadd.f32 %v977, %v1029
      %v1031 = vpop.f32.mrb[0].mxu0
      %v1032 = vadd.f32 %v979, %v1031
      %1033 = vdwg.mxu0
      %1034 = vmatprep.subr.bf16.mxu0 %v786
      %1035 = vmatpush1.bf16.msra.mxu0 %v785
      %1036 = vmatprep.subr.bf16.mxu0 %v788
      %1037 = vmatpush1.bf16.msra.mxu0 %v787
      %1038 = vmatprep.subr.bf16.mxu0 %v790
      %1039 = vmatpush1.bf16.msra.mxu0 %v789
      %1040 = vmatprep.subr.bf16.mxu0 %v792
      %1041 = vmatpush1.bf16.msra.mxu0 %v791
      %1042 = vmatprep.subr.bf16.mxu0 %v794
      %1043 = vmatpush1.bf16.msra.mxu0 %v793
      %1044 = vmatprep.subr.bf16.mxu0 %v796
      %1045 = vmatpush1.bf16.msra.mxu0 %v795
      %1046 = vmatprep.subr.bf16.mxu0 %v798
      %1047 = vmatpush1.bf16.msra.mxu0 %v797
      %1048 = vmatprep.subr.bf16.mxu0 %v800
      %1049 = vmatpush1.bf16.msra.mxu0 %v799
      %1050 = vmatprep.subr.bf16.mxu0 %v802
      %1051 = vmatpush1.bf16.msra.mxu0 %v801
      %1052 = vmatprep.subr.bf16.mxu0 %v804
      %1053 = vmatpush1.bf16.msra.mxu0 %v803
      %1054 = vmatprep.subr.bf16.mxu0 %v806
      %1055 = vmatpush1.bf16.msra.mxu0 %v805
      %1056 = vmatprep.subr.bf16.mxu0 %v808
      %1057 = vmatpush1.bf16.msra.mxu0 %v807
      %1058 = vmatprep.subr.bf16.mxu0 %v810
      %1059 = vmatpush1.bf16.msra.mxu0 %v809
      %1060 = vmatprep.subr.bf16.mxu0 %v812
      %1061 = vmatpush1.bf16.msra.mxu0 %v811
      %1062 = vmatprep.subr.bf16.mxu0 %v814
      %1063 = vmatpush1.bf16.msra.mxu0 %v813
      %1064 = vmatprep.subr.bf16.mxu0 %v816
      %1065 = vmatpush1.bf16.msra.mxu0 %v815
      %1066 = vmatprep.mubr.bf16.mxu0 %v400
      %1067 = vmatmul.mubr.bf16.gmra.mrb[0].mxu0 %v399
      %v1068 = vpop.f32.mrb[0].mxu0
      %v1069 = vadd.f32 %v1016, %v1068
      %v1070 = vpop.f32.mrb[0].mxu0
      %v1071 = vadd.f32 %v1018, %v1070
      %v1072 = vpop.f32.mrb[0].mxu0
      %v1073 = vadd.f32 %v1020, %v1072
      %v1074 = vpop.f32.mrb[0].mxu0
      %v1075 = vadd.f32 %v1022, %v1074
      %1076 = vmatprep.mubr.bf16.mxu0 %v407
      %1077 = vmatmul.mubr.bf16.gmra.mrb[0].mxu0 %v406
      %v1078 = vpop.f32.mrb[0].mxu0
      %v1079 = vadd.f32 %v1026, %v1078
      %v1080 = vpop.f32.mrb[0].mxu0
      %v1081 = vadd.f32 %v1028, %v1080
      %v1082 = vpop.f32.mrb[0].mxu0
      %v1083 = vadd.f32 %v1030, %v1082
      %v1084 = vpop.f32.mrb[0].mxu0
      %v1085 = vadd.f32 %v1032, %v1084
      %1086 = vdwg.mxu0
      %1087 = vmatprep.subr.bf16.mxu0 %v818
      %1088 = vmatpush1.bf16.msra.mxu0 %v817
      %1089 = vmatprep.subr.bf16.mxu0 %v820
      %1090 = vmatpush1.bf16.msra.mxu0 %v819
      %1091 = vmatprep.subr.bf16.mxu0 0
      %1092 = vmatpush1.bf16.msra.mxu0 0
      %1093 = vmatprep.subr.bf16.mxu0 0
      %1094 = vmatpush1.bf16.msra.mxu0 0
      %1095 = vmatprep.subr.bf16.mxu0 0
      %1096 = vmatpush1.bf16.msra.mxu0 0
      %1097 = vmatprep.subr.bf16.mxu0 0
      %1098 = vmatpush1.bf16.msra.mxu0 0
      %1099 = vmatprep.subr.bf16.mxu0 0
      %1100 = vmatpush1.bf16.msra.mxu0 0
      %1101 = vmatprep.subr.bf16.mxu0 0
      %1102 = vmatpush1.bf16.msra.mxu0 0
      %1103 = vmatprep.subr.bf16.mxu0 0
      %1104 = vmatpush1.bf16.msra.mxu0 0
      %1105 = vmatprep.subr.bf16.mxu0 0
      %1106 = vmatpush1.bf16.msra.mxu0 0
      %1107 = vmatprep.subr.bf16.mxu0 0
      %1108 = vmatpush1.bf16.msra.mxu0 0
      %1109 = vmatprep.subr.bf16.mxu0 0
      %1110 = vmatpush1.bf16.msra.mxu0 0
      %1111 = vmatprep.subr.bf16.mxu0 0
      %1112 = vmatpush1.bf16.msra.mxu0 0
      %1113 = vmatprep.subr.bf16.mxu0 0
      %1114 = vmatpush1.bf16.msra.mxu0 0
      %1115 = vmatprep.subr.bf16.mxu0 0
      %1116 = vmatpush1.bf16.msra.mxu0 0
      %1117 = vmatprep.subr.bf16.mxu0 0
      %1118 = vmatpush1.bf16.msra.mxu0 0
      %1119 = vmatprep.mubr.bf16.mxu0 0
      %1120 = vmatmul.mubr.bf16.gmra.mrb[0].mxu0 %v923
      %v1121 = vpop.f32.mrb[0].mxu0
      %v1122 = vadd.f32 %v1069, %v1121
      %v1123 = vpop.f32.mrb[0].mxu0
      %v1124 = vadd.f32 %v1071, %v1123
      %v1125 = vpop.f32.mrb[0].mxu0
      %v1126 = vadd.f32 %v1073, %v1125
      %v1127 = vpop.f32.mrb[0].mxu0
      %v1128 = vadd.f32 %v1075, %v1127
      %1129 = vmatprep.mubr.bf16.mxu0 0
      %1130 = vmatmul.mubr.bf16.gmra.mrb[0].mxu0 %v926
      %v1131 = vpop.f32.mrb[0].mxu0
      %v1132 = vadd.f32 %v1079, %v1131
      %v1133 = vpop.f32.mrb[0].mxu0
      %v1134 = vadd.f32 %v1081, %v1133
      %v1135 = vpop.f32.mrb[0].mxu0
      %v1136 = vadd.f32 %v1083, %v1135
      %v1137 = vpop.f32.mrb[0].mxu0
      %v1138 = vadd.f32 %v1085, %v1137
      %1139 = vdwg.mxu0
      %v1140 = vmax.f32 %v1122, 0.0
      %v1141 = vmax.f32 %v1124, 0.0
      %v1142 = vmax.f32 %v1126, 0.0
      %v1143 = vmax.f32 %v1128, 0.0
      %v1144 = vmax.f32 %v1132, 0.0
      %v1145 = vmax.f32 %v1134, 0.0
      %v1146 = vmax.f32 %v1136, 0.0
      %v1147 = vmax.f32 %v1138, 0.0
      %v1148 = vpack.c.bf16 %v1142, %v1140
      %v1149 = vpack.c.bf16 %v1143, %v1141
      %v1150 = vpack.c.bf16 %v1146, %v1144
      %v1151 = vpack.c.bf16 %v1147, %v1145
      %v1156 = vunpack.c.l.b16 %v1148
      %v1157 = vunpack.c.l.b16 %v1149
      %v1158 = vunpack.c.h.b16 %v1148
      %v1159 = vunpack.c.h.b16 %v1149
      %v1160 = vunpack.c.l.b16 %v1150
      %v1161 = vunpack.c.l.b16 %v1151
      %v1162 = vunpack.c.h.b16 %v1150
      %v1163 = vunpack.c.h.b16 %v1151
      %v1164 = vpack.c.b16 %v1157, %v1156
      %v1165 = vpack.c.b16 %v1159, %v1158
      %v1166 = vpack.c.b16 %v1161, %v1160
      %v1167 = vpack.c.b16 %v1163, %v1162
      %1172 = vst [vmem:[%s208] sm:$0xff] %v1164
      %1173 = vst [vmem:[%s208 + $0x8] sm:$0xff] %v1165
      %1174 = vst [vmem:[%s208 + $0x10] sm:$0xff] %v1166
      %1175 = vst [vmem:[%s208 + $0x18] sm:$0xff] %v1167
      %s1176 = smul.u32 2, %s19
      %p1177 = scmp.lt.s32.totalorder %s18, 1
      %s1178 = scalar_select %p1177, %s18, 1
      %p1179 = scmp.lt.s32.totalorder %s1176, 1
      %s1180 = scalar_select %p1179, %s1176, 1
      %s1181 = smul.addr %s1178, 8
      %s1182 = sadd.s32 %s1180, %s1181
      %s1183 = smul.addr %s1182, 4
      %s1184 = scalar_lea.vmem %s3, %s1183
      // Predicated region
      $region33: #{_lambda_.7} parent=31 // pred_check
        %p1185 = pneg %p116
      $region34: #{_lambda_.7} parent=31 // pred_check_branch
        %1187 = sbr.rel (%p1185) target = $region36
      $region35: #{_lambda_.7} parent=31 // pred_region
        %s1188 = smul.u32 2, %s19
      $region36: #{_lambda_.7} parent=31 // pred_fallthru
        _
    $region32: #{_lambda_.7} parent=5 // pred_fallthru
      _
    %p1189 = scmp.le.s32.totalorder 2, %s9
    // Predicated region
    $region37: #{_lambda_.7} parent=5 // pred_check
      %p1190 = pneg %p1189
    $region38: #{_lambda_.7} parent=5 // pred_check_branch
      %1192 = sbr.rel (%p1190) target = $region40
    $region39: #{_lambda_.7} parent=5 // pred_region
      %s1193 = ssub.s32 %s9, 2
      // Predicated region
      $region41: #{_lambda_.7} parent=39 // pred_check
        %p1194 = pneg %p122
      $region42: #{_lambda_.7} parent=39 // pred_check_branch
        %1196 = sbr.rel (%p1194) target = $region44
      $region43: #{_lambda_.7} parent=39 // pred_region
        %s1197 = smul.u32 2, %s21
        %p1198 = scmp.lt.s32.totalorder %s20, 1
        %s1199 = scalar_select %p1198, %s20, 1
        %p1200 = scmp.lt.s32.totalorder %s1197, 1
        %s1201 = scalar_select %p1200, %s1197, 1
        %s1202 = smul.addr %s1199, 8
        %s1203 = sadd.s32 %s1201, %s1202
        %s1204 = smul.addr %s1203, 4
        %s1205 = scalar_lea.vmem %s3, %s1204
      $region44: #{_lambda_.7} parent=39 // pred_fallthru
        _
    $region40: #{_lambda_.7} parent=5 // pred_fallthru
      _
  $region6: #{_lambda_.7} parent=0 // loop_footer
    %s13 = sadd.s32 1, %s9
  $region7: #{_lambda_.7} parent=0 // loop_footer_branch
    %8 = sbr.rel target = $region3
  $region8: #{_lambda_.7} parent=0 // loop_exit
    _

// kernel: _lambda_.8
$region0: #{_lambda_.8}
  #allocation0 [shape = 'u32[]', space=smem, size = 0x4, offset = 0x4, fixed_abs, tag = 'smem constant byte address 0x4 - core index']
  #allocation1 [shape = 'u32[144,128]{1,0:T(1,128)}', space=vmem, size = 0x12000, scoped, tag = 'internal scratch']
  %s0 = inlined_call_operand.vmem [shape: bf16[2,512,128], index: 0, kind: input, shape index: {}]
  %s1 = inlined_call_operand.vmem [shape: bf16[32,512], index: 1, kind: input, shape index: {}]
  %s2 = inlined_call_operand.vmem [shape: f32[32,1], index: 2, kind: input, shape index: {}]
  %s3 = inlined_call_operand.vmem [shape: bf16[2,32,128], index: 3, kind: output, shape index: {}]
  %s4 = sld [smem:[#allocation0]]
  $region45: #{_lambda_.8} parent=0
    _
  %s6 = ssub.s32 1, %s4
  %s7 = scalar_select 0, %s6, %s4
  loop: start=0, step=1, limit=4
  $region2: #{_lambda_.8} parent=0 // loop_pre_header
    _
  $region3: #{_lambda_.8} parent=0 // loop_header
    %s9 = sphi 0, %s13
    %p10 = scmp.ge.s32.totalorder %s9, 4
    %s16 = sphi 0, %s28
    %s17 = sphi 0, %s24
    %s18 = sphi 0, %s16
    %s19 = sphi 0, %s17
    %s20 = sphi 0, %s18
    %s21 = sphi 0, %s19
    %s33 = sphi 0, %s35
    %s36 = sphi 0, %s33
    %s37 = sphi 0, %s36
    %s53 = sphi 0, %s37
    %s57 = sphi 0, %s57
    %s59 = sphi 0, %s57
    %s60 = sphi 0, %s59
    %s74 = sphi 0, %s60
    %s78 = sphi 0, %s78
    %s80 = sphi 0, %s78
    %s81 = sphi 0, %s80
    %s95 = sphi 0, %s81
    %s103 = sphi 0, %s105
    %s106 = sphi 0, %s103
    %s107 = sphi 0, %s106
    %s123 = sphi 0, %s107
  $region4: #{_lambda_.8} parent=0 // loop_header_branch
    %12 = sbr.rel (%p10) target = $region8
  $region5: #{_lambda_.8} parent=0 // loop_body
    %s14 = ssub.s32 %s9, 1
    %s15 = ssub.s32 %s9, 2
    %s22 = sadd.s32 1, %s17
    %p23 = scmp.ge.s32.totalorder %s22, 1
    %s24 = scalar_select %p23, 0, %s22
    %s25 = sadd.s32 1, %s16
    %s26 = scalar_select %p23, %s25, %s16
    %p27 = scmp.ge.s32.totalorder %s26, 2
    %s28 = scalar_select %p27, 0, %s26
    %s29 = ssub.s32 %s16, %s28
    %s30 = ssub.s32 %s17, %s24
    %s31 = sor.u32 %s29, %s30
    %p32 = scmp.eq.s32.totalorder %s31, 0
    %s34 = sadd.s32 %s33, 1
    %s35 = scalar_select %p32, %s33, %s34
    %p38 = pneg %p32
    %p39 = scmp.eq.s32.totalorder %s9, 1
    %p40 = por %p38, %p39
    %p41 = scmp.ne.s32.totalorder %s33, %s36
    %p42 = scmp.eq.s32.totalorder %s9, 0
    %p43 = por %p41, %p42
    %p44 = scmp.ne.s32.totalorder %s33, %s36
    %p45 = scmp.eq.s32.totalorder %s14, 1
    %p46 = por %p44, %p45
    %p47 = scmp.ne.s32.totalorder %s36, %s37
    %p48 = scmp.eq.s32.totalorder %s14, 0
    %p49 = por %p47, %p48
    %p50 = scmp.ne.s32.totalorder %s36, %s37
    %p51 = scmp.eq.s32.totalorder %s15, 1
    %p52 = por %p50, %p51
    %p54 = scmp.ne.s32.totalorder %s37, %s53
    %p55 = scmp.eq.s32.totalorder %s15, 0
    %p56 = por %p54, %p55
    %s58 = sadd.s32 %s57, 1
    %p61 = scmp.eq.s32.totalorder %s9, 1
    %p62 = scmp.ne.s32.totalorder %s57, %s59
    %p63 = scmp.eq.s32.totalorder %s9, 0
    %p64 = por %p62, %p63
    %p65 = scmp.ne.s32.totalorder %s57, %s59
    %p66 = scmp.eq.s32.totalorder %s14, 1
    %p67 = por %p65, %p66
    %p68 = scmp.ne.s32.totalorder %s59, %s60
    %p69 = scmp.eq.s32.totalorder %s14, 0
    %p70 = por %p68, %p69
    %p71 = scmp.ne.s32.totalorder %s59, %s60
    %p72 = scmp.eq.s32.totalorder %s15, 1
    %p73 = por %p71, %p72
    %p75 = scmp.ne.s32.totalorder %s60, %s74
    %p76 = scmp.eq.s32.totalorder %s15, 0
    %p77 = por %p75, %p76
    %s79 = sadd.s32 %s78, 1
    %p82 = scmp.eq.s32.totalorder %s9, 1
    %p83 = scmp.ne.s32.totalorder %s78, %s80
    %p84 = scmp.eq.s32.totalorder %s9, 0
    %p85 = por %p83, %p84
    %p86 = scmp.ne.s32.totalorder %s78, %s80
    %p87 = scmp.eq.s32.totalorder %s14, 1
    %p88 = por %p86, %p87
    %p89 = scmp.ne.s32.totalorder %s80, %s81
    %p90 = scmp.eq.s32.totalorder %s14, 0
    %p91 = por %p89, %p90
    %p92 = scmp.ne.s32.totalorder %s80, %s81
    %p93 = scmp.eq.s32.totalorder %s15, 1
    %p94 = por %p92, %p93
    %p96 = scmp.ne.s32.totalorder %s81, %s95
    %p97 = scmp.eq.s32.totalorder %s15, 0
    %p98 = por %p96, %p97
    %s99 = ssub.s32 %s16, %s28
    %s100 = ssub.s32 %s17, %s24
    %s101 = sor.u32 %s99, %s100
    %p102 = scmp.eq.s32.totalorder %s101, 0
    %s104 = sadd.s32 %s103, 1
    %s105 = scalar_select %p102, %s103, %s104
    %p108 = pneg %p102
    %p109 = scmp.eq.s32.totalorder %s9, 1
    %p110 = por %p108, %p109
    %p111 = scmp.ne.s32.totalorder %s103, %s106
    %p112 = scmp.eq.s32.totalorder %s9, 0
    %p113 = por %p111, %p112
    %p114 = scmp.ne.s32.totalorder %s103, %s106
    %p115 = scmp.eq.s32.totalorder %s14, 1
    %p116 = por %p114, %p115
    %p117 = scmp.ne.s32.totalorder %s106, %s107
    %p118 = scmp.eq.s32.totalorder %s14, 0
    %p119 = por %p117, %p118
    %p120 = scmp.ne.s32.totalorder %s106, %s107
    %p121 = scmp.eq.s32.totalorder %s15, 1
    %p122 = por %p120, %p121
    %p124 = scmp.ne.s32.totalorder %s107, %s123
    %p125 = scmp.eq.s32.totalorder %s15, 0
    %p126 = por %p124, %p125
    %p127 = scmp.le.s32.totalorder 1, %s9
    %p128 = scmp.lt.s32.totalorder %s9, 3
    %p129 = pnand %p127, %p128
    %p130 = pneg %p129
    // Predicated region
    $region9: #{_lambda_.8} parent=5 // pred_check
      _
    $region10: #{_lambda_.8} parent=5 // pred_check_branch
      %132 = sbr.rel (%p129) target = $region12
    $region11: #{_lambda_.8} parent=5 // pred_region
      %s133 = ssub.s32 %s9, 1
      // Predicated region
      $region13: #{_lambda_.8} parent=11 // pred_check
        %p134 = pneg %p70
      $region14: #{_lambda_.8} parent=11 // pred_check_branch
        %136 = sbr.rel (%p134) target = $region16
      $region15: #{_lambda_.8} parent=11 // pred_region
        _
      $region16: #{_lambda_.8} parent=11 // pred_fallthru
        _
      // Predicated region
      $region17: #{_lambda_.8} parent=11 // pred_check
        %p137 = pneg %p91
      $region18: #{_lambda_.8} parent=11 // pred_check_branch
        %139 = sbr.rel (%p137) target = $region20
      $region19: #{_lambda_.8} parent=11 // pred_region
        _
      $region20: #{_lambda_.8} parent=11 // pred_fallthru
        _
    $region12: #{_lambda_.8} parent=5 // pred_fallthru
      _
    %p140 = scmp.lt.s32.totalorder %s9, 2
    // Predicated region
    $region21: #{_lambda_.8} parent=5 // pred_check
      %p141 = pneg %p140
    $region22: #{_lambda_.8} parent=5 // pred_check_branch
      %143 = sbr.rel (%p141) target = $region24
    $region23: #{_lambda_.8} parent=5 // pred_region
      // Predicated region
      $region25: #{_lambda_.8} parent=23 // pred_check
        %p144 = pneg %p43
      $region26: #{_lambda_.8} parent=23 // pred_check_branch
        %146 = sbr.rel (%p144) target = $region28
      $region27: #{_lambda_.8} parent=23 // pred_region
        %p147 = scmp.lt.s32.totalorder %s16, 1
        %s148 = scalar_select %p147, %s16, 1
        %p149 = scmp.lt.s32.totalorder %s17, 0
        %s150 = scalar_select %p149, %s17, 0
        %s151 = smul.addr %s148, 64
        %s152 = sadd.s32 %s150, %s151
        %s153 = smul.addr %s152, 4
        %s154 = scalar_lea.vmem %s0, %s153
      $region28: #{_lambda_.8} parent=23 // pred_fallthru
        _
    $region24: #{_lambda_.8} parent=5 // pred_fallthru
      _
    %p155 = scmp.le.s32.totalorder 1, %s9
    %p156 = scmp.lt.s32.totalorder %s9, 3
    %p157 = pnand %p155, %p156
    %p158 = pneg %p157
    // Predicated region
    $region29: #{_lambda_.8} parent=5 // pred_check
      _
    $region30: #{_lambda_.8} parent=5 // pred_check_branch
      %160 = sbr.rel (%p157) target = $region32
    $region31: #{_lambda_.8} parent=5 // pred_region
      %s161 = ssub.s32 %s9, 1
      %p162 = scmp.lt.s32.totalorder %s18, 1
      %s163 = scalar_select %p162, %s18, 1
      %p164 = scmp.lt.s32.totalorder %s19, 0
      %s165 = scalar_select %p164, %s19, 0
      %s166 = smul.addr %s163, 64
      %s167 = sadd.s32 %s165, %s166
      %s168 = smul.addr %s167, 4
      %s169 = scalar_lea.vmem %s0, %s168
      %p170 = pneg %p49
      %p171 = pneg %p46
      %p172 = pneg %p70
      %p173 = pneg %p67
      %p174 = pneg %p91
      %p175 = pneg %p88
      %p176 = pneg %p119
      %p177 = pneg %p116
      %p178 = scmp.lt.s32.totalorder %s18, 1
      %s179 = scalar_select %p178, %s18, 1
      %p180 = scmp.lt.s32.totalorder %s19, 0
      %s181 = scalar_select %p180, %s19, 0
      %s182 = smul.addr %s179, 4
      %s183 = sadd.s32 %s181, %s182
      %s184 = smul.addr %s183, 4
      %s185 = scalar_lea.vmem %s3, %s184
      %p186 = scmp.lt.s32.totalorder %s18, 1
      %s187 = scalar_select %p186, %s18, 1
      %p188 = scmp.lt.s32.totalorder %s19, 0
      %s189 = scalar_select %p188, %s19, 0
      %s190 = smul.addr %s187, 64
      %s191 = sadd.s32 %s189, %s190
      %s192 = smul.addr %s191, 4
      %s193 = scalar_lea.vmem %s0, %s192
      %p194 = scmp.lt.s32.totalorder %s18, 1
      %s195 = scalar_select %p194, %s18, 1
      %p196 = scmp.lt.s32.totalorder %s19, 0
      %s197 = scalar_select %p196, %s19, 0
      %s198 = smul.addr %s195, 4
      %s199 = sadd.s32 %s197, %s198
      %s200 = smul.addr %s199, 4
      %s201 = scalar_lea.vmem %s3, %s200
      %v203 = vld [vmem:[%s1] sm:$0xff]
      %v204 = vld [vmem:[%s1 + $0x8] sm:$0xff]
      %v205 = vld [vmem:[%s1 + $0x10] sm:$0xff]
      %v206 = vld [vmem:[%s1 + $0x18] sm:$0xff]
      %v207 = vld [vmem:[%s1 + $0x20] sm:$0xff]
      %v208 = vld [vmem:[%s1 + $0x28] sm:$0xff]
      %v209 = vld [vmem:[%s1 + $0x30] sm:$0xff]
      %v210 = vld [vmem:[%s1 + $0x38] sm:$0xff]
      %v211 = vld [vmem:[%s193] sm:$0xf]
      %v212 = vld [vmem:[%s193 + $0x4] sm:$0xf]
      %v213 = vld [vmem:[%s193 + $0x8] sm:$0xf]
      %v214 = vld [vmem:[%s193 + $0xc] sm:$0xf]
      %v215 = vld [vmem:[%s193 + $0x10] sm:$0xf]
      %v216 = vld [vmem:[%s193 + $0x14] sm:$0xf]
      %v217 = vld [vmem:[%s193 + $0x18] sm:$0xf]
      %v218 = vld [vmem:[%s193 + $0x1c] sm:$0xf]
      %v219 = vld [vmem:[%s193 + $0x20] sm:$0xf]
      %v220 = vld [vmem:[%s193 + $0x24] sm:$0xf]
      %v221 = vld [vmem:[%s193 + $0x28] sm:$0xf]
      %v222 = vld [vmem:[%s193 + $0x2c] sm:$0xf]
      %v223 = vld [vmem:[%s193 + $0x30] sm:$0xf]
      %v224 = vld [vmem:[%s193 + $0x34] sm:$0xf]
      %v225 = vld [vmem:[%s193 + $0x38] sm:$0xf]
      %v226 = vld [vmem:[%s193 + $0x3c] sm:$0xf]
      %v227 = vld [vmem:[%s193 + $0x40] sm:$0xf]
      %v228 = vld [vmem:[%s193 + $0x44] sm:$0xf]
      %v229 = vld [vmem:[%s193 + $0x48] sm:$0xf]
      %v230 = vld [vmem:[%s193 + $0x4c] sm:$0xf]
      %v231 = vld [vmem:[%s193 + $0x50] sm:$0xf]
      %v232 = vld [vmem:[%s193 + $0x54] sm:$0xf]
      %v233 = vld [vmem:[%s193 + $0x58] sm:$0xf]
      %v234 = vld [vmem:[%s193 + $0x5c] sm:$0xf]
      %v235 = vld [vmem:[%s193 + $0x60] sm:$0xf]
      %v236 = vld [vmem:[%s193 + $0x64] sm:$0xf]
      %v237 = vld [vmem:[%s193 + $0x68] sm:$0xf]
      %v238 = vld [vmem:[%s193 + $0x6c] sm:$0xf]
      %v239 = vld [vmem:[%s193 + $0x70] sm:$0xf]
      %v240 = vld [vmem:[%s193 + $0x74] sm:$0xf]
      %v241 = vld [vmem:[%s193 + $0x78] sm:$0xf]
      %v242 = vld [vmem:[%s193 + $0x7c] sm:$0xf]
      %v243 = vld [vmem:[%s193 + $0x80] sm:$0xf]
      %v244 = vld [vmem:[%s193 + $0x84] sm:$0xf]
      %v245 = vld [vmem:[%s193 + $0x88] sm:$0xf]
      %v246 = vld [vmem:[%s193 + $0x8c] sm:$0xf]
      %v247 = vld [vmem:[%s193 + $0x90] sm:$0xf]
      %v248 = vld [vmem:[%s193 + $0x94] sm:$0xf]
      %v249 = vld [vmem:[%s193 + $0x98] sm:$0xf]
      %v250 = vld [vmem:[%s193 + $0x9c] sm:$0xf]
      %v251 = vld [vmem:[%s193 + $0xa0] sm:$0xf]
      %v252 = vld [vmem:[%s193 + $0xa4] sm:$0xf]
      %v253 = vld [vmem:[%s193 + $0xa8] sm:$0xf]
      %v254 = vld [vmem:[%s193 + $0xac] sm:$0xf]
      %v255 = vld [vmem:[%s193 + $0xb0] sm:$0xf]
      %v256 = vld [vmem:[%s193 + $0xb4] sm:$0xf]
      %v257 = vld [vmem:[%s193 + $0xb8] sm:$0xf]
      %v258 = vld [vmem:[%s193 + $0xbc] sm:$0xf]
      %v259 = vld [vmem:[%s193 + $0xc0] sm:$0xf]
      %v260 = vld [vmem:[%s193 + $0xc4] sm:$0xf]
      %v261 = vld [vmem:[%s193 + $0xc8] sm:$0xf]
      %v262 = vld [vmem:[%s193 + $0xcc] sm:$0xf]
      %v263 = vld [vmem:[%s193 + $0xd0] sm:$0xf]
      %v264 = vld [vmem:[%s193 + $0xd4] sm:$0xf]
      %v265 = vld [vmem:[%s193 + $0xd8] sm:$0xf]
      %v266 = vld [vmem:[%s193 + $0xdc] sm:$0xf]
      %v267 = vld [vmem:[%s193 + $0xe0] sm:$0xf]
      %v268 = vld [vmem:[%s193 + $0xe4] sm:$0xf]
      %v269 = vld [vmem:[%s193 + $0xe8] sm:$0xf]
      %v270 = vld [vmem:[%s193 + $0xec] sm:$0xf]
      %v271 = vld [vmem:[%s193 + $0xf0] sm:$0xf]
      %v272 = vld [vmem:[%s193 + $0xf4] sm:$0xf]
      %v273 = vld [vmem:[%s193 + $0xf8] sm:$0xf]
      %v274 = vld [vmem:[%s193 + $0xfc] sm:$0xf]
      %v275 = vld [vmem:[%s2] sm:$0xff]
      %v276 = vld [vmem:[%s2 + $0x8] sm:$0xff]
      %v277 = vld [vmem:[%s2 + $0x10] sm:$0xff]
      %v278 = vld [vmem:[%s2 + $0x18] sm:$0xff]
      %280 = vset.pattern.permute.xlu0 0
      %281 = vperm.xlu0 %280, %v275
      %v282 = vpop.permute.xlu0 %281
      %285 = vset.pattern.permute.xlu0 0
      %286 = vperm.xlu0 %285, %v276
      %v287 = vpop.permute.xlu0 %286
      %290 = vset.pattern.permute.xlu0 0
      %291 = vperm.xlu0 %290, %v277
      %v292 = vpop.permute.xlu0 %291
      %295 = vset.pattern.permute.xlu0 0
      %296 = vperm.xlu0 %295, %v278
      %v297 = vpop.permute.xlu0 %296
      %v307 = vunpack.c.l.b16 %v203
      %v308 = vunpack.c.h.b16 %v203
      %v309 = vunpack.c.l.b16 %v204
      %v310 = vunpack.c.h.b16 %v204
      %v311 = vunpack.c.l.b16 %v205
      %v312 = vunpack.c.h.b16 %v205
      %v313 = vunpack.c.l.b16 %v206
      %v314 = vunpack.c.h.b16 %v206
      %v315 = vunpack.c.l.b16 %v207
      %v316 = vunpack.c.h.b16 %v207
      %v317 = vunpack.c.l.b16 %v208
      %v318 = vunpack.c.h.b16 %v208
      %v319 = vunpack.c.l.b16 %v209
      %v320 = vunpack.c.h.b16 %v209
      %v321 = vunpack.c.l.b16 %v210
      %v322 = vunpack.c.h.b16 %v210
      %v323 = vpack.c.b16 %v311, %v307
      %v324 = vpack.c.b16 %v312, %v308
      %v325 = vpack.c.b16 %v313, %v309
      %v326 = vpack.c.b16 %v314, %v310
      %v327 = vpack.c.b16 %v319, %v315
      %v328 = vpack.c.b16 %v320, %v316
      %v329 = vpack.c.b16 %v321, %v317
      %v330 = vpack.c.b16 %v322, %v318
      %v403 = vunpack.c.l.b16 %v211
      %v404 = vunpack.c.l.b16 %v212
      %v405 = vunpack.c.l.b16 %v213
      %v406 = vunpack.c.l.b16 %v214
      %v407 = vunpack.c.l.b16 %v215
      %v408 = vunpack.c.l.b16 %v216
      %v409 = vunpack.c.l.b16 %v217
      %v410 = vunpack.c.l.b16 %v218
      %v411 = vunpack.c.l.b16 %v219
      %v412 = vunpack.c.l.b16 %v220
      %v413 = vunpack.c.l.b16 %v221
      %v414 = vunpack.c.l.b16 %v222
      %v415 = vunpack.c.l.b16 %v223
      %v416 = vunpack.c.l.b16 %v224
      %v417 = vunpack.c.l.b16 %v225
      %v418 = vunpack.c.l.b16 %v226
      %v419 = vunpack.c.l.b16 %v227
      %v420 = vunpack.c.l.b16 %v228
      %v421 = vunpack.c.l.b16 %v229
      %v422 = vunpack.c.l.b16 %v230
      %v423 = vunpack.c.l.b16 %v231
      %v424 = vunpack.c.l.b16 %v232
      %v425 = vunpack.c.l.b16 %v233
      %v426 = vunpack.c.l.b16 %v234
      %v427 = vunpack.c.l.b16 %v235
      %v428 = vunpack.c.l.b16 %v236
      %v429 = vunpack.c.l.b16 %v237
      %v430 = vunpack.c.l.b16 %v238
      %v431 = vunpack.c.l.b16 %v239
      %v432 = vunpack.c.l.b16 %v240
      %v433 = vunpack.c.l.b16 %v241
      %v434 = vunpack.c.l.b16 %v242
      %v435 = vunpack.c.l.b16 %v243
      %v436 = vunpack.c.l.b16 %v244
      %v437 = vunpack.c.l.b16 %v245
      %v438 = vunpack.c.l.b16 %v246
      %v439 = vunpack.c.l.b16 %v247
      %v440 = vunpack.c.l.b16 %v248
      %v441 = vunpack.c.l.b16 %v249
      %v442 = vunpack.c.l.b16 %v250
      %v443 = vunpack.c.l.b16 %v251
      %v444 = vunpack.c.l.b16 %v252
      %v445 = vunpack.c.l.b16 %v253
      %v446 = vunpack.c.l.b16 %v254
      %v447 = vunpack.c.l.b16 %v255
      %v448 = vunpack.c.l.b16 %v256
      %v449 = vunpack.c.l.b16 %v257
      %v450 = vunpack.c.l.b16 %v258
      %v451 = vunpack.c.l.b16 %v259
      %v452 = vunpack.c.l.b16 %v260
      %v453 = vunpack.c.l.b16 %v261
      %v454 = vunpack.c.l.b16 %v262
      %v455 = vunpack.c.l.b16 %v263
      %v456 = vunpack.c.l.b16 %v264
      %v457 = vunpack.c.l.b16 %v265
      %v458 = vunpack.c.l.b16 %v266
      %v459 = vunpack.c.l.b16 %v267
      %v460 = vunpack.c.l.b16 %v268
      %v461 = vunpack.c.l.b16 %v269
      %v462 = vunpack.c.l.b16 %v270
      %v463 = vunpack.c.l.b16 %v271
      %v464 = vunpack.c.l.b16 %v272
      %v465 = vunpack.c.l.b16 %v273
      %v466 = vunpack.c.l.b16 %v274
      %v467 = vpack.c.b16 %v404, %v403
      %v468 = vpack.c.b16 %v406, %v405
      %v469 = vpack.c.b16 %v408, %v407
      %v470 = vpack.c.b16 %v410, %v409
      %v471 = vpack.c.b16 %v412, %v411
      %v472 = vpack.c.b16 %v414, %v413
      %v473 = vpack.c.b16 %v416, %v415
      %v474 = vpack.c.b16 %v418, %v417
      %v475 = vpack.c.b16 %v420, %v419
      %v476 = vpack.c.b16 %v422, %v421
      %v477 = vpack.c.b16 %v424, %v423
      %v478 = vpack.c.b16 %v426, %v425
      %v479 = vpack.c.b16 %v428, %v427
      %v480 = vpack.c.b16 %v430, %v429
      %v481 = vpack.c.b16 %v432, %v431
      %v482 = vpack.c.b16 %v434, %v433
      %v483 = vpack.c.b16 %v436, %v435
      %v484 = vpack.c.b16 %v438, %v437
      %v485 = vpack.c.b16 %v440, %v439
      %v486 = vpack.c.b16 %v442, %v441
      %v487 = vpack.c.b16 %v444, %v443
      %v488 = vpack.c.b16 %v446, %v445
      %v489 = vpack.c.b16 %v448, %v447
      %v490 = vpack.c.b16 %v450, %v449
      %v491 = vpack.c.b16 %v452, %v451
      %v492 = vpack.c.b16 %v454, %v453
      %v493 = vpack.c.b16 %v456, %v455
      %v494 = vpack.c.b16 %v458, %v457
      %v495 = vpack.c.b16 %v460, %v459
      %v496 = vpack.c.b16 %v462, %v461
      %v497 = vpack.c.b16 %v464, %v463
      %v498 = vpack.c.b16 %v466, %v465
      %531 = vmatprep.subr.bf16.mxu0 0
      %532 = vmatpush1.bf16.msra.mxu0 %v467
      %533 = vmatprep.subr.bf16.mxu0 0
      %534 = vmatpush1.bf16.msra.mxu0 %v468
      %535 = vmatprep.subr.bf16.mxu0 0
      %536 = vmatpush1.bf16.msra.mxu0 %v469
      %537 = vmatprep.subr.bf16.mxu0 0
      %538 = vmatpush1.bf16.msra.mxu0 %v470
      %539 = vmatprep.subr.bf16.mxu0 0
      %540 = vmatpush1.bf16.msra.mxu0 %v471
      %541 = vmatprep.subr.bf16.mxu0 0
      %542 = vmatpush1.bf16.msra.mxu0 %v472
      %543 = vmatprep.subr.bf16.mxu0 0
      %544 = vmatpush1.bf16.msra.mxu0 %v473
      %545 = vmatprep.subr.bf16.mxu0 0
      %546 = vmatpush1.bf16.msra.mxu0 %v474
      %547 = vmatprep.subr.bf16.mxu0 0
      %548 = vmatpush1.bf16.msra.mxu0 %v475
      %549 = vmatprep.subr.bf16.mxu0 0
      %550 = vmatpush1.bf16.msra.mxu0 %v476
      %551 = vmatprep.subr.bf16.mxu0 0
      %552 = vmatpush1.bf16.msra.mxu0 %v477
      %553 = vmatprep.subr.bf16.mxu0 0
      %554 = vmatpush1.bf16.msra.mxu0 %v478
      %555 = vmatprep.subr.bf16.mxu0 0
      %556 = vmatpush1.bf16.msra.mxu0 %v479
      %557 = vmatprep.subr.bf16.mxu0 0
      %558 = vmatpush1.bf16.msra.mxu0 %v480
      %559 = vmatprep.subr.bf16.mxu0 0
      %560 = vmatpush1.bf16.msra.mxu0 %v481
      %561 = vmatprep.subr.bf16.mxu0 0
      %562 = vmatpush1.bf16.msra.mxu0 %v482
      %563 = vmatprep.mubr.bf16.mxu0 %v324
      %564 = vmatmul.mubr.bf16.gmra.mrb[0].mxu0 %v323
      %v565 = vpop.f32.mrb[0].mxu0
      %v566 = vadd.f32 %v282, %v565
      %v567 = vpop.f32.mrb[0].mxu0
      %v568 = vpop.f32.mrb[0].mxu0
      %v569 = vadd.f32 %v287, %v568
      %v570 = vpop.f32.mrb[0].mxu0
      %571 = vmatprep.mubr.bf16.mxu0 %v328
      %572 = vmatmul.mubr.bf16.gmra.mrb[0].mxu0 %v327
      %v573 = vpop.f32.mrb[0].mxu0
      %v574 = vadd.f32 %v292, %v573
      %v575 = vpop.f32.mrb[0].mxu0
      %v576 = vpop.f32.mrb[0].mxu0
      %v577 = vadd.f32 %v297, %v576
      %v578 = vpop.f32.mrb[0].mxu0
      %579 = vdwg.mxu0
      %580 = vmatprep.subr.bf16.mxu0 0
      %581 = vmatpush1.bf16.msra.mxu0 %v483
      %582 = vmatprep.subr.bf16.mxu0 0
      %583 = vmatpush1.bf16.msra.mxu0 %v484
      %584 = vmatprep.subr.bf16.mxu0 0
      %585 = vmatpush1.bf16.msra.mxu0 %v485
      %586 = vmatprep.subr.bf16.mxu0 0
      %587 = vmatpush1.bf16.msra.mxu0 %v486
      %588 = vmatprep.subr.bf16.mxu0 0
      %589 = vmatpush1.bf16.msra.mxu0 %v487
      %590 = vmatprep.subr.bf16.mxu0 0
      %591 = vmatpush1.bf16.msra.mxu0 %v488
      %592 = vmatprep.subr.bf16.mxu0 0
      %593 = vmatpush1.bf16.msra.mxu0 %v489
      %594 = vmatprep.subr.bf16.mxu0 0
      %595 = vmatpush1.bf16.msra.mxu0 %v490
      %596 = vmatprep.subr.bf16.mxu0 0
      %597 = vmatpush1.bf16.msra.mxu0 %v491
      %598 = vmatprep.subr.bf16.mxu0 0
      %599 = vmatpush1.bf16.msra.mxu0 %v492
      %600 = vmatprep.subr.bf16.mxu0 0
      %601 = vmatpush1.bf16.msra.mxu0 %v493
      %602 = vmatprep.subr.bf16.mxu0 0
      %603 = vmatpush1.bf16.msra.mxu0 %v494
      %604 = vmatprep.subr.bf16.mxu0 0
      %605 = vmatpush1.bf16.msra.mxu0 %v495
      %606 = vmatprep.subr.bf16.mxu0 0
      %607 = vmatpush1.bf16.msra.mxu0 %v496
      %608 = vmatprep.subr.bf16.mxu0 0
      %609 = vmatpush1.bf16.msra.mxu0 %v497
      %610 = vmatprep.subr.bf16.mxu0 0
      %611 = vmatpush1.bf16.msra.mxu0 %v498
      %612 = vmatprep.mubr.bf16.mxu0 %v326
      %613 = vmatmul.mubr.bf16.gmra.mrb[0].mxu0 %v325
      %v614 = vpop.f32.mrb[0].mxu0
      %v615 = vadd.f32 %v566, %v614
      %v616 = vpop.f32.mrb[0].mxu0
      %v617 = vpop.f32.mrb[0].mxu0
      %v618 = vadd.f32 %v569, %v617
      %v619 = vpop.f32.mrb[0].mxu0
      %620 = vmatprep.mubr.bf16.mxu0 %v330
      %621 = vmatmul.mubr.bf16.gmra.mrb[0].mxu0 %v329
      %v622 = vpop.f32.mrb[0].mxu0
      %v623 = vadd.f32 %v574, %v622
      %v624 = vpop.f32.mrb[0].mxu0
      %v625 = vpop.f32.mrb[0].mxu0
      %v626 = vadd.f32 %v577, %v625
      %v627 = vpop.f32.mrb[0].mxu0
      %628 = vdwg.mxu0
      %v629 = vmax.f32 %v615, 0.0
      %v630 = vmax.f32 %v618, 0.0
      %v631 = vmax.f32 %v623, 0.0
      %v632 = vmax.f32 %v626, 0.0
      %v633 = vpack.c.bf16 %v630, %v629
      %v634 = vpack.c.bf16 %v632, %v631
      %v637 = vunpack.c.l.b16 %v633
      %v638 = vunpack.c.h.b16 %v633
      %v639 = vunpack.c.l.b16 %v634
      %v640 = vunpack.c.h.b16 %v634
      %v641 = vpack.c.b16 %v637, %v637
      %v642 = vpack.c.b16 %v638, %v638
      %v643 = vpack.c.b16 %v639, %v639
      %v644 = vpack.c.b16 %v640, %v640
      %649 = vst [vmem:[%s201] sm:$0xf] %v641
      %650 = vst [vmem:[%s201 + $0x4] sm:$0xf] %v642
      %651 = vst [vmem:[%s201 + $0x8] sm:$0xf] %v643
      %652 = vst [vmem:[%s201 + $0xc] sm:$0xf] %v644
      %p653 = scmp.lt.s32.totalorder %s18, 1
      %s654 = scalar_select %p653, %s18, 1
      %p655 = scmp.lt.s32.totalorder %s19, 0
      %s656 = scalar_select %p655, %s19, 0
      %s657 = smul.addr %s654, 4
      %s658 = sadd.s32 %s656, %s657
      %s659 = smul.addr %s658, 4
      %s660 = scalar_lea.vmem %s3, %s659
      // Predicated region
      $region33: #{_lambda_.8} parent=31 // pred_check
        %p661 = pneg %p116
      $region34: #{_lambda_.8} parent=31 // pred_check_branch
        %663 = sbr.rel (%p661) target = $region36
      $region35: #{_lambda_.8} parent=31 // pred_region
        _
      $region36: #{_lambda_.8} parent=31 // pred_fallthru
        _
    $region32: #{_lambda_.8} parent=5 // pred_fallthru
      _
    %p664 = scmp.le.s32.totalorder 2, %s9
    // Predicated region
    $region37: #{_lambda_.8} parent=5 // pred_check
      %p665 = pneg %p664
    $region38: #{_lambda_.8} parent=5 // pred_check_branch
      %667 = sbr.rel (%p665) target = $region40
    $region39: #{_lambda_.8} parent=5 // pred_region
      %s668 = ssub.s32 %s9, 2
      // Predicated region
      $region41: #{_lambda_.8} parent=39 // pred_check
        %p669 = pneg %p122
      $region42: #{_lambda_.8} parent=39 // pred_check_branch
        %671 = sbr.rel (%p669) target = $region44
      $region43: #{_lambda_.8} parent=39 // pred_region
        %p672 = scmp.lt.s32.totalorder %s20, 1
        %s673 = scalar_select %p672, %s20, 1
        %p674 = scmp.lt.s32.totalorder %s21, 0
        %s675 = scalar_select %p674, %s21, 0
        %s676 = smul.addr %s673, 4
        %s677 = sadd.s32 %s675, %s676
        %s678 = smul.addr %s677, 4
        %s679 = scalar_lea.vmem %s3, %s678
      $region44: #{_lambda_.8} parent=39 // pred_fallthru
        _
    $region40: #{_lambda_.8} parent=5 // pred_fallthru
      _
  $region6: #{_lambda_.8} parent=0 // loop_footer
    %s13 = sadd.s32 1, %s9
  $region7: #{_lambda_.8} parent=0 // loop_footer_branch
    %8 = sbr.rel target = $region3
  $region8: #{_lambda_.8} parent=0 // loop_exit
    _

// kernel: _lambda_.9
$region0: #{_lambda_.9}
  #allocation0 [shape = 'u32[]', space=smem, size = 0x4, offset = 0x4, fixed_abs, tag = 'smem constant byte address 0x4 - core index']
  #allocation1 [shape = 'u32[144,128]{1,0:T(1,128)}', space=vmem, size = 0x12000, scoped, tag = 'internal scratch']
  #allocation2 [shape = 'f32[8,512]{1,0:T(8,128)}', space=vmem, size = 0x4000, scoped, tag = 'scratch operand']
  %s0 = inlined_call_operand.vmem [shape: bf16[8,512], index: 0, kind: input, shape index: {}]
  %s1 = inlined_call_operand.vmem [shape: bf16[512,512], index: 1, kind: input, shape index: {}]
  %s2 = inlined_call_operand.vmem [shape: f32[1,512], index: 2, kind: input, shape index: {}]
  %s3 = inlined_call_operand.vmem [shape: f32[512,128], index: 3, kind: input, shape index: {}]
  %s4 = inlined_call_operand.vmem [shape: f32[1,128], index: 4, kind: input, shape index: {}]
  %s5 = inlined_call_operand.vmem [shape: f32[8,128], index: 5, kind: output, shape index: {}]
  %s6 = sld [smem:[#allocation0]]
  $region38: #{_lambda_.9} parent=0
    _
  %s8 = ssub.s32 1, %s6
  %s9 = scalar_select 0, %s8, %s6
  // Predicated region
  $region2: #{_lambda_.9} parent=0 // pred_check
    _
  $region3: #{_lambda_.9} parent=0 // pred_check_branch
    %11 = sbr.rel (0) target = $region5
  $region4: #{_lambda_.9} parent=0 // pred_region
    _
  $region5: #{_lambda_.9} parent=0 // pred_fallthru
    _
  // Predicated region
  $region6: #{_lambda_.9} parent=0 // pred_check
    _
  $region7: #{_lambda_.9} parent=0 // pred_check_branch
    %13 = sbr.rel (0) target = $region9
  $region8: #{_lambda_.9} parent=0 // pred_region
    _
  $region9: #{_lambda_.9} parent=0 // pred_fallthru
    _
  // Predicated region
  $region10: #{_lambda_.9} parent=0 // pred_check
    _
  $region11: #{_lambda_.9} parent=0 // pred_check_branch
    %15 = sbr.rel (0) target = $region13
  $region12: #{_lambda_.9} parent=0 // pred_region
    _
  $region13: #{_lambda_.9} parent=0 // pred_fallthru
    _
  // Predicated region
  $region14: #{_lambda_.9} parent=0 // pred_check
    _
  $region15: #{_lambda_.9} parent=0 // pred_check_branch
    %17 = sbr.rel (0) target = $region17
  $region16: #{_lambda_.9} parent=0 // pred_region
    _
  $region17: #{_lambda_.9} parent=0 // pred_fallthru
    _
  // Predicated region
  $region18: #{_lambda_.9} parent=0 // pred_check
    _
  $region19: #{_lambda_.9} parent=0 // pred_check_branch
    %19 = sbr.rel (0) target = $region21
  $region20: #{_lambda_.9} parent=0 // pred_region
    _
  $region21: #{_lambda_.9} parent=0 // pred_fallthru
    _
  %p20 = scmp.eq.s32.totalorder 0, 0
  // Predicated region
  $region22: #{_lambda_.9} parent=0 // pred_check
    %p21 = pneg %p20
  $region23: #{_lambda_.9} parent=0 // pred_check_branch
    %23 = sbr.rel (%p21) target = $region25
  $region24: #{_lambda_.9} parent=0 // pred_region
    %24 = vst [vmem:[#allocation2] sm:$0xff] 0.0
    %25 = vst [vmem:[#allocation2 + $0x8] sm:$0xff] 0.0
    %26 = vst [vmem:[#allocation2 + $0x10] sm:$0xff] 0.0
    %27 = vst [vmem:[#allocation2 + $0x18] sm:$0xff] 0.0
  $region25: #{_lambda_.9} parent=0 // pred_fallthru
    _
  %v28 = vld [vmem:[#allocation2] sm:$0xff]
  %v29 = vld [vmem:[#allocation2 + $0x8] sm:$0xff]
  %v30 = vld [vmem:[#allocation2 + $0x10] sm:$0xff]
  %v31 = vld [vmem:[#allocation2 + $0x18] sm:$0xff]
  %v32 = vld [vmem:[%s0] sm:$0xff]
  %v33 = vld [vmem:[%s0 + $0x8] sm:$0xff]
  %v34 = vld [vmem:[%s1] sm:$0xff]
  %v35 = vld [vmem:[%s1 + $0x8] sm:$0xff]
  %v36 = vld [vmem:[%s1 + $0x10] sm:$0xff]
  %v37 = vld [vmem:[%s1 + $0x18] sm:$0xff]
  %v38 = vld [vmem:[%s1 + $0x20] sm:$0xff]
  %v39 = vld [vmem:[%s1 + $0x28] sm:$0xff]
  %v40 = vld [vmem:[%s1 + $0x30] sm:$0xff]
  %v41 = vld [vmem:[%s1 + $0x38] sm:$0xff]
  %v42 = vld [vmem:[%s1 + $0x40] sm:$0xff]
  %v43 = vld [vmem:[%s1 + $0x48] sm:$0xff]
  %v44 = vld [vmem:[%s1 + $0x50] sm:$0xff]
  %v45 = vld [vmem:[%s1 + $0x58] sm:$0xff]
  %v46 = vld [vmem:[%s1 + $0x60] sm:$0xff]
  %v47 = vld [vmem:[%s1 + $0x68] sm:$0xff]
  %v48 = vld [vmem:[%s1 + $0x70] sm:$0xff]
  %v49 = vld [vmem:[%s1 + $0x78] sm:$0xff]
  %v50 = vld [vmem:[%s1 + $0x80] sm:$0xff]
  %v51 = vld [vmem:[%s1 + $0x88] sm:$0xff]
  %v52 = vld [vmem:[%s1 + $0x90] sm:$0xff]
  %v53 = vld [vmem:[%s1 + $0x98] sm:$0xff]
  %v54 = vld [vmem:[%s1 + $0xa0] sm:$0xff]
  %v55 = vld [vmem:[%s1 + $0xa8] sm:$0xff]
  %v56 = vld [vmem:[%s1 + $0xb0] sm:$0xff]
  %v57 = vld [vmem:[%s1 + $0xb8] sm:$0xff]
  %v58 = vld [vmem:[%s1 + $0xc0] sm:$0xff]
  %v59 = vld [vmem:[%s1 + $0xc8] sm:$0xff]
  %v60 = vld [vmem:[%s1 + $0xd0] sm:$0xff]
  %v61 = vld [vmem:[%s1 + $0xd8] sm:$0xff]
  %v62 = vld [vmem:[%s1 + $0xe0] sm:$0xff]
  %v63 = vld [vmem:[%s1 + $0xe8] sm:$0xff]
  %v64 = vld [vmem:[%s1 + $0xf0] sm:$0xff]
  %v65 = vld [vmem:[%s1 + $0xf8] sm:$0xff]
  %v66 = vld [vmem:[%s1 + $0x100] sm:$0xff]
  %v67 = vld [vmem:[%s1 + $0x108] sm:$0xff]
  %v68 = vld [vmem:[%s1 + $0x110] sm:$0xff]
  %v69 = vld [vmem:[%s1 + $0x118] sm:$0xff]
  %v70 = vld [vmem:[%s1 + $0x120] sm:$0xff]
  %v71 = vld [vmem:[%s1 + $0x128] sm:$0xff]
  %v72 = vld [vmem:[%s1 + $0x130] sm:$0xff]
  %v73 = vld [vmem:[%s1 + $0x138] sm:$0xff]
  %v74 = vld [vmem:[%s1 + $0x140] sm:$0xff]
  %v75 = vld [vmem:[%s1 + $0x148] sm:$0xff]
  %v76 = vld [vmem:[%s1 + $0x150] sm:$0xff]
  %v77 = vld [vmem:[%s1 + $0x158] sm:$0xff]
  %v78 = vld [vmem:[%s1 + $0x160] sm:$0xff]
  %v79 = vld [vmem:[%s1 + $0x168] sm:$0xff]
  %v80 = vld [vmem:[%s1 + $0x170] sm:$0xff]
  %v81 = vld [vmem:[%s1 + $0x178] sm:$0xff]
  %v82 = vld [vmem:[%s1 + $0x180] sm:$0xff]
  %v83 = vld [vmem:[%s1 + $0x188] sm:$0xff]
  %v84 = vld [vmem:[%s1 + $0x190] sm:$0xff]
  %v85 = vld [vmem:[%s1 + $0x198] sm:$0xff]
  %v86 = vld [vmem:[%s1 + $0x1a0] sm:$0xff]
  %v87 = vld [vmem:[%s1 + $0x1a8] sm:$0xff]
  %v88 = vld [vmem:[%s1 + $0x1b0] sm:$0xff]
  %v89 = vld [vmem:[%s1 + $0x1b8] sm:$0xff]
  %v90 = vld [vmem:[%s1 + $0x1c0] sm:$0xff]
  %v91 = vld [vmem:[%s1 + $0x1c8] sm:$0xff]
  %v92 = vld [vmem:[%s1 + $0x1d0] sm:$0xff]
  %v93 = vld [vmem:[%s1 + $0x1d8] sm:$0xff]
  %v94 = vld [vmem:[%s1 + $0x1e0] sm:$0xff]
  %v95 = vld [vmem:[%s1 + $0x1e8] sm:$0xff]
  %v96 = vld [vmem:[%s1 + $0x1f0] sm:$0xff]
  %v97 = vld [vmem:[%s1 + $0x1f8] sm:$0xff]
  %v98 = vld [vmem:[%s1 + $0x200] sm:$0xff]
  %v99 = vld [vmem:[%s1 + $0x208] sm:$0xff]
  %v100 = vld [vmem:[%s1 + $0x210] sm:$0xff]
  %v101 = vld [vmem:[%s1 + $0x218] sm:$0xff]
  %v102 = vld [vmem:[%s1 + $0x220] sm:$0xff]
  %v103 = vld [vmem:[%s1 + $0x228] sm:$0xff]
  %v104 = vld [vmem:[%s1 + $0x230] sm:$0xff]
  %v105 = vld [vmem:[%s1 + $0x238] sm:$0xff]
  %v106 = vld [vmem:[%s1 + $0x240] sm:$0xff]
  %v107 = vld [vmem:[%s1 + $0x248] sm:$0xff]
  %v108 = vld [vmem:[%s1 + $0x250] sm:$0xff]
  %v109 = vld [vmem:[%s1 + $0x258] sm:$0xff]
  %v110 = vld [vmem:[%s1 + $0x260] sm:$0xff]
  %v111 = vld [vmem:[%s1 + $0x268] sm:$0xff]
  %v112 = vld [vmem:[%s1 + $0x270] sm:$0xff]
  %v113 = vld [vmem:[%s1 + $0x278] sm:$0xff]
  %v114 = vld [vmem:[%s1 + $0x280] sm:$0xff]
  %v115 = vld [vmem:[%s1 + $0x288] sm:$0xff]
  %v116 = vld [vmem:[%s1 + $0x290] sm:$0xff]
  %v117 = vld [vmem:[%s1 + $0x298] sm:$0xff]
  %v118 = vld [vmem:[%s1 + $0x2a0] sm:$0xff]
  %v119 = vld [vmem:[%s1 + $0x2a8] sm:$0xff]
  %v120 = vld [vmem:[%s1 + $0x2b0] sm:$0xff]
  %v121 = vld [vmem:[%s1 + $0x2b8] sm:$0xff]
  %v122 = vld [vmem:[%s1 + $0x2c0] sm:$0xff]
  %v123 = vld [vmem:[%s1 + $0x2c8] sm:$0xff]
  %v124 = vld [vmem:[%s1 + $0x2d0] sm:$0xff]
  %v125 = vld [vmem:[%s1 + $0x2d8] sm:$0xff]
  %v126 = vld [vmem:[%s1 + $0x2e0] sm:$0xff]
  %v127 = vld [vmem:[%s1 + $0x2e8] sm:$0xff]
  %v128 = vld [vmem:[%s1 + $0x2f0] sm:$0xff]
  %v129 = vld [vmem:[%s1 + $0x2f8] sm:$0xff]
  %v130 = vld [vmem:[%s1 + $0x300] sm:$0xff]
  %v131 = vld [vmem:[%s1 + $0x308] sm:$0xff]
  %v132 = vld [vmem:[%s1 + $0x310] sm:$0xff]
  %v133 = vld [vmem:[%s1 + $0x318] sm:$0xff]
  %v134 = vld [vmem:[%s1 + $0x320] sm:$0xff]
  %v135 = vld [vmem:[%s1 + $0x328] sm:$0xff]
  %v136 = vld [vmem:[%s1 + $0x330] sm:$0xff]
  %v137 = vld [vmem:[%s1 + $0x338] sm:$0xff]
  %v138 = vld [vmem:[%s1 + $0x340] sm:$0xff]
  %v139 = vld [vmem:[%s1 + $0x348] sm:$0xff]
  %v140 = vld [vmem:[%s1 + $0x350] sm:$0xff]
  %v141 = vld [vmem:[%s1 + $0x358] sm:$0xff]
  %v142 = vld [vmem:[%s1 + $0x360] sm:$0xff]
  %v143 = vld [vmem:[%s1 + $0x368] sm:$0xff]
  %v144 = vld [vmem:[%s1 + $0x370] sm:$0xff]
  %v145 = vld [vmem:[%s1 + $0x378] sm:$0xff]
  %v146 = vld [vmem:[%s1 + $0x380] sm:$0xff]
  %v147 = vld [vmem:[%s1 + $0x388] sm:$0xff]
  %v148 = vld [vmem:[%s1 + $0x390] sm:$0xff]
  %v149 = vld [vmem:[%s1 + $0x398] sm:$0xff]
  %v150 = vld [vmem:[%s1 + $0x3a0] sm:$0xff]
  %v151 = vld [vmem:[%s1 + $0x3a8] sm:$0xff]
  %v152 = vld [vmem:[%s1 + $0x3b0] sm:$0xff]
  %v153 = vld [vmem:[%s1 + $0x3b8] sm:$0xff]
  %v154 = vld [vmem:[%s1 + $0x3c0] sm:$0xff]
  %v155 = vld [vmem:[%s1 + $0x3c8] sm:$0xff]
  %v156 = vld [vmem:[%s1 + $0x3d0] sm:$0xff]
  %v157 = vld [vmem:[%s1 + $0x3d8] sm:$0xff]
  %v158 = vld [vmem:[%s1 + $0x3e0] sm:$0xff]
  %v159 = vld [vmem:[%s1 + $0x3e8] sm:$0xff]
  %v160 = vld [vmem:[%s1 + $0x3f0] sm:$0xff]
  %v161 = vld [vmem:[%s1 + $0x3f8] sm:$0xff]
  %v164 = vunpack.c.l.b16 %v32
  %v165 = vunpack.c.h.b16 %v32
  %v166 = vunpack.c.l.b16 %v33
  %v167 = vunpack.c.h.b16 %v33
  %v168 = vpack.c.b16 %v164, %v164
  %v169 = vpack.c.b16 %v165, %v165
  %v170 = vpack.c.b16 %v166, %v166
  %v171 = vpack.c.b16 %v167, %v167
  %v304 = vunpack.c.l.b16 %v34
  %v305 = vunpack.c.h.b16 %v34
  %v306 = vunpack.c.l.b16 %v35
  %v307 = vunpack.c.h.b16 %v35
  %v308 = vunpack.c.l.b16 %v36
  %v309 = vunpack.c.h.b16 %v36
  %v310 = vunpack.c.l.b16 %v37
  %v311 = vunpack.c.h.b16 %v37
  %v312 = vunpack.c.l.b16 %v38
  %v313 = vunpack.c.h.b16 %v38
  %v314 = vunpack.c.l.b16 %v39
  %v315 = vunpack.c.h.b16 %v39
  %v316 = vunpack.c.l.b16 %v40
  %v317 = vunpack.c.h.b16 %v40
  %v318 = vunpack.c.l.b16 %v41
  %v319 = vunpack.c.h.b16 %v41
  %v320 = vunpack.c.l.b16 %v42
  %v321 = vunpack.c.h.b16 %v42
  %v322 = vunpack.c.l.b16 %v43
  %v323 = vunpack.c.h.b16 %v43
  %v324 = vunpack.c.l.b16 %v44
  %v325 = vunpack.c.h.b16 %v44
  %v326 = vunpack.c.l.b16 %v45
  %v327 = vunpack.c.h.b16 %v45
  %v328 = vunpack.c.l.b16 %v46
  %v329 = vunpack.c.h.b16 %v46
  %v330 = vunpack.c.l.b16 %v47
  %v331 = vunpack.c.h.b16 %v47
  %v332 = vunpack.c.l.b16 %v48
  %v333 = vunpack.c.h.b16 %v48
  %v334 = vunpack.c.l.b16 %v49
  %v335 = vunpack.c.h.b16 %v49
  %v336 = vunpack.c.l.b16 %v50
  %v337 = vunpack.c.h.b16 %v50
  %v338 = vunpack.c.l.b16 %v51
  %v339 = vunpack.c.h.b16 %v51
  %v340 = vunpack.c.l.b16 %v52
  %v341 = vunpack.c.h.b16 %v52
  %v342 = vunpack.c.l.b16 %v53
  %v343 = vunpack.c.h.b16 %v53
  %v344 = vunpack.c.l.b16 %v54
  %v345 = vunpack.c.h.b16 %v54
  %v346 = vunpack.c.l.b16 %v55
  %v347 = vunpack.c.h.b16 %v55
  %v348 = vunpack.c.l.b16 %v56
  %v349 = vunpack.c.h.b16 %v56
  %v350 = vunpack.c.l.b16 %v57
  %v351 = vunpack.c.h.b16 %v57
  %v352 = vunpack.c.l.b16 %v58
  %v353 = vunpack.c.h.b16 %v58
  %v354 = vunpack.c.l.b16 %v59
  %v355 = vunpack.c.h.b16 %v59
  %v356 = vunpack.c.l.b16 %v60
  %v357 = vunpack.c.h.b16 %v60
  %v358 = vunpack.c.l.b16 %v61
  %v359 = vunpack.c.h.b16 %v61
  %v360 = vunpack.c.l.b16 %v62
  %v361 = vunpack.c.h.b16 %v62
  %v362 = vunpack.c.l.b16 %v63
  %v363 = vunpack.c.h.b16 %v63
  %v364 = vunpack.c.l.b16 %v64
  %v365 = vunpack.c.h.b16 %v64
  %v366 = vunpack.c.l.b16 %v65
  %v367 = vunpack.c.h.b16 %v65
  %v368 = vunpack.c.l.b16 %v66
  %v369 = vunpack.c.h.b16 %v66
  %v370 = vunpack.c.l.b16 %v67
  %v371 = vunpack.c.h.b16 %v67
  %v372 = vunpack.c.l.b16 %v68
  %v373 = vunpack.c.h.b16 %v68
  %v374 = vunpack.c.l.b16 %v69
  %v375 = vunpack.c.h.b16 %v69
  %v376 = vunpack.c.l.b16 %v70
  %v377 = vunpack.c.h.b16 %v70
  %v378 = vunpack.c.l.b16 %v71
  %v379 = vunpack.c.h.b16 %v71
  %v380 = vunpack.c.l.b16 %v72
  %v381 = vunpack.c.h.b16 %v72
  %v382 = vunpack.c.l.b16 %v73
  %v383 = vunpack.c.h.b16 %v73
  %v384 = vunpack.c.l.b16 %v74
  %v385 = vunpack.c.h.b16 %v74
  %v386 = vunpack.c.l.b16 %v75
  %v387 = vunpack.c.h.b16 %v75
  %v388 = vunpack.c.l.b16 %v76
  %v389 = vunpack.c.h.b16 %v76
  %v390 = vunpack.c.l.b16 %v77
  %v391 = vunpack.c.h.b16 %v77
  %v392 = vunpack.c.l.b16 %v78
  %v393 = vunpack.c.h.b16 %v78
  %v394 = vunpack.c.l.b16 %v79
  %v395 = vunpack.c.h.b16 %v79
  %v396 = vunpack.c.l.b16 %v80
  %v397 = vunpack.c.h.b16 %v80
  %v398 = vunpack.c.l.b16 %v81
  %v399 = vunpack.c.h.b16 %v81
  %v400 = vunpack.c.l.b16 %v82
  %v401 = vunpack.c.h.b16 %v82
  %v402 = vunpack.c.l.b16 %v83
  %v403 = vunpack.c.h.b16 %v83
  %v404 = vunpack.c.l.b16 %v84
  %v405 = vunpack.c.h.b16 %v84
  %v406 = vunpack.c.l.b16 %v85
  %v407 = vunpack.c.h.b16 %v85
  %v408 = vunpack.c.l.b16 %v86
  %v409 = vunpack.c.h.b16 %v86
  %v410 = vunpack.c.l.b16 %v87
  %v411 = vunpack.c.h.b16 %v87
  %v412 = vunpack.c.l.b16 %v88
  %v413 = vunpack.c.h.b16 %v88
  %v414 = vunpack.c.l.b16 %v89
  %v415 = vunpack.c.h.b16 %v89
  %v416 = vunpack.c.l.b16 %v90
  %v417 = vunpack.c.h.b16 %v90
  %v418 = vunpack.c.l.b16 %v91
  %v419 = vunpack.c.h.b16 %v91
  %v420 = vunpack.c.l.b16 %v92
  %v421 = vunpack.c.h.b16 %v92
  %v422 = vunpack.c.l.b16 %v93
  %v423 = vunpack.c.h.b16 %v93
  %v424 = vunpack.c.l.b16 %v94
  %v425 = vunpack.c.h.b16 %v94
  %v426 = vunpack.c.l.b16 %v95
  %v427 = vunpack.c.h.b16 %v95
  %v428 = vunpack.c.l.b16 %v96
  %v429 = vunpack.c.h.b16 %v96
  %v430 = vunpack.c.l.b16 %v97
  %v431 = vunpack.c.h.b16 %v97
  %v432 = vunpack.c.l.b16 %v98
  %v433 = vunpack.c.h.b16 %v98
  %v434 = vunpack.c.l.b16 %v99
  %v435 = vunpack.c.h.b16 %v99
  %v436 = vunpack.c.l.b16 %v100
  %v437 = vunpack.c.h.b16 %v100
  %v438 = vunpack.c.l.b16 %v101
  %v439 = vunpack.c.h.b16 %v101
  %v440 = vunpack.c.l.b16 %v102
  %v441 = vunpack.c.h.b16 %v102
  %v442 = vunpack.c.l.b16 %v103
  %v443 = vunpack.c.h.b16 %v103
  %v444 = vunpack.c.l.b16 %v104
  %v445 = vunpack.c.h.b16 %v104
  %v446 = vunpack.c.l.b16 %v105
  %v447 = vunpack.c.h.b16 %v105
  %v448 = vunpack.c.l.b16 %v106
  %v449 = vunpack.c.h.b16 %v106
  %v450 = vunpack.c.l.b16 %v107
  %v451 = vunpack.c.h.b16 %v107
  %v452 = vunpack.c.l.b16 %v108
  %v453 = vunpack.c.h.b16 %v108
  %v454 = vunpack.c.l.b16 %v109
  %v455 = vunpack.c.h.b16 %v109
  %v456 = vunpack.c.l.b16 %v110
  %v457 = vunpack.c.h.b16 %v110
  %v458 = vunpack.c.l.b16 %v111
  %v459 = vunpack.c.h.b16 %v111
  %v460 = vunpack.c.l.b16 %v112
  %v461 = vunpack.c.h.b16 %v112
  %v462 = vunpack.c.l.b16 %v113
  %v463 = vunpack.c.h.b16 %v113
  %v464 = vunpack.c.l.b16 %v114
  %v465 = vunpack.c.h.b16 %v114
  %v466 = vunpack.c.l.b16 %v115
  %v467 = vunpack.c.h.b16 %v115
  %v468 = vunpack.c.l.b16 %v116
  %v469 = vunpack.c.h.b16 %v116
  %v470 = vunpack.c.l.b16 %v117
  %v471 = vunpack.c.h.b16 %v117
  %v472 = vunpack.c.l.b16 %v118
  %v473 = vunpack.c.h.b16 %v118
  %v474 = vunpack.c.l.b16 %v119
  %v475 = vunpack.c.h.b16 %v119
  %v476 = vunpack.c.l.b16 %v120
  %v477 = vunpack.c.h.b16 %v120
  %v478 = vunpack.c.l.b16 %v121
  %v479 = vunpack.c.h.b16 %v121
  %v480 = vunpack.c.l.b16 %v122
  %v481 = vunpack.c.h.b16 %v122
  %v482 = vunpack.c.l.b16 %v123
  %v483 = vunpack.c.h.b16 %v123
  %v484 = vunpack.c.l.b16 %v124
  %v485 = vunpack.c.h.b16 %v124
  %v486 = vunpack.c.l.b16 %v125
  %v487 = vunpack.c.h.b16 %v125
  %v488 = vunpack.c.l.b16 %v126
  %v489 = vunpack.c.h.b16 %v126
  %v490 = vunpack.c.l.b16 %v127
  %v491 = vunpack.c.h.b16 %v127
  %v492 = vunpack.c.l.b16 %v128
  %v493 = vunpack.c.h.b16 %v128
  %v494 = vunpack.c.l.b16 %v129
  %v495 = vunpack.c.h.b16 %v129
  %v496 = vunpack.c.l.b16 %v130
  %v497 = vunpack.c.h.b16 %v130
  %v498 = vunpack.c.l.b16 %v131
  %v499 = vunpack.c.h.b16 %v131
  %v500 = vunpack.c.l.b16 %v132
  %v501 = vunpack.c.h.b16 %v132
  %v502 = vunpack.c.l.b16 %v133
  %v503 = vunpack.c.h.b16 %v133
  %v504 = vunpack.c.l.b16 %v134
  %v505 = vunpack.c.h.b16 %v134
  %v506 = vunpack.c.l.b16 %v135
  %v507 = vunpack.c.h.b16 %v135
  %v508 = vunpack.c.l.b16 %v136
  %v509 = vunpack.c.h.b16 %v136
  %v510 = vunpack.c.l.b16 %v137
  %v511 = vunpack.c.h.b16 %v137
  %v512 = vunpack.c.l.b16 %v138
  %v513 = vunpack.c.h.b16 %v138
  %v514 = vunpack.c.l.b16 %v139
  %v515 = vunpack.c.h.b16 %v139
  %v516 = vunpack.c.l.b16 %v140
  %v517 = vunpack.c.h.b16 %v140
  %v518 = vunpack.c.l.b16 %v141
  %v519 = vunpack.c.h.b16 %v141
  %v520 = vunpack.c.l.b16 %v142
  %v521 = vunpack.c.h.b16 %v142
  %v522 = vunpack.c.l.b16 %v143
  %v523 = vunpack.c.h.b16 %v143
  %v524 = vunpack.c.l.b16 %v144
  %v525 = vunpack.c.h.b16 %v144
  %v526 = vunpack.c.l.b16 %v145
  %v527 = vunpack.c.h.b16 %v145
  %v528 = vunpack.c.l.b16 %v146
  %v529 = vunpack.c.h.b16 %v146
  %v530 = vunpack.c.l.b16 %v147
  %v531 = vunpack.c.h.b16 %v147
  %v532 = vunpack.c.l.b16 %v148
  %v533 = vunpack.c.h.b16 %v148
  %v534 = vunpack.c.l.b16 %v149
  %v535 = vunpack.c.h.b16 %v149
  %v536 = vunpack.c.l.b16 %v150
  %v537 = vunpack.c.h.b16 %v150
  %v538 = vunpack.c.l.b16 %v151
  %v539 = vunpack.c.h.b16 %v151
  %v540 = vunpack.c.l.b16 %v152
  %v541 = vunpack.c.h.b16 %v152
  %v542 = vunpack.c.l.b16 %v153
  %v543 = vunpack.c.h.b16 %v153
  %v544 = vunpack.c.l.b16 %v154
  %v545 = vunpack.c.h.b16 %v154
  %v546 = vunpack.c.l.b16 %v155
  %v547 = vunpack.c.h.b16 %v155
  %v548 = vunpack.c.l.b16 %v156
  %v549 = vunpack.c.h.b16 %v156
  %v550 = vunpack.c.l.b16 %v157
  %v551 = vunpack.c.h.b16 %v157
  %v552 = vunpack.c.l.b16 %v158
  %v553 = vunpack.c.h.b16 %v158
  %v554 = vunpack.c.l.b16 %v159
  %v555 = vunpack.c.h.b16 %v159
  %v556 = vunpack.c.l.b16 %v160
  %v557 = vunpack.c.h.b16 %v160
  %v558 = vunpack.c.l.b16 %v161
  %v559 = vunpack.c.h.b16 %v161
  %v560 = vpack.c.b16 %v308, %v304
  %v561 = vpack.c.b16 %v309, %v305
  %v562 = vpack.c.b16 %v310, %v306
  %v563 = vpack.c.b16 %v311, %v307
  %v564 = vpack.c.b16 %v316, %v312
  %v565 = vpack.c.b16 %v317, %v313
  %v566 = vpack.c.b16 %v318, %v314
  %v567 = vpack.c.b16 %v319, %v315
  %v568 = vpack.c.b16 %v324, %v320
  %v569 = vpack.c.b16 %v325, %v321
  %v570 = vpack.c.b16 %v326, %v322
  %v571 = vpack.c.b16 %v327, %v323
  %v572 = vpack.c.b16 %v332, %v328
  %v573 = vpack.c.b16 %v333, %v329
  %v574 = vpack.c.b16 %v334, %v330
  %v575 = vpack.c.b16 %v335, %v331
  %v576 = vpack.c.b16 %v340, %v336
  %v577 = vpack.c.b16 %v341, %v337
  %v578 = vpack.c.b16 %v342, %v338
  %v579 = vpack.c.b16 %v343, %v339
  %v580 = vpack.c.b16 %v348, %v344
  %v581 = vpack.c.b16 %v349, %v345
  %v582 = vpack.c.b16 %v350, %v346
  %v583 = vpack.c.b16 %v351, %v347
  %v584 = vpack.c.b16 %v356, %v352
  %v585 = vpack.c.b16 %v357, %v353
  %v586 = vpack.c.b16 %v358, %v354
  %v587 = vpack.c.b16 %v359, %v355
  %v588 = vpack.c.b16 %v364, %v360
  %v589 = vpack.c.b16 %v365, %v361
  %v590 = vpack.c.b16 %v366, %v362
  %v591 = vpack.c.b16 %v367, %v363
  %v592 = vpack.c.b16 %v372, %v368
  %v593 = vpack.c.b16 %v373, %v369
  %v594 = vpack.c.b16 %v374, %v370
  %v595 = vpack.c.b16 %v375, %v371
  %v596 = vpack.c.b16 %v380, %v376
  %v597 = vpack.c.b16 %v381, %v377
  %v598 = vpack.c.b16 %v382, %v378
  %v599 = vpack.c.b16 %v383, %v379
  %v600 = vpack.c.b16 %v388, %v384
  %v601 = vpack.c.b16 %v389, %v385
  %v602 = vpack.c.b16 %v390, %v386
  %v603 = vpack.c.b16 %v391, %v387
  %v604 = vpack.c.b16 %v396, %v392
  %v605 = vpack.c.b16 %v397, %v393
  %v606 = vpack.c.b16 %v398, %v394
  %v607 = vpack.c.b16 %v399, %v395
  %v608 = vpack.c.b16 %v404, %v400
  %v609 = vpack.c.b16 %v405, %v401
  %v610 = vpack.c.b16 %v406, %v402
  %v611 = vpack.c.b16 %v407, %v403
  %v612 = vpack.c.b16 %v412, %v408
  %v613 = vpack.c.b16 %v413, %v409
  %v614 = vpack.c.b16 %v414, %v410
  %v615 = vpack.c.b16 %v415, %v411
  %v616 = vpack.c.b16 %v420, %v416
  %v617 = vpack.c.b16 %v421, %v417
  %v618 = vpack.c.b16 %v422, %v418
  %v619 = vpack.c.b16 %v423, %v419
  %v620 = vpack.c.b16 %v428, %v424
  %v621 = vpack.c.b16 %v429, %v425
  %v622 = vpack.c.b16 %v430, %v426
  %v623 = vpack.c.b16 %v431, %v427
  %v624 = vpack.c.b16 %v436, %v432
  %v625 = vpack.c.b16 %v437, %v433
  %v626 = vpack.c.b16 %v438, %v434
  %v627 = vpack.c.b16 %v439, %v435
  %v628 = vpack.c.b16 %v444, %v440
  %v629 = vpack.c.b16 %v445, %v441
  %v630 = vpack.c.b16 %v446, %v442
  %v631 = vpack.c.b16 %v447, %v443
  %v632 = vpack.c.b16 %v452, %v448
  %v633 = vpack.c.b16 %v453, %v449
  %v634 = vpack.c.b16 %v454, %v450
  %v635 = vpack.c.b16 %v455, %v451
  %v636 = vpack.c.b16 %v460, %v456
  %v637 = vpack.c.b16 %v461, %v457
  %v638 = vpack.c.b16 %v462, %v458
  %v639 = vpack.c.b16 %v463, %v459
  %v640 = vpack.c.b16 %v468, %v464
  %v641 = vpack.c.b16 %v469, %v465
  %v642 = vpack.c.b16 %v470, %v466
  %v643 = vpack.c.b16 %v471, %v467
  %v644 = vpack.c.b16 %v476, %v472
  %v645 = vpack.c.b16 %v477, %v473
  %v646 = vpack.c.b16 %v478, %v474
  %v647 = vpack.c.b16 %v479, %v475
  %v648 = vpack.c.b16 %v484, %v480
  %v649 = vpack.c.b16 %v485, %v481
  %v650 = vpack.c.b16 %v486, %v482
  %v651 = vpack.c.b16 %v487, %v483
  %v652 = vpack.c.b16 %v492, %v488
  %v653 = vpack.c.b16 %v493, %v489
  %v654 = vpack.c.b16 %v494, %v490
  %v655 = vpack.c.b16 %v495, %v491
  %v656 = vpack.c.b16 %v500, %v496
  %v657 = vpack.c.b16 %v501, %v497
  %v658 = vpack.c.b16 %v502, %v498
  %v659 = vpack.c.b16 %v503, %v499
  %v660 = vpack.c.b16 %v508, %v504
  %v661 = vpack.c.b16 %v509, %v505
  %v662 = vpack.c.b16 %v510, %v506
  %v663 = vpack.c.b16 %v511, %v507
  %v664 = vpack.c.b16 %v516, %v512
  %v665 = vpack.c.b16 %v517, %v513
  %v666 = vpack.c.b16 %v518, %v514
  %v667 = vpack.c.b16 %v519, %v515
  %v668 = vpack.c.b16 %v524, %v520
  %v669 = vpack.c.b16 %v525, %v521
  %v670 = vpack.c.b16 %v526, %v522
  %v671 = vpack.c.b16 %v527, %v523
  %v672 = vpack.c.b16 %v532, %v528
  %v673 = vpack.c.b16 %v533, %v529
  %v674 = vpack.c.b16 %v534, %v530
  %v675 = vpack.c.b16 %v535, %v531
  %v676 = vpack.c.b16 %v540, %v536
  %v677 = vpack.c.b16 %v541, %v537
  %v678 = vpack.c.b16 %v542, %v538
  %v679 = vpack.c.b16 %v543, %v539
  %v680 = vpack.c.b16 %v548, %v544
  %v681 = vpack.c.b16 %v549, %v545
  %v682 = vpack.c.b16 %v550, %v546
  %v683 = vpack.c.b16 %v551, %v547
  %v684 = vpack.c.b16 %v556, %v552
  %v685 = vpack.c.b16 %v557, %v553
  %v686 = vpack.c.b16 %v558, %v554
  %v687 = vpack.c.b16 %v559, %v555
  %816 = vmatprep.subr.bf16.mxu0 %v561
  %817 = vmatpush1.bf16.msra.mxu0 %v560
  %818 = vmatprep.subr.bf16.mxu0 %v565
  %819 = vmatpush1.bf16.msra.mxu0 %v564
  %820 = vmatprep.subr.bf16.mxu0 %v569
  %821 = vmatpush1.bf16.msra.mxu0 %v568
  %822 = vmatprep.subr.bf16.mxu0 %v573
  %823 = vmatpush1.bf16.msra.mxu0 %v572
  %824 = vmatprep.subr.bf16.mxu0 %v577
  %825 = vmatpush1.bf16.msra.mxu0 %v576
  %826 = vmatprep.subr.bf16.mxu0 %v581
  %827 = vmatpush1.bf16.msra.mxu0 %v580
  %828 = vmatprep.subr.bf16.mxu0 %v585
  %829 = vmatpush1.bf16.msra.mxu0 %v584
  %830 = vmatprep.subr.bf16.mxu0 %v589
  %831 = vmatpush1.bf16.msra.mxu0 %v588
  %832 = vmatprep.subr.bf16.mxu0 %v593
  %833 = vmatpush1.bf16.msra.mxu0 %v592
  %834 = vmatprep.subr.bf16.mxu0 %v597
  %835 = vmatpush1.bf16.msra.mxu0 %v596
  %836 = vmatprep.subr.bf16.mxu0 %v601
  %837 = vmatpush1.bf16.msra.mxu0 %v600
  %838 = vmatprep.subr.bf16.mxu0 %v605
  %839 = vmatpush1.bf16.msra.mxu0 %v604
  %840 = vmatprep.subr.bf16.mxu0 %v609
  %841 = vmatpush1.bf16.msra.mxu0 %v608
  %842 = vmatprep.subr.bf16.mxu0 %v613
  %843 = vmatpush1.bf16.msra.mxu0 %v612
  %844 = vmatprep.subr.bf16.mxu0 %v617
  %845 = vmatpush1.bf16.msra.mxu0 %v616
  %846 = vmatprep.subr.bf16.mxu0 %v621
  %847 = vmatpush1.bf16.msra.mxu0 %v620
  %848 = vmatprep.mubr.bf16.mxu0 %v169
  %849 = vmatmul.mubr.bf16.gmra.mrb[0].mxu0 %v168
  %v850 = vpop.f32.mrb[0].mxu0
  %v851 = vadd.f32 0.0, %v850
  %v852 = vpop.f32.mrb[0].mxu0
  %v853 = vadd.f32 0.0, %v852
  %v854 = vpop.f32.mrb[0].mxu0
  %v855 = vpop.f32.mrb[0].mxu0
  %856 = vdwg.mxu0
  %857 = vmatprep.subr.bf16.mxu0 %v625
  %858 = vmatpush1.bf16.msra.mxu0 %v624
  %859 = vmatprep.subr.bf16.mxu0 %v629
  %860 = vmatpush1.bf16.msra.mxu0 %v628
  %861 = vmatprep.subr.bf16.mxu0 %v633
  %862 = vmatpush1.bf16.msra.mxu0 %v632
  %863 = vmatprep.subr.bf16.mxu0 %v637
  %864 = vmatpush1.bf16.msra.mxu0 %v636
  %865 = vmatprep.subr.bf16.mxu0 %v641
  %866 = vmatpush1.bf16.msra.mxu0 %v640
  %867 = vmatprep.subr.bf16.mxu0 %v645
  %868 = vmatpush1.bf16.msra.mxu0 %v644
  %869 = vmatprep.subr.bf16.mxu0 %v649
  %870 = vmatpush1.bf16.msra.mxu0 %v648
  %871 = vmatprep.subr.bf16.mxu0 %v653
  %872 = vmatpush1.bf16.msra.mxu0 %v652
  %873 = vmatprep.subr.bf16.mxu0 %v657
  %874 = vmatpush1.bf16.msra.mxu0 %v656
  %875 = vmatprep.subr.bf16.mxu0 %v661
  %876 = vmatpush1.bf16.msra.mxu0 %v660
  %877 = vmatprep.subr.bf16.mxu0 %v665
  %878 = vmatpush1.bf16.msra.mxu0 %v664
  %879 = vmatprep.subr.bf16.mxu0 %v669
  %880 = vmatpush1.bf16.msra.mxu0 %v668
  %881 = vmatprep.subr.bf16.mxu0 %v673
  %882 = vmatpush1.bf16.msra.mxu0 %v672
  %883 = vmatprep.subr.bf16.mxu0 %v677
  %884 = vmatpush1.bf16.msra.mxu0 %v676
  %885 = vmatprep.subr.bf16.mxu0 %v681
  %886 = vmatpush1.bf16.msra.mxu0 %v680
  %887 = vmatprep.subr.bf16.mxu0 %v685
  %888 = vmatpush1.bf16.msra.mxu0 %v684
  %889 = vmatprep.mubr.bf16.mxu0 %v171
  %890 = vmatmul.mubr.bf16.gmra.mrb[0].mxu0 %v170
  %v891 = vpop.f32.mrb[0].mxu0
  %v892 = vadd.f32 %v851, %v891
  %v893 = vpop.f32.mrb[0].mxu0
  %v894 = vadd.f32 %v853, %v893
  %v895 = vpop.f32.mrb[0].mxu0
  %v896 = vpop.f32.mrb[0].mxu0
  %897 = vdwg.mxu0
  %898 = vmatprep.subr.bf16.mxu0 %v563
  %899 = vmatpush1.bf16.msra.mxu0 %v562
  %900 = vmatprep.subr.bf16.mxu0 %v567
  %901 = vmatpush1.bf16.msra.mxu0 %v566
  %902 = vmatprep.subr.bf16.mxu0 %v571
  %903 = vmatpush1.bf16.msra.mxu0 %v570
  %904 = vmatprep.subr.bf16.mxu0 %v575
  %905 = vmatpush1.bf16.msra.mxu0 %v574
  %906 = vmatprep.subr.bf16.mxu0 %v579
  %907 = vmatpush1.bf16.msra.mxu0 %v578
  %908 = vmatprep.subr.bf16.mxu0 %v583
  %909 = vmatpush1.bf16.msra.mxu0 %v582
  %910 = vmatprep.subr.bf16.mxu0 %v587
  %911 = vmatpush1.bf16.msra.mxu0 %v586
  %912 = vmatprep.subr.bf16.mxu0 %v591
  %913 = vmatpush1.bf16.msra.mxu0 %v590
  %914 = vmatprep.subr.bf16.mxu0 %v595
  %915 = vmatpush1.bf16.msra.mxu0 %v594
  %916 = vmatprep.subr.bf16.mxu0 %v599
  %917 = vmatpush1.bf16.msra.mxu0 %v598
  %918 = vmatprep.subr.bf16.mxu0 %v603
  %919 = vmatpush1.bf16.msra.mxu0 %v602
  %920 = vmatprep.subr.bf16.mxu0 %v607
  %921 = vmatpush1.bf16.msra.mxu0 %v606
  %922 = vmatprep.subr.bf16.mxu0 %v611
  %923 = vmatpush1.bf16.msra.mxu0 %v610
  %924 = vmatprep.subr.bf16.mxu0 %v615
  %925 = vmatpush1.bf16.msra.mxu0 %v614
  %926 = vmatprep.subr.bf16.mxu0 %v619
  %927 = vmatpush1.bf16.msra.mxu0 %v618
  %928 = vmatprep.subr.bf16.mxu0 %v623
  %929 = vmatpush1.bf16.msra.mxu0 %v622
  %930 = vmatprep.mubr.bf16.mxu0 %v169
  %931 = vmatmul.mubr.bf16.gmra.mrb[0].mxu0 %v168
  %v932 = vpop.f32.mrb[0].mxu0
  %v933 = vadd.f32 0.0, %v932
  %v934 = vpop.f32.mrb[0].mxu0
  %v935 = vadd.f32 0.0, %v934
  %v936 = vpop.f32.mrb[0].mxu0
  %v937 = vpop.f32.mrb[0].mxu0
  %938 = vdwg.mxu0
  %939 = vmatprep.subr.bf16.mxu0 %v627
  %940 = vmatpush1.bf16.msra.mxu0 %v626
  %941 = vmatprep.subr.bf16.mxu0 %v631
  %942 = vmatpush1.bf16.msra.mxu0 %v630
  %943 = vmatprep.subr.bf16.mxu0 %v635
  %944 = vmatpush1.bf16.msra.mxu0 %v634
  %945 = vmatprep.subr.bf16.mxu0 %v639
  %946 = vmatpush1.bf16.msra.mxu0 %v638
  %947 = vmatprep.subr.bf16.mxu0 %v643
  %948 = vmatpush1.bf16.msra.mxu0 %v642
  %949 = vmatprep.subr.bf16.mxu0 %v647
  %950 = vmatpush1.bf16.msra.mxu0 %v646
  %951 = vmatprep.subr.bf16.mxu0 %v651
  %952 = vmatpush1.bf16.msra.mxu0 %v650
  %953 = vmatprep.subr.bf16.mxu0 %v655
  %954 = vmatpush1.bf16.msra.mxu0 %v654
  %955 = vmatprep.subr.bf16.mxu0 %v659
  %956 = vmatpush1.bf16.msra.mxu0 %v658
  %957 = vmatprep.subr.bf16.mxu0 %v663
  %958 = vmatpush1.bf16.msra.mxu0 %v662
  %959 = vmatprep.subr.bf16.mxu0 %v667
  %960 = vmatpush1.bf16.msra.mxu0 %v666
  %961 = vmatprep.subr.bf16.mxu0 %v671
  %962 = vmatpush1.bf16.msra.mxu0 %v670
  %963 = vmatprep.subr.bf16.mxu0 %v675
  %964 = vmatpush1.bf16.msra.mxu0 %v674
  %965 = vmatprep.subr.bf16.mxu0 %v679
  %966 = vmatpush1.bf16.msra.mxu0 %v678
  %967 = vmatprep.subr.bf16.mxu0 %v683
  %968 = vmatpush1.bf16.msra.mxu0 %v682
  %969 = vmatprep.subr.bf16.mxu0 %v687
  %970 = vmatpush1.bf16.msra.mxu0 %v686
  %971 = vmatprep.mubr.bf16.mxu0 %v171
  %972 = vmatmul.mubr.bf16.gmra.mrb[0].mxu0 %v170
  %v973 = vpop.f32.mrb[0].mxu0
  %v974 = vadd.f32 %v933, %v973
  %v975 = vpop.f32.mrb[0].mxu0
  %v976 = vadd.f32 %v935, %v975
  %v977 = vpop.f32.mrb[0].mxu0
  %v978 = vpop.f32.mrb[0].mxu0
  %979 = vdwg.mxu0
  %v980 = vadd.f32 %v28, %v892
  %v981 = vadd.f32 %v29, %v894
  %v982 = vadd.f32 %v30, %v974
  %v983 = vadd.f32 %v31, %v976
  %984 = vst [vmem:[#allocation2] sm:$0xff] %v980
  %985 = vst [vmem:[#allocation2 + $0x8] sm:$0xff] %v981
  %986 = vst [vmem:[#allocation2 + $0x10] sm:$0xff] %v982
  %987 = vst [vmem:[#allocation2 + $0x18] sm:$0xff] %v983
  // Predicated region
  $region26: #{_lambda_.9} parent=0 // pred_check
    %p988 = pneg %p20
  $region27: #{_lambda_.9} parent=0 // pred_check_branch
    %990 = sbr.rel (%p988) target = $region29
  $region28: #{_lambda_.9} parent=0 // pred_region
    %v991 = vld [vmem:[#allocation2] sm:$0xff]
    %v992 = vld [vmem:[#allocation2 + $0x8] sm:$0xff]
    %v993 = vld [vmem:[#allocation2 + $0x10] sm:$0xff]
    %v994 = vld [vmem:[#allocation2 + $0x18] sm:$0xff]
    %v995 = vld [vmem:[%s2] sm:$0xf]
    %v997 = vlaneseq
    %v998 = vshrl.u32 %v997, 7
    %v999 = vsub.s32 0, %v998
    %v1000 = vrot.slane %v995, %v999
    %v1001 = vlaneseq
    %v1002 = vshrl.u32 %v1001, 7
    %v1003 = vsub.s32 1, %v1002
    %v1004 = vrot.slane %v995, %v1003
    %v1005 = vlaneseq
    %v1006 = vshrl.u32 %v1005, 7
    %v1007 = vsub.s32 2, %v1006
    %v1008 = vrot.slane %v995, %v1007
    %v1009 = vlaneseq
    %v1010 = vshrl.u32 %v1009, 7
    %v1011 = vsub.s32 3, %v1010
    %v1012 = vrot.slane %v995, %v1011
    %v1017 = vadd.f32 %v991, %v1000
    %v1018 = vadd.f32 %v992, %v1004
    %v1019 = vadd.f32 %v993, %v1008
    %v1020 = vadd.f32 %v994, %v1012
    %v1021 = vmax.f32 %v1017, 0.0
    %v1022 = vmax.f32 %v1018, 0.0
    %v1023 = vmax.f32 %v1019, 0.0
    %v1024 = vmax.f32 %v1020, 0.0
    %v1025 = vld [vmem:[%s3] sm:$0xff]
    %v1026 = vld [vmem:[%s3 + $0x8] sm:$0xff]
    %v1027 = vld [vmem:[%s3 + $0x10] sm:$0xff]
    %v1028 = vld [vmem:[%s3 + $0x18] sm:$0xff]
    %v1029 = vld [vmem:[%s3 + $0x20] sm:$0xff]
    %v1030 = vld [vmem:[%s3 + $0x28] sm:$0xff]
    %v1031 = vld [vmem:[%s3 + $0x30] sm:$0xff]
    %v1032 = vld [vmem:[%s3 + $0x38] sm:$0xff]
    %v1033 = vld [vmem:[%s3 + $0x40] sm:$0xff]
    %v1034 = vld [vmem:[%s3 + $0x48] sm:$0xff]
    %v1035 = vld [vmem:[%s3 + $0x50] sm:$0xff]
    %v1036 = vld [vmem:[%s3 + $0x58] sm:$0xff]
    %v1037 = vld [vmem:[%s3 + $0x60] sm:$0xff]
    %v1038 = vld [vmem:[%s3 + $0x68] sm:$0xff]
    %v1039 = vld [vmem:[%s3 + $0x70] sm:$0xff]
    %v1040 = vld [vmem:[%s3 + $0x78] sm:$0xff]
    %v1041 = vld [vmem:[%s3 + $0x80] sm:$0xff]
    %v1042 = vld [vmem:[%s3 + $0x88] sm:$0xff]
    %v1043 = vld [vmem:[%s3 + $0x90] sm:$0xff]
    %v1044 = vld [vmem:[%s3 + $0x98] sm:$0xff]
    %v1045 = vld [vmem:[%s3 + $0xa0] sm:$0xff]
    %v1046 = vld [vmem:[%s3 + $0xa8] sm:$0xff]
    %v1047 = vld [vmem:[%s3 + $0xb0] sm:$0xff]
    %v1048 = vld [vmem:[%s3 + $0xb8] sm:$0xff]
    %v1049 = vld [vmem:[%s3 + $0xc0] sm:$0xff]
    %v1050 = vld [vmem:[%s3 + $0xc8] sm:$0xff]
    %v1051 = vld [vmem:[%s3 + $0xd0] sm:$0xff]
    %v1052 = vld [vmem:[%s3 + $0xd8] sm:$0xff]
    %v1053 = vld [vmem:[%s3 + $0xe0] sm:$0xff]
    %v1054 = vld [vmem:[%s3 + $0xe8] sm:$0xff]
    %v1055 = vld [vmem:[%s3 + $0xf0] sm:$0xff]
    %v1056 = vld [vmem:[%s3 + $0xf8] sm:$0xff]
    %v1057 = vld [vmem:[%s3 + $0x100] sm:$0xff]
    %v1058 = vld [vmem:[%s3 + $0x108] sm:$0xff]
    %v1059 = vld [vmem:[%s3 + $0x110] sm:$0xff]
    %v1060 = vld [vmem:[%s3 + $0x118] sm:$0xff]
    %v1061 = vld [vmem:[%s3 + $0x120] sm:$0xff]
    %v1062 = vld [vmem:[%s3 + $0x128] sm:$0xff]
    %v1063 = vld [vmem:[%s3 + $0x130] sm:$0xff]
    %v1064 = vld [vmem:[%s3 + $0x138] sm:$0xff]
    %v1065 = vld [vmem:[%s3 + $0x140] sm:$0xff]
    %v1066 = vld [vmem:[%s3 + $0x148] sm:$0xff]
    %v1067 = vld [vmem:[%s3 + $0x150] sm:$0xff]
    %v1068 = vld [vmem:[%s3 + $0x158] sm:$0xff]
    %v1069 = vld [vmem:[%s3 + $0x160] sm:$0xff]
    %v1070 = vld [vmem:[%s3 + $0x168] sm:$0xff]
    %v1071 = vld [vmem:[%s3 + $0x170] sm:$0xff]
    %v1072 = vld [vmem:[%s3 + $0x178] sm:$0xff]
    %v1073 = vld [vmem:[%s3 + $0x180] sm:$0xff]
    %v1074 = vld [vmem:[%s3 + $0x188] sm:$0xff]
    %v1075 = vld [vmem:[%s3 + $0x190] sm:$0xff]
    %v1076 = vld [vmem:[%s3 + $0x198] sm:$0xff]
    %v1077 = vld [vmem:[%s3 + $0x1a0] sm:$0xff]
    %v1078 = vld [vmem:[%s3 + $0x1a8] sm:$0xff]
    %v1079 = vld [vmem:[%s3 + $0x1b0] sm:$0xff]
    %v1080 = vld [vmem:[%s3 + $0x1b8] sm:$0xff]
    %v1081 = vld [vmem:[%s3 + $0x1c0] sm:$0xff]
    %v1082 = vld [vmem:[%s3 + $0x1c8] sm:$0xff]
    %v1083 = vld [vmem:[%s3 + $0x1d0] sm:$0xff]
    %v1084 = vld [vmem:[%s3 + $0x1d8] sm:$0xff]
    %v1085 = vld [vmem:[%s3 + $0x1e0] sm:$0xff]
    %v1086 = vld [vmem:[%s3 + $0x1e8] sm:$0xff]
    %v1087 = vld [vmem:[%s3 + $0x1f0] sm:$0xff]
    %v1088 = vld [vmem:[%s3 + $0x1f8] sm:$0xff]
    %v1089 = vld [vmem:[%s4] sm:$0x1]
    %v1091 = vlaneseq
    %v1092 = vshrl.u32 %v1091, 7
    %v1093 = vsub.s32 0, %v1092
    %v1094 = vrot.slane %v1089, %v1093
    %1096 = vmatprep.subr.mxu0 0.0
    %1097 = vmatpush1.msra.mxu0 %v1025
    %1098 = vmatprep.subr.mxu0 0.0
    %1099 = vmatpush1.msra.mxu0 %v1026
    %1100 = vmatprep.subr.mxu0 0.0
    %1101 = vmatpush1.msra.mxu0 %v1027
    %1102 = vmatprep.subr.mxu0 0.0
    %1103 = vmatpush1.msra.mxu0 %v1028
    %1104 = vmatprep.subr.mxu0 0.0
    %1105 = vmatpush1.msra.mxu0 %v1029
    %1106 = vmatprep.subr.mxu0 0.0
    %1107 = vmatpush1.msra.mxu0 %v1030
    %1108 = vmatprep.subr.mxu0 0.0
    %1109 = vmatpush1.msra.mxu0 %v1031
    %1110 = vmatprep.subr.mxu0 0.0
    %1111 = vmatpush1.msra.mxu0 %v1032
    %1112 = vmatprep.subr.mxu0 0.0
    %1113 = vmatpush1.msra.mxu0 %v1033
    %1114 = vmatprep.subr.mxu0 0.0
    %1115 = vmatpush1.msra.mxu0 %v1034
    %1116 = vmatprep.subr.mxu0 0.0
    %1117 = vmatpush1.msra.mxu0 %v1035
    %1118 = vmatprep.subr.mxu0 0.0
    %1119 = vmatpush1.msra.mxu0 %v1036
    %1120 = vmatprep.subr.mxu0 0.0
    %1121 = vmatpush1.msra.mxu0 %v1037
    %1122 = vmatprep.subr.mxu0 0.0
    %1123 = vmatpush1.msra.mxu0 %v1038
    %1124 = vmatprep.subr.mxu0 0.0
    %1125 = vmatpush1.msra.mxu0 %v1039
    %1126 = vmatprep.subr.mxu0 0.0
    %1127 = vmatpush1.msra.mxu0 %v1040
    %1128 = vmatprep.subr.mxu0 0.0
    %1129 = vmatpush1.msra.mxu0 %v1041
    %1130 = vmatprep.subr.mxu0 0.0
    %1131 = vmatpush1.msra.mxu0 %v1042
    %1132 = vmatprep.subr.mxu0 0.0
    %1133 = vmatpush1.msra.mxu0 %v1043
    %1134 = vmatprep.subr.mxu0 0.0
    %1135 = vmatpush1.msra.mxu0 %v1044
    %1136 = vmatprep.subr.mxu0 0.0
    %1137 = vmatpush1.msra.mxu0 %v1045
    %1138 = vmatprep.subr.mxu0 0.0
    %1139 = vmatpush1.msra.mxu0 %v1046
    %1140 = vmatprep.subr.mxu0 0.0
    %1141 = vmatpush1.msra.mxu0 %v1047
    %1142 = vmatprep.subr.mxu0 0.0
    %1143 = vmatpush1.msra.mxu0 %v1048
    %1144 = vmatprep.subr.mxu0 0.0
    %1145 = vmatpush1.msra.mxu0 %v1049
    %1146 = vmatprep.subr.mxu0 0.0
    %1147 = vmatpush1.msra.mxu0 %v1050
    %1148 = vmatprep.subr.mxu0 0.0
    %1149 = vmatpush1.msra.mxu0 %v1051
    %1150 = vmatprep.subr.mxu0 0.0
    %1151 = vmatpush1.msra.mxu0 %v1052
    %1152 = vmatprep.subr.mxu0 0.0
    %1153 = vmatpush1.msra.mxu0 %v1053
    %1154 = vmatprep.subr.mxu0 0.0
    %1155 = vmatpush1.msra.mxu0 %v1054
    %1156 = vmatprep.subr.mxu0 0.0
    %1157 = vmatpush1.msra.mxu0 %v1055
    %1158 = vmatprep.subr.mxu0 0.0
    %1159 = vmatpush1.msra.mxu0 %v1056
    %1160 = vmatprep.mubr.f32.mxu0 %v1022
    %1161 = vmatmul.mubr.f32.gmra.mrb[0].mxu0 %v1021
    %v1162 = vpop.f32.mrb[0].mxu0
    %v1163 = vadd.f32 %v1094, %v1162
    %v1164 = vpop.f32.mrb[0].mxu0
    %1165 = vdwg.mxu0
    %1166 = vmatprep.subr.mxu0 0.0
    %1167 = vmatpush1.msra.mxu0 %v1057
    %1168 = vmatprep.subr.mxu0 0.0
    %1169 = vmatpush1.msra.mxu0 %v1058
    %1170 = vmatprep.subr.mxu0 0.0
    %1171 = vmatpush1.msra.mxu0 %v1059
    %1172 = vmatprep.subr.mxu0 0.0
    %1173 = vmatpush1.msra.mxu0 %v1060
    %1174 = vmatprep.subr.mxu0 0.0
    %1175 = vmatpush1.msra.mxu0 %v1061
    %1176 = vmatprep.subr.mxu0 0.0
    %1177 = vmatpush1.msra.mxu0 %v1062
    %1178 = vmatprep.subr.mxu0 0.0
    %1179 = vmatpush1.msra.mxu0 %v1063
    %1180 = vmatprep.subr.mxu0 0.0
    %1181 = vmatpush1.msra.mxu0 %v1064
    %1182 = vmatprep.subr.mxu0 0.0
    %1183 = vmatpush1.msra.mxu0 %v1065
    %1184 = vmatprep.subr.mxu0 0.0
    %1185 = vmatpush1.msra.mxu0 %v1066
    %1186 = vmatprep.subr.mxu0 0.0
    %1187 = vmatpush1.msra.mxu0 %v1067
    %1188 = vmatprep.subr.mxu0 0.0
    %1189 = vmatpush1.msra.mxu0 %v1068
    %1190 = vmatprep.subr.mxu0 0.0
    %1191 = vmatpush1.msra.mxu0 %v1069
    %1192 = vmatprep.subr.mxu0 0.0
    %1193 = vmatpush1.msra.mxu0 %v1070
    %1194 = vmatprep.subr.mxu0 0.0
    %1195 = vmatpush1.msra.mxu0 %v1071
    %1196 = vmatprep.subr.mxu0 0.0
    %1197 = vmatpush1.msra.mxu0 %v1072
    %1198 = vmatprep.subr.mxu0 0.0
    %1199 = vmatpush1.msra.mxu0 %v1073
    %1200 = vmatprep.subr.mxu0 0.0
    %1201 = vmatpush1.msra.mxu0 %v1074
    %1202 = vmatprep.subr.mxu0 0.0
    %1203 = vmatpush1.msra.mxu0 %v1075
    %1204 = vmatprep.subr.mxu0 0.0
    %1205 = vmatpush1.msra.mxu0 %v1076
    %1206 = vmatprep.subr.mxu0 0.0
    %1207 = vmatpush1.msra.mxu0 %v1077
    %1208 = vmatprep.subr.mxu0 0.0
    %1209 = vmatpush1.msra.mxu0 %v1078
    %1210 = vmatprep.subr.mxu0 0.0
    %1211 = vmatpush1.msra.mxu0 %v1079
    %1212 = vmatprep.subr.mxu0 0.0
    %1213 = vmatpush1.msra.mxu0 %v1080
    %1214 = vmatprep.subr.mxu0 0.0
    %1215 = vmatpush1.msra.mxu0 %v1081
    %1216 = vmatprep.subr.mxu0 0.0
    %1217 = vmatpush1.msra.mxu0 %v1082
    %1218 = vmatprep.subr.mxu0 0.0
    %1219 = vmatpush1.msra.mxu0 %v1083
    %1220 = vmatprep.subr.mxu0 0.0
    %1221 = vmatpush1.msra.mxu0 %v1084
    %1222 = vmatprep.subr.mxu0 0.0
    %1223 = vmatpush1.msra.mxu0 %v1085
    %1224 = vmatprep.subr.mxu0 0.0
    %1225 = vmatpush1.msra.mxu0 %v1086
    %1226 = vmatprep.subr.mxu0 0.0
    %1227 = vmatpush1.msra.mxu0 %v1087
    %1228 = vmatprep.subr.mxu0 0.0
    %1229 = vmatpush1.msra.mxu0 %v1088
    %1230 = vmatprep.mubr.f32.mxu0 %v1024
    %1231 = vmatmul.mubr.f32.gmra.mrb[0].mxu0 %v1023
    %v1232 = vpop.f32.mrb[0].mxu0
    %v1233 = vadd.f32 %v1163, %v1232
    %v1234 = vpop.f32.mrb[0].mxu0
    %1235 = vdwg.mxu0
    %1236 = vmax.xlane.f32.xlu0 %v1233
    %v1237 = vpop.xlane.xlu0 %1236
    %v1238 = vsub.f32 %v1233, %v1237
    %v1239 = vmul.f32 %v1238, 1.442695
    %v1240 = vpow.pop %v1239
    %1241 = vadd.xlane.f32.xlu0 %v1240
    %v1242 = vpop.xlane.xlu0 %1241
    %v1243 = vlog2.pop %v1242
    %v1244 = vmul.f32 %v1243, 0.6931472
    %v1245 = vadd.f32 %v1237, %v1244
    %v1246 = vsub.f32 %v1233, %v1245
    %1247 = vst [vmem:[%s5] sm:$0xff] %v1246
  $region29: #{_lambda_.9} parent=0 // pred_fallthru
    _
  // Predicated region
  $region30: #{_lambda_.9} parent=0 // pred_check
    _
  $region31: #{_lambda_.9} parent=0 // pred_check_branch
    %1249 = sbr.rel (0) target = $region33
  $region32: #{_lambda_.9} parent=0 // pred_region
    _
  $region33: #{_lambda_.9} parent=0 // pred_fallthru
    _
  // Predicated region
  $region34: #{_lambda_.9} parent=0 // pred_check
    _
  $region35: #{_lambda_.9} parent=0 // pred_check_branch
    %1251 = sbr.rel (0) target = $region37
  $region36: #{_lambda_.9} parent=0 // pred_region
    _
  $region37: #{_lambda_.9} parent=0 // pred_fallthru
    _

</llo_original>
